<compile_context>
chip_gen: v5e
topology: v5e:2x2
jax: 0.10.0
libtpu: 0.0.40
codegen_flags: <defaults>
</compile_context>

<pallas_src>
import functools

import numpy as np
import jax
import jax.numpy as jnp
from jax.experimental import pallas as pl
from jax.experimental.pallas import tpu as pltpu

EPS_BN = 1e-5
_VMEM = pl.BlockSpec(memory_space=pltpu.MemorySpace.VMEM)


def _round_up(v, m):
    return -(-v // m) * m


def _basic_block_kernel(*refs, cin, planes, wp_in, wp_out, m, guard,
                        downsample, eps, cnt):
    if downsample:
        (x00, x01, x10, x11, w1_ref, g1_ref, b1_ref, w2_ref, g2_ref, b2_ref,
         mask_ref, out_ref, a1_ref) = refs
        xph = ((x00, x01), (x10, x11))
    else:
        (x_ref, w1_ref, g1_ref, b1_ref, w2_ref, g2_ref, b2_ref,
         mask_ref, out_ref, a1_ref) = refs

    mask = mask_ref[...]                      # (1, m) f32; 1 at valid output centers
    inv_cnt = 1.0 / cnt

    # ---- conv1: 9 accumulating MXU dots off lane-shifted tap slices (no patch scratch) ----
    y1 = None
    for dh in range(3):
        for dw in range(3):
            t = dh * 3 + dw
            wt = w1_ref[:, t * cin:(t + 1) * cin]                    # (planes, cin) bf16
            if downsample:
                src = xph[dh % 2][dw % 2]                            # polyphase frame
                off = guard + (dh // 2 - 1) * wp_out + (dw // 2 - 1)
            else:
                src = x_ref
                off = guard + (dh - 1) * wp_in + (dw - 1)
            part = jnp.dot(wt, src[:, off:off + m],
                           preferred_element_type=jnp.float32)
            y1 = part if y1 is None else y1 + part

    # ---- BN1 (training-mode batch stats, biased var; masked one-pass sums) + ReLU ----
    y1m = y1 * mask
    mu1 = jnp.sum(y1m, axis=1, keepdims=True) * inv_cnt
    var1 = jnp.maximum(jnp.sum(y1m * y1m, axis=1, keepdims=True) * inv_cnt
                       - mu1 * mu1, 0.0)
    a1 = (y1 - mu1) * (jax.lax.rsqrt(var1 + eps) * g1_ref[...]) + b1_ref[...]
    a1 = jnp.maximum(a1, 0.0) * mask          # masked -> frame border == conv2 zero pad

    # stage act1 in a guarded bf16 frame; zero ONLY the guard bands (interior is fully
    # overwritten); every store is 128-lane aligned and full width.
    a1_ref[:, :guard] = jnp.zeros((planes, guard), jnp.bfloat16)
    a1_ref[:, guard + m:] = jnp.zeros((planes, guard), jnp.bfloat16)
    a1_ref[:, guard:guard + m] = a1.astype(jnp.bfloat16)

    # ---- conv2 (3x3, stride 1): 9 accumulating dots off the staged frame ----
    y2 = None
    for dh in range(3):
        for dw in range(3):
            t = dh * 3 + dw
            wt = w2_ref[:, t * planes:(t + 1) * planes]              # (planes, planes) bf16
            off = guard + (dh - 1) * wp_out + (dw - 1)
            part = jnp.dot(wt, a1_ref[:, off:off + m],
                           preferred_element_type=jnp.float32)
            y2 = part if y2 is None else y2 + part

    # ---- BN2 (no ReLU yet) ----
    y2m = y2 * mask
    mu2 = jnp.sum(y2m, axis=1, keepdims=True) * inv_cnt
    var2 = jnp.maximum(jnp.sum(y2m * y2m, axis=1, keepdims=True) * inv_cnt
                       - mu2 * mu2, 0.0)
    y2 = (y2 - mu2) * (jax.lax.rsqrt(var2 + eps) * g2_ref[...]) + b2_ref[...]

    # ---- shortcut + residual add + ReLU (no output masking: wrapper slices the border) ----
    if downsample:
        # option 'A': x[:, :, ::2, ::2] is exactly the (1,1) polyphase frame shifted by one
        # frame row + one col; channels zero-padded by planes//4 on each side.
        sc = x11[:, guard - wp_out - 1:guard - wp_out - 1 + m].astype(jnp.float32)
        p4 = planes // 4
        if p4 > 0:
            out_ref[0:p4, :] = jnp.maximum(y2[0:p4, :], 0.0)
            out_ref[p4 + cin:planes, :] = jnp.maximum(y2[p4 + cin:planes, :], 0.0)
        out_ref[p4:p4 + cin, :] = jnp.maximum(y2[p4:p4 + cin, :] + sc, 0.0)
    else:
        sc = x_ref[:, guard:guard + m].astype(jnp.float32)
        out_ref[...] = jnp.maximum(y2 + sc, 0.0)


def basic_block(x, w1, gamma1, beta1, w2, gamma2, beta2, *, stride=1,
                option="A", eps=EPS_BN):
    """BasicBlock forward. x: (N, Cin, H, W) NCHW; conv weights OIHW; returns NCHW."""
    assert option == "A"   # TODO(synk): option='B' (1x1 conv + BN shortcut) not implemented
    n, cin, h, w = x.shape
    planes = w1.shape[0]
    assert w1.shape == (planes, cin, 3, 3) and w2.shape == (planes, planes, 3, 3)
    assert stride in (1, 2)

    ho, wo = (h - 1) // stride + 1, (w - 1) // stride + 1            # k=3, pad=1
    hp1, wp1 = h + 2, w + 2
    hp2, wp2 = ho + 2, wo + 2
    l2 = hp2 * wp2
    l2p = _round_up(l2, 128)            # lane-pad per-image frame -> dense aligned stores
    m = n * l2p
    guard = _round_up(max(wp1, wp2) + 1, 128)
    frame_lanes = m + 2 * guard

    downsample = (stride != 1) or (cin != planes)
    xf = x.astype(jnp.float32)
    xpad = jnp.pad(xf, ((0, 0), (0, 0), (1, 1), (1, 1)))             # (n, cin, h+2, w+2)

    def frame(img):   # (n, cin, hp2, wp2) -> guarded bf16 frame (cin, guard + m + guard)
        fr = jnp.transpose(img, (1, 0, 2, 3)).reshape(cin, n, l2)
        fr = jnp.pad(fr, ((0, 0), (0, 0), (0, l2p - l2))).reshape(cin, m)
        return jnp.pad(fr, ((0, 0), (guard, guard))).astype(jnp.bfloat16)

    if downsample:
        assert stride == 2 and cin + 2 * (planes // 4) == planes, \
            "option-'A' shortcut needs stride 2 and planes == cin + 2*(planes//4)"
        assert h % 2 == 0 and w % 2 == 0   # TODO(synk): odd spatial dims with stride 2
        # Polyphase decomposition: P[a][b][i, j] = xpad[2i+a, 2j+b], laid out on the
        # (hp2, wp2) OUTPUT frame, so every stride-2 conv1 tap and the ::2 shortcut is a
        # contiguous lane slice -> no dense selection matmul.
        x_frames = [frame(jnp.pad(xpad[:, :, a::2, b::2],
                                  ((0, 0), (0, 0), (0, 1), (0, 1))))
                    for a in (0, 1) for b in (0, 1)]
    else:
        x_frames = [frame(xpad)]

    # weights reshaped once, tap-major: columns [t*Cin:(t+1)*Cin] = W[:, :, dh, dw]
    w1m = jnp.transpose(w1, (0, 2, 3, 1)).reshape(planes, 9 * cin).astype(jnp.bfloat16)
    w2m = jnp.transpose(w2, (0, 2, 3, 1)).reshape(planes, 9 * planes).astype(jnp.bfloat16)

    # trace-time interior mask of the output frame
    fr_mask = np.zeros((hp2, wp2), np.float32)
    fr_mask[1:1 + ho, 1:1 + wo] = 1.0
    mask_np = np.zeros((n, l2p), np.float32)
    mask_np[:, :l2] = fr_mask.reshape(-1)[None, :]
    mask = jnp.asarray(mask_np.reshape(1, m))

    inputs = x_frames + [
        w1m,
        gamma1.reshape(planes, 1).astype(jnp.float32),
        beta1.reshape(planes, 1).astype(jnp.float32),
        w2m,
        gamma2.reshape(planes, 1).astype(jnp.float32),
        beta2.reshape(planes, 1).astype(jnp.float32),
        mask]

    # crude VMEM footprint guard (all-resident design; see TODO about grid tiling)
    vmem_est = (len(x_frames) * cin * frame_lanes * 2      # input frames (bf16)
                + planes * frame_lanes * 2                 # act1 staging scratch (bf16)
                + planes * m * 4 * 8                       # output + f32 intermediates
                + (9 * cin + 9 * planes) * planes * 2)     # weights (bf16)
    assert vmem_est < 16 * 1024 * 1024, (
        f"~{vmem_est / 2**20:.1f} MiB VMEM estimate; add grid tiling for this shape")

    kernel = functools.partial(
        _basic_block_kernel, cin=cin, planes=planes, wp_in=wp1, wp_out=wp2,
        m=m, guard=guard, downsample=downsample, eps=eps, cnt=float(n * ho * wo))

    out_frame = pl.pallas_call(
        kernel,
        out_shape=jax.ShapeDtypeStruct((planes, m), jnp.float32),
        in_specs=[_VMEM] * len(inputs),
        out_specs=_VMEM,
        scratch_shapes=[pltpu.VMEM((planes, frame_lanes), jnp.bfloat16)],  # act1 frame
    )(*inputs)

    out = out_frame.reshape(planes, n, l2p)[:, :, :l2].reshape(planes, n, hp2, wp2)
    out = out[:, :, 1:1 + ho, 1:1 + wo]
    return jnp.transpose(out, (1, 0, 2, 3))                                # NCHW


# ---------------- pure-JAX reference (numerical sanity check) ----------------
def _basic_block_ref(x, w1, g1, b1, w2, g2, b2, *, stride=1, eps=EPS_BN):
    def conv(z, w, s):
        return jax.lax.conv_general_dilated(
            z, w, (s, s), ((1, 1), (1, 1)),
            dimension_numbers=("NCHW", "OIHW", "NCHW"),
            precision=jax.lax.Precision.HIGHEST)

    def bn(y, g, b):
        mu = jnp.mean(y, axis=(0, 2, 3), keepdims=True)
        var = jnp.mean((y - mu) ** 2, axis=(0, 2, 3), keepdims=True)
        return ((y - mu) * jax.lax.rsqrt(var + eps) * g.reshape(1, -1, 1, 1)
                + b.reshape(1, -1, 1, 1))

    out = jax.nn.relu(bn(conv(x, w1, stride), g1, b1))
    out = bn(conv(out, w2, 1), g2, b2)
    planes, cin = w1.shape[0], x.shape[1]
    if stride != 1 or cin != planes:
        sc = x[:, :, ::2, ::2]
        p4 = planes // 4
        sc = jnp.pad(sc, ((0, 0), (p4, p4), (0, 0), (0, 0)))
    else:
        sc = x
    return jax.nn.relu(out + sc)


if __name__ == "__main__":
    key = jax.random.PRNGKey(0)
    ks = jax.random.split(key, 16)
    n, cin, h = 2, 16, 16
    x = jax.random.normal(ks[0], (n, cin, h, h), jnp.float32)

    def conv_w(k, co, ci):
        return ((2.0 / (ci * 9)) ** 0.5) * jax.random.normal(k, (co, ci, 3, 3), jnp.float32)

    def bn_p(k, c):
        kg, kb = jax.random.split(k)
        return (1.0 + 0.1 * jax.random.normal(kg, (c,), jnp.float32),
                0.1 * jax.random.normal(kb, (c,), jnp.float32))

    # block 1: identity shortcut (stride 1, 16 -> 16 channels)
    w1a, w2a = conv_w(ks[1], cin, cin), conv_w(ks[2], cin, cin)
    g1a, b1a = bn_p(ks[3], cin)
    g2a, b2a = bn_p(ks[4], cin)
    # block 2: option-'A' downsampling shortcut (stride 2, 16 -> 32 channels)
    planes = 32
    w1b, w2b = conv_w(ks[5], planes, cin), conv_w(ks[6], planes, planes)
    g1b, b1b = bn_p(ks[7], planes)
    g2b, b2b = bn_p(ks[8], planes)

    @jax.jit
    def fwd(xx):
        y1 = basic_block(xx, w1a, g1a, b1a, w2a, g2a, b2a, stride=1)
        y2 = basic_block(y1, w1b, g1b, b1b, w2b, g2b, b2b, stride=2)
        return y1, y2

    y1, y2 = fwd(x)
    jax.block_until_ready((y1, y2))
    assert y1.shape == (n, cin, h, h) and y2.shape == (n, planes, h // 2, h // 2)
    assert bool(jnp.all(jnp.isfinite(y1))) and bool(jnp.all(jnp.isfinite(y2)))

    r1 = _basic_block_ref(x, w1a, g1a, b1a, w2a, g2a, b2a, stride=1)
    r2 = _basic_block_ref(r1, w1b, g1b, b1b, w2b, g2b, b2b, stride=2)
    e1, e2 = jnp.abs(y1 - r1), jnp.abs(y2 - r2)
    # bf16 matmul operands with f32 accumulation -> tolerance commensurate with bf16.
    assert float(jnp.max(e1)) < 1e-1 and float(jnp.mean(e1)) < 2e-2, (
        float(jnp.max(e1)), float(jnp.mean(e1)))
    assert float(jnp.max(e2)) < 1e-1 and float(jnp.mean(e2)) < 2e-2, (
        float(jnp.max(e2)), float(jnp.mean(e2)))
    print("KERNEL_OK")
</pallas_src>

<mosaic_0001>
module attributes {stable_mosaic.version = 11 : i64} {
  func.func @_basic_block_kernel(%arg0: memref<16x1024xbf16, #tpu.memory_space<vmem>>, %arg1: memref<16x144xbf16, #tpu.memory_space<vmem>>, %arg2: memref<16x1xf32, #tpu.memory_space<vmem>>, %arg3: memref<16x1xf32, #tpu.memory_space<vmem>>, %arg4: memref<16x144xbf16, #tpu.memory_space<vmem>>, %arg5: memref<16x1xf32, #tpu.memory_space<vmem>>, %arg6: memref<16x1xf32, #tpu.memory_space<vmem>>, %arg7: memref<1x768xf32, #tpu.memory_space<vmem>>, %arg8: memref<16x768xf32, #tpu.memory_space<vmem>>, %arg9: memref<16x1024xbf16, #tpu.memory_space<vmem>>) attributes {dimension_semantics = [], scalar_prefetch = 0 : i64, scratch_operands = 1 : i64, tpu.core_type = #tpu.core_type<tc>} {
    %c0 = arith.constant 0 : index
    %c0_0 = arith.constant 0 : index
    %0 = vector.load %arg7[%c0, %c0_0] : memref<1x768xf32, #tpu.memory_space<vmem>>, vector<1x768xf32>
    %c0_1 = arith.constant 0 : index
    %c0_2 = arith.constant 0 : index
    %1 = vector.load %arg1[%c0_1, %c0_2] : memref<16x144xbf16, #tpu.memory_space<vmem>>, vector<16x16xbf16>
    %c0_3 = arith.constant 0 : index
    %c109 = arith.constant 109 : index
    %2 = vector.load %arg0[%c0_3, %c109] : memref<16x1024xbf16, #tpu.memory_space<vmem>>, vector<16x768xbf16>
    %cst = arith.constant dense<0.000000e+00> : vector<16x768xf32>
    %3 = tpu.matmul %1, %2, %cst {dimension_numbers = #tpu.dot_dimension_numbers<[1], [0], [0], [1], [0, 0, 1, 1], [], []>} : vector<16x16xbf16>, vector<16x768xbf16>, vector<16x768xf32> -> vector<16x768xf32>
    %c0_4 = arith.constant 0 : index
    %c16 = arith.constant 16 : index
    %4 = vector.load %arg1[%c0_4, %c16] : memref<16x144xbf16, #tpu.memory_space<vmem>>, vector<16x16xbf16>
    %c0_5 = arith.constant 0 : index
    %c110 = arith.constant 110 : index
    %5 = vector.load %arg0[%c0_5, %c110] : memref<16x1024xbf16, #tpu.memory_space<vmem>>, vector<16x768xbf16>
    %cst_6 = arith.constant dense<0.000000e+00> : vector<16x768xf32>
    %6 = tpu.matmul %4, %5, %cst_6 {dimension_numbers = #tpu.dot_dimension_numbers<[1], [0], [0], [1], [0, 0, 1, 1], [], []>} : vector<16x16xbf16>, vector<16x768xbf16>, vector<16x768xf32> -> vector<16x768xf32>
    %7 = arith.addf %3, %6 : vector<16x768xf32>
    %c0_7 = arith.constant 0 : index
    %c32 = arith.constant 32 : index
    %8 = vector.load %arg1[%c0_7, %c32] : memref<16x144xbf16, #tpu.memory_space<vmem>>, vector<16x16xbf16>
    %c0_8 = arith.constant 0 : index
    %c111 = arith.constant 111 : index
    %9 = vector.load %arg0[%c0_8, %c111] : memref<16x1024xbf16, #tpu.memory_space<vmem>>, vector<16x768xbf16>
    %cst_9 = arith.constant dense<0.000000e+00> : vector<16x768xf32>
    %10 = tpu.matmul %8, %9, %cst_9 {dimension_numbers = #tpu.dot_dimension_numbers<[1], [0], [0], [1], [0, 0, 1, 1], [], []>} : vector<16x16xbf16>, vector<16x768xbf16>, vector<16x768xf32> -> vector<16x768xf32>
    %11 = arith.addf %7, %10 : vector<16x768xf32>
    %c0_10 = arith.constant 0 : index
    %c48 = arith.constant 48 : index
    %12 = vector.load %arg1[%c0_10, %c48] : memref<16x144xbf16, #tpu.memory_space<vmem>>, vector<16x16xbf16>
    %c0_11 = arith.constant 0 : index
    %c127 = arith.constant 127 : index
    %13 = vector.load %arg0[%c0_11, %c127] : memref<16x1024xbf16, #tpu.memory_space<vmem>>, vector<16x768xbf16>
    %cst_12 = arith.constant dense<0.000000e+00> : vector<16x768xf32>
    %14 = tpu.matmul %12, %13, %cst_12 {dimension_numbers = #tpu.dot_dimension_numbers<[1], [0], [0], [1], [0, 0, 1, 1], [], []>} : vector<16x16xbf16>, vector<16x768xbf16>, vector<16x768xf32> -> vector<16x768xf32>
    %15 = arith.addf %11, %14 : vector<16x768xf32>
    %c0_13 = arith.constant 0 : index
    %c64 = arith.constant 64 : index
    %16 = vector.load %arg1[%c0_13, %c64] : memref<16x144xbf16, #tpu.memory_space<vmem>>, vector<16x16xbf16>
    %c0_14 = arith.constant 0 : index
    %c128 = arith.constant 128 : index
    %17 = vector.load %arg0[%c0_14, %c128] : memref<16x1024xbf16, #tpu.memory_space<vmem>>, vector<16x768xbf16>
    %cst_15 = arith.constant dense<0.000000e+00> : vector<16x768xf32>
    %18 = tpu.matmul %16, %17, %cst_15 {dimension_numbers = #tpu.dot_dimension_numbers<[1], [0], [0], [1], [0, 0, 1, 1], [], []>} : vector<16x16xbf16>, vector<16x768xbf16>, vector<16x768xf32> -> vector<16x768xf32>
    %19 = arith.addf %15, %18 : vector<16x768xf32>
    %c0_16 = arith.constant 0 : index
    %c80 = arith.constant 80 : index
    %20 = vector.load %arg1[%c0_16, %c80] : memref<16x144xbf16, #tpu.memory_space<vmem>>, vector<16x16xbf16>
    %c0_17 = arith.constant 0 : index
    %c129 = arith.constant 129 : index
    %21 = vector.load %arg0[%c0_17, %c129] : memref<16x1024xbf16, #tpu.memory_space<vmem>>, vector<16x768xbf16>
    %cst_18 = arith.constant dense<0.000000e+00> : vector<16x768xf32>
    %22 = tpu.matmul %20, %21, %cst_18 {dimension_numbers = #tpu.dot_dimension_numbers<[1], [0], [0], [1], [0, 0, 1, 1], [], []>} : vector<16x16xbf16>, vector<16x768xbf16>, vector<16x768xf32> -> vector<16x768xf32>
    %23 = arith.addf %19, %22 : vector<16x768xf32>
    %c0_19 = arith.constant 0 : index
    %c96 = arith.constant 96 : index
    %24 = vector.load %arg1[%c0_19, %c96] : memref<16x144xbf16, #tpu.memory_space<vmem>>, vector<16x16xbf16>
    %c0_20 = arith.constant 0 : index
    %c145 = arith.constant 145 : index
    %25 = vector.load %arg0[%c0_20, %c145] : memref<16x1024xbf16, #tpu.memory_space<vmem>>, vector<16x768xbf16>
    %cst_21 = arith.constant dense<0.000000e+00> : vector<16x768xf32>
    %26 = tpu.matmul %24, %25, %cst_21 {dimension_numbers = #tpu.dot_dimension_numbers<[1], [0], [0], [1], [0, 0, 1, 1], [], []>} : vector<16x16xbf16>, vector<16x768xbf16>, vector<16x768xf32> -> vector<16x768xf32>
    %27 = arith.addf %23, %26 : vector<16x768xf32>
    %c0_22 = arith.constant 0 : index
    %c112 = arith.constant 112 : index
    %28 = vector.load %arg1[%c0_22, %c112] : memref<16x144xbf16, #tpu.memory_space<vmem>>, vector<16x16xbf16>
    %c0_23 = arith.constant 0 : index
    %c146 = arith.constant 146 : index
    %29 = vector.load %arg0[%c0_23, %c146] : memref<16x1024xbf16, #tpu.memory_space<vmem>>, vector<16x768xbf16>
    %cst_24 = arith.constant dense<0.000000e+00> : vector<16x768xf32>
    %30 = tpu.matmul %28, %29, %cst_24 {dimension_numbers = #tpu.dot_dimension_numbers<[1], [0], [0], [1], [0, 0, 1, 1], [], []>} : vector<16x16xbf16>, vector<16x768xbf16>, vector<16x768xf32> -> vector<16x768xf32>
    %31 = arith.addf %27, %30 : vector<16x768xf32>
    %c0_25 = arith.constant 0 : index
    %c128_26 = arith.constant 128 : index
    %32 = vector.load %arg1[%c0_25, %c128_26] : memref<16x144xbf16, #tpu.memory_space<vmem>>, vector<16x16xbf16>
    %c0_27 = arith.constant 0 : index
    %c147 = arith.constant 147 : index
    %33 = vector.load %arg0[%c0_27, %c147] : memref<16x1024xbf16, #tpu.memory_space<vmem>>, vector<16x768xbf16>
    %cst_28 = arith.constant dense<0.000000e+00> : vector<16x768xf32>
    %34 = tpu.matmul %32, %33, %cst_28 {dimension_numbers = #tpu.dot_dimension_numbers<[1], [0], [0], [1], [0, 0, 1, 1], [], []>} : vector<16x16xbf16>, vector<16x768xbf16>, vector<16x768xf32> -> vector<16x768xf32>
    %35 = arith.addf %31, %34 : vector<16x768xf32>
    %36 = vector.broadcast %0 : vector<1x768xf32> to vector<16x768xf32>
    %37 = arith.mulf %35, %36 : vector<16x768xf32>
    %cst_29 = arith.constant dense<0.000000e+00> : vector<16xf32>
    %38 = vector.multi_reduction <add>, %37, %cst_29 [1] : vector<16x768xf32> to vector<16xf32>
    %39 = vector.shape_cast %38 : vector<16xf32> to vector<16x1xf32>
    %cst_30 = arith.constant 0.001953125 : f32
    %40 = vector.broadcast %cst_30 : f32 to vector<16x1xf32>
    %41 = arith.mulf %39, %40 : vector<16x1xf32>
    %42 = arith.mulf %37, %37 : vector<16x768xf32>
    %cst_31 = arith.constant dense<0.000000e+00> : vector<16xf32>
    %43 = vector.multi_reduction <add>, %42, %cst_31 [1] : vector<16x768xf32> to vector<16xf32>
    %44 = vector.shape_cast %43 : vector<16xf32> to vector<16x1xf32>
    %cst_32 = arith.constant 0.001953125 : f32
    %45 = vector.broadcast %cst_32 : f32 to vector<16x1xf32>
    %46 = arith.mulf %44, %45 : vector<16x1xf32>
    %47 = arith.mulf %41, %41 : vector<16x1xf32>
    %48 = arith.subf %46, %47 : vector<16x1xf32>
    %cst_33 = arith.constant 0.000000e+00 : f32
    %49 = vector.broadcast %cst_33 : f32 to vector<16x1xf32>
    %50 = arith.maximumf %48, %49 : vector<16x1xf32>
    %51 = vector.broadcast %41 : vector<16x1xf32> to vector<16x768xf32>
    %52 = arith.subf %35, %51 : vector<16x768xf32>
    %cst_34 = arith.constant 9.99999974E-6 : f32
    %53 = vector.broadcast %cst_34 : f32 to vector<16x1xf32>
    %54 = arith.addf %50, %53 : vector<16x1xf32>
    %55 = math.rsqrt %54 : vector<16x1xf32>
    %c0_35 = arith.constant 0 : index
    %c0_36 = arith.constant 0 : index
    %56 = vector.load %arg2[%c0_35, %c0_36] : memref<16x1xf32, #tpu.memory_space<vmem>>, vector<16x1xf32>
    %57 = arith.mulf %55, %56 : vector<16x1xf32>
    %58 = vector.broadcast %57 : vector<16x1xf32> to vector<16x768xf32>
    %59 = arith.mulf %52, %58 : vector<16x768xf32>
    %c0_37 = arith.constant 0 : index
    %c0_38 = arith.constant 0 : index
    %60 = vector.load %arg3[%c0_37, %c0_38] : memref<16x1xf32, #tpu.memory_space<vmem>>, vector<16x1xf32>
    %61 = vector.broadcast %60 : vector<16x1xf32> to vector<16x768xf32>
    %62 = arith.addf %59, %61 : vector<16x768xf32>
    %cst_39 = arith.constant 0.000000e+00 : f32
    %63 = vector.broadcast %cst_39 : f32 to vector<16x768xf32>
    %64 = arith.maximumf %62, %63 : vector<16x768xf32>
    %65 = vector.broadcast %0 : vector<1x768xf32> to vector<16x768xf32>
    %66 = arith.mulf %64, %65 : vector<16x768xf32>
    %cst_40 = arith.constant 0.000000e+00 : bf16
    %67 = vector.broadcast %cst_40 : bf16 to vector<16x128xbf16>
    %c0_41 = arith.constant 0 : index
    %c0_42 = arith.constant 0 : index
    %68 = vector.load %arg9[%c0_41, %c0_42] : memref<16x1024xbf16, #tpu.memory_space<vmem>>, vector<16x128xbf16>
    tpu.vector_store %arg9[%c0_41, %c0_42], %67 {strides = array<i32>} : memref<16x1024xbf16, #tpu.memory_space<vmem>>, vector<16x128xbf16>,
    %cst_43 = arith.constant 0.000000e+00 : bf16
    %69 = vector.broadcast %cst_43 : bf16 to vector<16x128xbf16>
    %c0_44 = arith.constant 0 : index
    %c896 = arith.constant 896 : index
    %70 = vector.load %arg9[%c0_44, %c896] : memref<16x1024xbf16, #tpu.memory_space<vmem>>, vector<16x128xbf16>
    tpu.vector_store %arg9[%c0_44, %c896], %69 {strides = array<i32>} : memref<16x1024xbf16, #tpu.memory_space<vmem>>, vector<16x128xbf16>,
    %71 = arith.truncf %66 : vector<16x768xf32> to vector<16x768xbf16>
    %c0_45 = arith.constant 0 : index
    %c128_46 = arith.constant 128 : index
    %72 = vector.load %arg9[%c0_45, %c128_46] : memref<16x1024xbf16, #tpu.memory_space<vmem>>, vector<16x768xbf16>
    tpu.vector_store %arg9[%c0_45, %c128_46], %71 {strides = array<i32>} : memref<16x1024xbf16, #tpu.memory_space<vmem>>, vector<16x768xbf16>,
    %c0_47 = arith.constant 0 : index
    %c0_48 = arith.constant 0 : index
    %73 = vector.load %arg4[%c0_47, %c0_48] : memref<16x144xbf16, #tpu.memory_space<vmem>>, vector<16x16xbf16>
    %c0_49 = arith.constant 0 : index
    %c109_50 = arith.constant 109 : index
    %74 = vector.load %arg9[%c0_49, %c109_50] : memref<16x1024xbf16, #tpu.memory_space<vmem>>, vector<16x768xbf16>
    %cst_51 = arith.constant dense<0.000000e+00> : vector<16x768xf32>
    %75 = tpu.matmul %73, %74, %cst_51 {dimension_numbers = #tpu.dot_dimension_numbers<[1], [0], [0], [1], [0, 0, 1, 1], [], []>} : vector<16x16xbf16>, vector<16x768xbf16>, vector<16x768xf32> -> vector<16x768xf32>
    %c0_52 = arith.constant 0 : index
    %c16_53 = arith.constant 16 : index
    %76 = vector.load %arg4[%c0_52, %c16_53] : memref<16x144xbf16, #tpu.memory_space<vmem>>, vector<16x16xbf16>
    %c0_54 = arith.constant 0 : index
    %c110_55 = arith.constant 110 : index
    %77 = vector.load %arg9[%c0_54, %c110_55] : memref<16x1024xbf16, #tpu.memory_space<vmem>>, vector<16x768xbf16>
    %cst_56 = arith.constant dense<0.000000e+00> : vector<16x768xf32>
    %78 = tpu.matmul %76, %77, %cst_56 {dimension_numbers = #tpu.dot_dimension_numbers<[1], [0], [0], [1], [0, 0, 1, 1], [], []>} : vector<16x16xbf16>, vector<16x768xbf16>, vector<16x768xf32> -> vector<16x768xf32>
    %79 = arith.addf %75, %78 : vector<16x768xf32>
    %c0_57 = arith.constant 0 : index
    %c32_58 = arith.constant 32 : index
    %80 = vector.load %arg4[%c0_57, %c32_58] : memref<16x144xbf16, #tpu.memory_space<vmem>>, vector<16x16xbf16>
    %c0_59 = arith.constant 0 : index
    %c111_60 = arith.constant 111 : index
    %81 = vector.load %arg9[%c0_59, %c111_60] : memref<16x1024xbf16, #tpu.memory_space<vmem>>, vector<16x768xbf16>
    %cst_61 = arith.constant dense<0.000000e+00> : vector<16x768xf32>
    %82 = tpu.matmul %80, %81, %cst_61 {dimension_numbers = #tpu.dot_dimension_numbers<[1], [0], [0], [1], [0, 0, 1, 1], [], []>} : vector<16x16xbf16>, vector<16x768xbf16>, vector<16x768xf32> -> vector<16x768xf32>
    %83 = arith.addf %79, %82 : vector<16x768xf32>
    %c0_62 = arith.constant 0 : index
    %c48_63 = arith.constant 48 : index
    %84 = vector.load %arg4[%c0_62, %c48_63] : memref<16x144xbf16, #tpu.memory_space<vmem>>, vector<16x16xbf16>
    %c0_64 = arith.constant 0 : index
    %c127_65 = arith.constant 127 : index
    %85 = vector.load %arg9[%c0_64, %c127_65] : memref<16x1024xbf16, #tpu.memory_space<vmem>>, vector<16x768xbf16>
    %cst_66 = arith.constant dense<0.000000e+00> : vector<16x768xf32>
    %86 = tpu.matmul %84, %85, %cst_66 {dimension_numbers = #tpu.dot_dimension_numbers<[1], [0], [0], [1], [0, 0, 1, 1], [], []>} : vector<16x16xbf16>, vector<16x768xbf16>, vector<16x768xf32> -> vector<16x768xf32>
    %87 = arith.addf %83, %86 : vector<16x768xf32>
    %c0_67 = arith.constant 0 : index
    %c64_68 = arith.constant 64 : index
    %88 = vector.load %arg4[%c0_67, %c64_68] : memref<16x144xbf16, #tpu.memory_space<vmem>>, vector<16x16xbf16>
    %c0_69 = arith.constant 0 : index
    %c128_70 = arith.constant 128 : index
    %89 = vector.load %arg9[%c0_69, %c128_70] : memref<16x1024xbf16, #tpu.memory_space<vmem>>, vector<16x768xbf16>
    %cst_71 = arith.constant dense<0.000000e+00> : vector<16x768xf32>
    %90 = tpu.matmul %88, %89, %cst_71 {dimension_numbers = #tpu.dot_dimension_numbers<[1], [0], [0], [1], [0, 0, 1, 1], [], []>} : vector<16x16xbf16>, vector<16x768xbf16>, vector<16x768xf32> -> vector<16x768xf32>
    %91 = arith.addf %87, %90 : vector<16x768xf32>
    %c0_72 = arith.constant 0 : index
    %c80_73 = arith.constant 80 : index
    %92 = vector.load %arg4[%c0_72, %c80_73] : memref<16x144xbf16, #tpu.memory_space<vmem>>, vector<16x16xbf16>
    %c0_74 = arith.constant 0 : index
    %c129_75 = arith.constant 129 : index
    %93 = vector.load %arg9[%c0_74, %c129_75] : memref<16x1024xbf16, #tpu.memory_space<vmem>>, vector<16x768xbf16>
    %cst_76 = arith.constant dense<0.000000e+00> : vector<16x768xf32>
    %94 = tpu.matmul %92, %93, %cst_76 {dimension_numbers = #tpu.dot_dimension_numbers<[1], [0], [0], [1], [0, 0, 1, 1], [], []>} : vector<16x16xbf16>, vector<16x768xbf16>, vector<16x768xf32> -> vector<16x768xf32>
    %95 = arith.addf %91, %94 : vector<16x768xf32>
    %c0_77 = arith.constant 0 : index
    %c96_78 = arith.constant 96 : index
    %96 = vector.load %arg4[%c0_77, %c96_78] : memref<16x144xbf16, #tpu.memory_space<vmem>>, vector<16x16xbf16>
    %c0_79 = arith.constant 0 : index
    %c145_80 = arith.constant 145 : index
    %97 = vector.load %arg9[%c0_79, %c145_80] : memref<16x1024xbf16, #tpu.memory_space<vmem>>, vector<16x768xbf16>
    %cst_81 = arith.constant dense<0.000000e+00> : vector<16x768xf32>
    %98 = tpu.matmul %96, %97, %cst_81 {dimension_numbers = #tpu.dot_dimension_numbers<[1], [0], [0], [1], [0, 0, 1, 1], [], []>} : vector<16x16xbf16>, vector<16x768xbf16>, vector<16x768xf32> -> vector<16x768xf32>
    %99 = arith.addf %95, %98 : vector<16x768xf32>
    %c0_82 = arith.constant 0 : index
    %c112_83 = arith.constant 112 : index
    %100 = vector.load %arg4[%c0_82, %c112_83] : memref<16x144xbf16, #tpu.memory_space<vmem>>, vector<16x16xbf16>
    %c0_84 = arith.constant 0 : index
    %c146_85 = arith.constant 146 : index
    %101 = vector.load %arg9[%c0_84, %c146_85] : memref<16x1024xbf16, #tpu.memory_space<vmem>>, vector<16x768xbf16>
    %cst_86 = arith.constant dense<0.000000e+00> : vector<16x768xf32>
    %102 = tpu.matmul %100, %101, %cst_86 {dimension_numbers = #tpu.dot_dimension_numbers<[1], [0], [0], [1], [0, 0, 1, 1], [], []>} : vector<16x16xbf16>, vector<16x768xbf16>, vector<16x768xf32> -> vector<16x768xf32>
    %103 = arith.addf %99, %102 : vector<16x768xf32>
    %c0_87 = arith.constant 0 : index
    %c128_88 = arith.constant 128 : index
    %104 = vector.load %arg4[%c0_87, %c128_88] : memref<16x144xbf16, #tpu.memory_space<vmem>>, vector<16x16xbf16>
    %c0_89 = arith.constant 0 : index
    %c147_90 = arith.constant 147 : index
    %105 = vector.load %arg9[%c0_89, %c147_90] : memref<16x1024xbf16, #tpu.memory_space<vmem>>, vector<16x768xbf16>
    %cst_91 = arith.constant dense<0.000000e+00> : vector<16x768xf32>
    %106 = tpu.matmul %104, %105, %cst_91 {dimension_numbers = #tpu.dot_dimension_numbers<[1], [0], [0], [1], [0, 0, 1, 1], [], []>} : vector<16x16xbf16>, vector<16x768xbf16>, vector<16x768xf32> -> vector<16x768xf32>
    %107 = arith.addf %103, %106 : vector<16x768xf32>
    %108 = vector.broadcast %0 : vector<1x768xf32> to vector<16x768xf32>
    %109 = arith.mulf %107, %108 : vector<16x768xf32>
    %cst_92 = arith.constant dense<0.000000e+00> : vector<16xf32>
    %110 = vector.multi_reduction <add>, %109, %cst_92 [1] : vector<16x768xf32> to vector<16xf32>
    %111 = vector.shape_cast %110 : vector<16xf32> to vector<16x1xf32>
    %cst_93 = arith.constant 0.001953125 : f32
    %112 = vector.broadcast %cst_93 : f32 to vector<16x1xf32>
    %113 = arith.mulf %111, %112 : vector<16x1xf32>
    %114 = arith.mulf %109, %109 : vector<16x768xf32>
    %cst_94 = arith.constant dense<0.000000e+00> : vector<16xf32>
    %115 = vector.multi_reduction <add>, %114, %cst_94 [1] : vector<16x768xf32> to vector<16xf32>
    %116 = vector.shape_cast %115 : vector<16xf32> to vector<16x1xf32>
    %cst_95 = arith.constant 0.001953125 : f32
    %117 = vector.broadcast %cst_95 : f32 to vector<16x1xf32>
    %118 = arith.mulf %116, %117 : vector<16x1xf32>
    %119 = arith.mulf %113, %113 : vector<16x1xf32>
    %120 = arith.subf %118, %119 : vector<16x1xf32>
    %cst_96 = arith.constant 0.000000e+00 : f32
    %121 = vector.broadcast %cst_96 : f32 to vector<16x1xf32>
    %122 = arith.maximumf %120, %121 : vector<16x1xf32>
    %123 = vector.broadcast %113 : vector<16x1xf32> to vector<16x768xf32>
    %124 = arith.subf %107, %123 : vector<16x768xf32>
    %cst_97 = arith.constant 9.99999974E-6 : f32
    %125 = vector.broadcast %cst_97 : f32 to vector<16x1xf32>
    %126 = arith.addf %122, %125 : vector<16x1xf32>
    %127 = math.rsqrt %126 : vector<16x1xf32>
    %c0_98 = arith.constant 0 : index
    %c0_99 = arith.constant 0 : index
    %128 = vector.load %arg5[%c0_98, %c0_99] : memref<16x1xf32, #tpu.memory_space<vmem>>, vector<16x1xf32>
    %129 = arith.mulf %127, %128 : vector<16x1xf32>
    %130 = vector.broadcast %129 : vector<16x1xf32> to vector<16x768xf32>
    %131 = arith.mulf %124, %130 : vector<16x768xf32>
    %c0_100 = arith.constant 0 : index
    %c0_101 = arith.constant 0 : index
    %132 = vector.load %arg6[%c0_100, %c0_101] : memref<16x1xf32, #tpu.memory_space<vmem>>, vector<16x1xf32>
    %133 = vector.broadcast %132 : vector<16x1xf32> to vector<16x768xf32>
    %134 = arith.addf %131, %133 : vector<16x768xf32>
    %c0_102 = arith.constant 0 : index
    %c128_103 = arith.constant 128 : index
    %135 = vector.load %arg0[%c0_102, %c128_103] : memref<16x1024xbf16, #tpu.memory_space<vmem>>, vector<16x768xbf16>
    %136 = arith.extf %135 : vector<16x768xbf16> to vector<16x768xf32>
    %137 = arith.addf %134, %136 : vector<16x768xf32>
    %cst_104 = arith.constant 0.000000e+00 : f32
    %138 = vector.broadcast %cst_104 : f32 to vector<16x768xf32>
    %139 = arith.maximumf %137, %138 : vector<16x768xf32>
    %c0_105 = arith.constant 0 : index
    %c0_106 = arith.constant 0 : index
    %140 = vector.load %arg8[%c0_105, %c0_106] : memref<16x768xf32, #tpu.memory_space<vmem>>, vector<16x768xf32>
    tpu.vector_store %arg8[%c0_105, %c0_106], %139 {strides = array<i32>} : memref<16x768xf32, #tpu.memory_space<vmem>>, vector<16x768xf32>,
    return
  }
}

module attributes {stable_mosaic.version = 11 : i64} {
  func.func @_basic_block_kernel(%arg0: memref<16x512xbf16, #tpu.memory_space<vmem>>, %arg1: memref<16x512xbf16, #tpu.memory_space<vmem>>, %arg2: memref<16x512xbf16, #tpu.memory_space<vmem>>, %arg3: memref<16x512xbf16, #tpu.memory_space<vmem>>, %arg4: memref<32x144xbf16, #tpu.memory_space<vmem>>, %arg5: memref<32x1xf32, #tpu.memory_space<vmem>>, %arg6: memref<32x1xf32, #tpu.memory_space<vmem>>, %arg7: memref<32x288xbf16, #tpu.memory_space<vmem>>, %arg8: memref<32x1xf32, #tpu.memory_space<vmem>>, %arg9: memref<32x1xf32, #tpu.memory_space<vmem>>, %arg10: memref<1x256xf32, #tpu.memory_space<vmem>>, %arg11: memref<32x256xf32, #tpu.memory_space<vmem>>, %arg12: memref<32x512xbf16, #tpu.memory_space<vmem>>) attributes {dimension_semantics = [], scalar_prefetch = 0 : i64, scratch_operands = 1 : i64, tpu.core_type = #tpu.core_type<tc>} {
    %c0 = arith.constant 0 : index
    %c0_0 = arith.constant 0 : index
    %0 = vector.load %arg10[%c0, %c0_0] : memref<1x256xf32, #tpu.memory_space<vmem>>, vector<1x256xf32>
    %c0_1 = arith.constant 0 : index
    %c0_2 = arith.constant 0 : index
    %1 = vector.load %arg4[%c0_1, %c0_2] : memref<32x144xbf16, #tpu.memory_space<vmem>>, vector<32x16xbf16>
    %c0_3 = arith.constant 0 : index
    %c117 = arith.constant 117 : index
    %2 = vector.load %arg0[%c0_3, %c117] : memref<16x512xbf16, #tpu.memory_space<vmem>>, vector<16x256xbf16>
    %cst = arith.constant dense<0.000000e+00> : vector<32x256xf32>
    %3 = tpu.matmul %1, %2, %cst {dimension_numbers = #tpu.dot_dimension_numbers<[1], [0], [0], [1], [0, 0, 1, 1], [], []>} : vector<32x16xbf16>, vector<16x256xbf16>, vector<32x256xf32> -> vector<32x256xf32>
    %c0_4 = arith.constant 0 : index
    %c16 = arith.constant 16 : index
    %4 = vector.load %arg4[%c0_4, %c16] : memref<32x144xbf16, #tpu.memory_space<vmem>>, vector<32x16xbf16>
    %c0_5 = arith.constant 0 : index
    %c117_6 = arith.constant 117 : index
    %5 = vector.load %arg1[%c0_5, %c117_6] : memref<16x512xbf16, #tpu.memory_space<vmem>>, vector<16x256xbf16>
    %cst_7 = arith.constant dense<0.000000e+00> : vector<32x256xf32>
    %6 = tpu.matmul %4, %5, %cst_7 {dimension_numbers = #tpu.dot_dimension_numbers<[1], [0], [0], [1], [0, 0, 1, 1], [], []>} : vector<32x16xbf16>, vector<16x256xbf16>, vector<32x256xf32> -> vector<32x256xf32>
    %7 = arith.addf %3, %6 : vector<32x256xf32>
    %c0_8 = arith.constant 0 : index
    %c32 = arith.constant 32 : index
    %8 = vector.load %arg4[%c0_8, %c32] : memref<32x144xbf16, #tpu.memory_space<vmem>>, vector<32x16xbf16>
    %c0_9 = arith.constant 0 : index
    %c118 = arith.constant 118 : index
    %9 = vector.load %arg0[%c0_9, %c118] : memref<16x512xbf16, #tpu.memory_space<vmem>>, vector<16x256xbf16>
    %cst_10 = arith.constant dense<0.000000e+00> : vector<32x256xf32>
    %10 = tpu.matmul %8, %9, %cst_10 {dimension_numbers = #tpu.dot_dimension_numbers<[1], [0], [0], [1], [0, 0, 1, 1], [], []>} : vector<32x16xbf16>, vector<16x256xbf16>, vector<32x256xf32> -> vector<32x256xf32>
    %11 = arith.addf %7, %10 : vector<32x256xf32>
    %c0_11 = arith.constant 0 : index
    %c48 = arith.constant 48 : index
    %12 = vector.load %arg4[%c0_11, %c48] : memref<32x144xbf16, #tpu.memory_space<vmem>>, vector<32x16xbf16>
    %c0_12 = arith.constant 0 : index
    %c117_13 = arith.constant 117 : index
    %13 = vector.load %arg2[%c0_12, %c117_13] : memref<16x512xbf16, #tpu.memory_space<vmem>>, vector<16x256xbf16>
    %cst_14 = arith.constant dense<0.000000e+00> : vector<32x256xf32>
    %14 = tpu.matmul %12, %13, %cst_14 {dimension_numbers = #tpu.dot_dimension_numbers<[1], [0], [0], [1], [0, 0, 1, 1], [], []>} : vector<32x16xbf16>, vector<16x256xbf16>, vector<32x256xf32> -> vector<32x256xf32>
    %15 = arith.addf %11, %14 : vector<32x256xf32>
    %c0_15 = arith.constant 0 : index
    %c64 = arith.constant 64 : index
    %16 = vector.load %arg4[%c0_15, %c64] : memref<32x144xbf16, #tpu.memory_space<vmem>>, vector<32x16xbf16>
    %c0_16 = arith.constant 0 : index
    %c117_17 = arith.constant 117 : index
    %17 = vector.load %arg3[%c0_16, %c117_17] : memref<16x512xbf16, #tpu.memory_space<vmem>>, vector<16x256xbf16>
    %cst_18 = arith.constant dense<0.000000e+00> : vector<32x256xf32>
    %18 = tpu.matmul %16, %17, %cst_18 {dimension_numbers = #tpu.dot_dimension_numbers<[1], [0], [0], [1], [0, 0, 1, 1], [], []>} : vector<32x16xbf16>, vector<16x256xbf16>, vector<32x256xf32> -> vector<32x256xf32>
    %19 = arith.addf %15, %18 : vector<32x256xf32>
    %c0_19 = arith.constant 0 : index
    %c80 = arith.constant 80 : index
    %20 = vector.load %arg4[%c0_19, %c80] : memref<32x144xbf16, #tpu.memory_space<vmem>>, vector<32x16xbf16>
    %c0_20 = arith.constant 0 : index
    %c118_21 = arith.constant 118 : index
    %21 = vector.load %arg2[%c0_20, %c118_21] : memref<16x512xbf16, #tpu.memory_space<vmem>>, vector<16x256xbf16>
    %cst_22 = arith.constant dense<0.000000e+00> : vector<32x256xf32>
    %22 = tpu.matmul %20, %21, %cst_22 {dimension_numbers = #tpu.dot_dimension_numbers<[1], [0], [0], [1], [0, 0, 1, 1], [], []>} : vector<32x16xbf16>, vector<16x256xbf16>, vector<32x256xf32> -> vector<32x256xf32>
    %23 = arith.addf %19, %22 : vector<32x256xf32>
    %c0_23 = arith.constant 0 : index
    %c96 = arith.constant 96 : index
    %24 = vector.load %arg4[%c0_23, %c96] : memref<32x144xbf16, #tpu.memory_space<vmem>>, vector<32x16xbf16>
    %c0_24 = arith.constant 0 : index
    %c127 = arith.constant 127 : index
    %25 = vector.load %arg0[%c0_24, %c127] : memref<16x512xbf16, #tpu.memory_space<vmem>>, vector<16x256xbf16>
    %cst_25 = arith.constant dense<0.000000e+00> : vector<32x256xf32>
    %26 = tpu.matmul %24, %25, %cst_25 {dimension_numbers = #tpu.dot_dimension_numbers<[1], [0], [0], [1], [0, 0, 1, 1], [], []>} : vector<32x16xbf16>, vector<16x256xbf16>, vector<32x256xf32> -> vector<32x256xf32>
    %27 = arith.addf %23, %26 : vector<32x256xf32>
    %c0_26 = arith.constant 0 : index
    %c112 = arith.constant 112 : index
    %28 = vector.load %arg4[%c0_26, %c112] : memref<32x144xbf16, #tpu.memory_space<vmem>>, vector<32x16xbf16>
    %c0_27 = arith.constant 0 : index
    %c127_28 = arith.constant 127 : index
    %29 = vector.load %arg1[%c0_27, %c127_28] : memref<16x512xbf16, #tpu.memory_space<vmem>>, vector<16x256xbf16>
    %cst_29 = arith.constant dense<0.000000e+00> : vector<32x256xf32>
    %30 = tpu.matmul %28, %29, %cst_29 {dimension_numbers = #tpu.dot_dimension_numbers<[1], [0], [0], [1], [0, 0, 1, 1], [], []>} : vector<32x16xbf16>, vector<16x256xbf16>, vector<32x256xf32> -> vector<32x256xf32>
    %31 = arith.addf %27, %30 : vector<32x256xf32>
    %c0_30 = arith.constant 0 : index
    %c128 = arith.constant 128 : index
    %32 = vector.load %arg4[%c0_30, %c128] : memref<32x144xbf16, #tpu.memory_space<vmem>>, vector<32x16xbf16>
    %c0_31 = arith.constant 0 : index
    %c128_32 = arith.constant 128 : index
    %33 = vector.load %arg0[%c0_31, %c128_32] : memref<16x512xbf16, #tpu.memory_space<vmem>>, vector<16x256xbf16>
    %cst_33 = arith.constant dense<0.000000e+00> : vector<32x256xf32>
    %34 = tpu.matmul %32, %33, %cst_33 {dimension_numbers = #tpu.dot_dimension_numbers<[1], [0], [0], [1], [0, 0, 1, 1], [], []>} : vector<32x16xbf16>, vector<16x256xbf16>, vector<32x256xf32> -> vector<32x256xf32>
    %35 = arith.addf %31, %34 : vector<32x256xf32>
    %36 = vector.broadcast %0 : vector<1x256xf32> to vector<32x256xf32>
    %37 = arith.mulf %35, %36 : vector<32x256xf32>
    %cst_34 = arith.constant dense<0.000000e+00> : vector<32xf32>
    %38 = vector.multi_reduction <add>, %37, %cst_34 [1] : vector<32x256xf32> to vector<32xf32>
    %39 = vector.shape_cast %38 : vector<32xf32> to vector<32x1xf32>
    %cst_35 = arith.constant 7.812500e-03 : f32
    %40 = vector.broadcast %cst_35 : f32 to vector<32x1xf32>
    %41 = arith.mulf %39, %40 : vector<32x1xf32>
    %42 = arith.mulf %37, %37 : vector<32x256xf32>
    %cst_36 = arith.constant dense<0.000000e+00> : vector<32xf32>
    %43 = vector.multi_reduction <add>, %42, %cst_36 [1] : vector<32x256xf32> to vector<32xf32>
    %44 = vector.shape_cast %43 : vector<32xf32> to vector<32x1xf32>
    %cst_37 = arith.constant 7.812500e-03 : f32
    %45 = vector.broadcast %cst_37 : f32 to vector<32x1xf32>
    %46 = arith.mulf %44, %45 : vector<32x1xf32>
    %47 = arith.mulf %41, %41 : vector<32x1xf32>
    %48 = arith.subf %46, %47 : vector<32x1xf32>
    %cst_38 = arith.constant 0.000000e+00 : f32
    %49 = vector.broadcast %cst_38 : f32 to vector<32x1xf32>
    %50 = arith.maximumf %48, %49 : vector<32x1xf32>
    %51 = vector.broadcast %41 : vector<32x1xf32> to vector<32x256xf32>
    %52 = arith.subf %35, %51 : vector<32x256xf32>
    %cst_39 = arith.constant 9.99999974E-6 : f32
    %53 = vector.broadcast %cst_39 : f32 to vector<32x1xf32>
    %54 = arith.addf %50, %53 : vector<32x1xf32>
    %55 = math.rsqrt %54 : vector<32x1xf32>
    %c0_40 = arith.constant 0 : index
    %c0_41 = arith.constant 0 : index
    %56 = vector.load %arg5[%c0_40, %c0_41] : memref<32x1xf32, #tpu.memory_space<vmem>>, vector<32x1xf32>
    %57 = arith.mulf %55, %56 : vector<32x1xf32>
    %58 = vector.broadcast %57 : vector<32x1xf32> to vector<32x256xf32>
    %59 = arith.mulf %52, %58 : vector<32x256xf32>
    %c0_42 = arith.constant 0 : index
    %c0_43 = arith.constant 0 : index
    %60 = vector.load %arg6[%c0_42, %c0_43] : memref<32x1xf32, #tpu.memory_space<vmem>>, vector<32x1xf32>
    %61 = vector.broadcast %60 : vector<32x1xf32> to vector<32x256xf32>
    %62 = arith.addf %59, %61 : vector<32x256xf32>
    %cst_44 = arith.constant 0.000000e+00 : f32
    %63 = vector.broadcast %cst_44 : f32 to vector<32x256xf32>
    %64 = arith.maximumf %62, %63 : vector<32x256xf32>
    %65 = vector.broadcast %0 : vector<1x256xf32> to vector<32x256xf32>
    %66 = arith.mulf %64, %65 : vector<32x256xf32>
    %cst_45 = arith.constant 0.000000e+00 : bf16
    %67 = vector.broadcast %cst_45 : bf16 to vector<32x128xbf16>
    %c0_46 = arith.constant 0 : index
    %c0_47 = arith.constant 0 : index
    %68 = vector.load %arg12[%c0_46, %c0_47] : memref<32x512xbf16, #tpu.memory_space<vmem>>, vector<32x128xbf16>
    tpu.vector_store %arg12[%c0_46, %c0_47], %67 {strides = array<i32>} : memref<32x512xbf16, #tpu.memory_space<vmem>>, vector<32x128xbf16>,
    %cst_48 = arith.constant 0.000000e+00 : bf16
    %69 = vector.broadcast %cst_48 : bf16 to vector<32x128xbf16>
    %c0_49 = arith.constant 0 : index
    %c384 = arith.constant 384 : index
    %70 = vector.load %arg12[%c0_49, %c384] : memref<32x512xbf16, #tpu.memory_space<vmem>>, vector<32x128xbf16>
    tpu.vector_store %arg12[%c0_49, %c384], %69 {strides = array<i32>} : memref<32x512xbf16, #tpu.memory_space<vmem>>, vector<32x128xbf16>,
    %71 = arith.truncf %66 : vector<32x256xf32> to vector<32x256xbf16>
    %c0_50 = arith.constant 0 : index
    %c128_51 = arith.constant 128 : index
    %72 = vector.load %arg12[%c0_50, %c128_51] : memref<32x512xbf16, #tpu.memory_space<vmem>>, vector<32x256xbf16>
    tpu.vector_store %arg12[%c0_50, %c128_51], %71 {strides = array<i32>} : memref<32x512xbf16, #tpu.memory_space<vmem>>, vector<32x256xbf16>,
    %c0_52 = arith.constant 0 : index
    %c0_53 = arith.constant 0 : index
    %73 = vector.load %arg7[%c0_52, %c0_53] : memref<32x288xbf16, #tpu.memory_space<vmem>>, vector<32x32xbf16>
    %c0_54 = arith.constant 0 : index
    %c117_55 = arith.constant 117 : index
    %74 = vector.load %arg12[%c0_54, %c117_55] : memref<32x512xbf16, #tpu.memory_space<vmem>>, vector<32x256xbf16>
    %cst_56 = arith.constant dense<0.000000e+00> : vector<32x256xf32>
    %75 = tpu.matmul %73, %74, %cst_56 {dimension_numbers = #tpu.dot_dimension_numbers<[1], [0], [0], [1], [0, 0, 1, 1], [], []>} : vector<32x32xbf16>, vector<32x256xbf16>, vector<32x256xf32> -> vector<32x256xf32>
    %c0_57 = arith.constant 0 : index
    %c32_58 = arith.constant 32 : index
    %76 = vector.load %arg7[%c0_57, %c32_58] : memref<32x288xbf16, #tpu.memory_space<vmem>>, vector<32x32xbf16>
    %c0_59 = arith.constant 0 : index
    %c118_60 = arith.constant 118 : index
    %77 = vector.load %arg12[%c0_59, %c118_60] : memref<32x512xbf16, #tpu.memory_space<vmem>>, vector<32x256xbf16>
    %cst_61 = arith.constant dense<0.000000e+00> : vector<32x256xf32>
    %78 = tpu.matmul %76, %77, %cst_61 {dimension_numbers = #tpu.dot_dimension_numbers<[1], [0], [0], [1], [0, 0, 1, 1], [], []>} : vector<32x32xbf16>, vector<32x256xbf16>, vector<32x256xf32> -> vector<32x256xf32>
    %79 = arith.addf %75, %78 : vector<32x256xf32>
    %c0_62 = arith.constant 0 : index
    %c64_63 = arith.constant 64 : index
    %80 = vector.load %arg7[%c0_62, %c64_63] : memref<32x288xbf16, #tpu.memory_space<vmem>>, vector<32x32xbf16>
    %c0_64 = arith.constant 0 : index
    %c119 = arith.constant 119 : index
    %81 = vector.load %arg12[%c0_64, %c119] : memref<32x512xbf16, #tpu.memory_space<vmem>>, vector<32x256xbf16>
    %cst_65 = arith.constant dense<0.000000e+00> : vector<32x256xf32>
    %82 = tpu.matmul %80, %81, %cst_65 {dimension_numbers = #tpu.dot_dimension_numbers<[1], [0], [0], [1], [0, 0, 1, 1], [], []>} : vector<32x32xbf16>, vector<32x256xbf16>, vector<32x256xf32> -> vector<32x256xf32>
    %83 = arith.addf %79, %82 : vector<32x256xf32>
    %c0_66 = arith.constant 0 : index
    %c96_67 = arith.constant 96 : index
    %84 = vector.load %arg7[%c0_66, %c96_67] : memref<32x288xbf16, #tpu.memory_space<vmem>>, vector<32x32xbf16>
    %c0_68 = arith.constant 0 : index
    %c127_69 = arith.constant 127 : index
    %85 = vector.load %arg12[%c0_68, %c127_69] : memref<32x512xbf16, #tpu.memory_space<vmem>>, vector<32x256xbf16>
    %cst_70 = arith.constant dense<0.000000e+00> : vector<32x256xf32>
    %86 = tpu.matmul %84, %85, %cst_70 {dimension_numbers = #tpu.dot_dimension_numbers<[1], [0], [0], [1], [0, 0, 1, 1], [], []>} : vector<32x32xbf16>, vector<32x256xbf16>, vector<32x256xf32> -> vector<32x256xf32>
    %87 = arith.addf %83, %86 : vector<32x256xf32>
    %c0_71 = arith.constant 0 : index
    %c128_72 = arith.constant 128 : index
    %88 = vector.load %arg7[%c0_71, %c128_72] : memref<32x288xbf16, #tpu.memory_space<vmem>>, vector<32x32xbf16>
    %c0_73 = arith.constant 0 : index
    %c128_74 = arith.constant 128 : index
    %89 = vector.load %arg12[%c0_73, %c128_74] : memref<32x512xbf16, #tpu.memory_space<vmem>>, vector<32x256xbf16>
    %cst_75 = arith.constant dense<0.000000e+00> : vector<32x256xf32>
    %90 = tpu.matmul %88, %89, %cst_75 {dimension_numbers = #tpu.dot_dimension_numbers<[1], [0], [0], [1], [0, 0, 1, 1], [], []>} : vector<32x32xbf16>, vector<32x256xbf16>, vector<32x256xf32> -> vector<32x256xf32>
    %91 = arith.addf %87, %90 : vector<32x256xf32>
    %c0_76 = arith.constant 0 : index
    %c160 = arith.constant 160 : index
    %92 = vector.load %arg7[%c0_76, %c160] : memref<32x288xbf16, #tpu.memory_space<vmem>>, vector<32x32xbf16>
    %c0_77 = arith.constant 0 : index
    %c129 = arith.constant 129 : index
    %93 = vector.load %arg12[%c0_77, %c129] : memref<32x512xbf16, #tpu.memory_space<vmem>>, vector<32x256xbf16>
    %cst_78 = arith.constant dense<0.000000e+00> : vector<32x256xf32>
    %94 = tpu.matmul %92, %93, %cst_78 {dimension_numbers = #tpu.dot_dimension_numbers<[1], [0], [0], [1], [0, 0, 1, 1], [], []>} : vector<32x32xbf16>, vector<32x256xbf16>, vector<32x256xf32> -> vector<32x256xf32>
    %95 = arith.addf %91, %94 : vector<32x256xf32>
    %c0_79 = arith.constant 0 : index
    %c192 = arith.constant 192 : index
    %96 = vector.load %arg7[%c0_79, %c192] : memref<32x288xbf16, #tpu.memory_space<vmem>>, vector<32x32xbf16>
    %c0_80 = arith.constant 0 : index
    %c137 = arith.constant 137 : index
    %97 = vector.load %arg12[%c0_80, %c137] : memref<32x512xbf16, #tpu.memory_space<vmem>>, vector<32x256xbf16>
    %cst_81 = arith.constant dense<0.000000e+00> : vector<32x256xf32>
    %98 = tpu.matmul %96, %97, %cst_81 {dimension_numbers = #tpu.dot_dimension_numbers<[1], [0], [0], [1], [0, 0, 1, 1], [], []>} : vector<32x32xbf16>, vector<32x256xbf16>, vector<32x256xf32> -> vector<32x256xf32>
    %99 = arith.addf %95, %98 : vector<32x256xf32>
    %c0_82 = arith.constant 0 : index
    %c224 = arith.constant 224 : index
    %100 = vector.load %arg7[%c0_82, %c224] : memref<32x288xbf16, #tpu.memory_space<vmem>>, vector<32x32xbf16>
    %c0_83 = arith.constant 0 : index
    %c138 = arith.constant 138 : index
    %101 = vector.load %arg12[%c0_83, %c138] : memref<32x512xbf16, #tpu.memory_space<vmem>>, vector<32x256xbf16>
    %cst_84 = arith.constant dense<0.000000e+00> : vector<32x256xf32>
    %102 = tpu.matmul %100, %101, %cst_84 {dimension_numbers = #tpu.dot_dimension_numbers<[1], [0], [0], [1], [0, 0, 1, 1], [], []>} : vector<32x32xbf16>, vector<32x256xbf16>, vector<32x256xf32> -> vector<32x256xf32>
    %103 = arith.addf %99, %102 : vector<32x256xf32>
    %c0_85 = arith.constant 0 : index
    %c256 = arith.constant 256 : index
    %104 = vector.load %arg7[%c0_85, %c256] : memref<32x288xbf16, #tpu.memory_space<vmem>>, vector<32x32xbf16>
    %c0_86 = arith.constant 0 : index
    %c139 = arith.constant 139 : index
    %105 = vector.load %arg12[%c0_86, %c139] : memref<32x512xbf16, #tpu.memory_space<vmem>>, vector<32x256xbf16>
    %cst_87 = arith.constant dense<0.000000e+00> : vector<32x256xf32>
    %106 = tpu.matmul %104, %105, %cst_87 {dimension_numbers = #tpu.dot_dimension_numbers<[1], [0], [0], [1], [0, 0, 1, 1], [], []>} : vector<32x32xbf16>, vector<32x256xbf16>, vector<32x256xf32> -> vector<32x256xf32>
    %107 = arith.addf %103, %106 : vector<32x256xf32>
    %108 = vector.broadcast %0 : vector<1x256xf32> to vector<32x256xf32>
    %109 = arith.mulf %107, %108 : vector<32x256xf32>
    %cst_88 = arith.constant dense<0.000000e+00> : vector<32xf32>
    %110 = vector.multi_reduction <add>, %109, %cst_88 [1] : vector<32x256xf32> to vector<32xf32>
    %111 = vector.shape_cast %110 : vector<32xf32> to vector<32x1xf32>
    %cst_89 = arith.constant 7.812500e-03 : f32
    %112 = vector.broadcast %cst_89 : f32 to vector<32x1xf32>
    %113 = arith.mulf %111, %112 : vector<32x1xf32>
    %114 = arith.mulf %109, %109 : vector<32x256xf32>
    %cst_90 = arith.constant dense<0.000000e+00> : vector<32xf32>
    %115 = vector.multi_reduction <add>, %114, %cst_90 [1] : vector<32x256xf32> to vector<32xf32>
    %116 = vector.shape_cast %115 : vector<32xf32> to vector<32x1xf32>
    %cst_91 = arith.constant 7.812500e-03 : f32
    %117 = vector.broadcast %cst_91 : f32 to vector<32x1xf32>
    %118 = arith.mulf %116, %117 : vector<32x1xf32>
    %119 = arith.mulf %113, %113 : vector<32x1xf32>
    %120 = arith.subf %118, %119 : vector<32x1xf32>
    %cst_92 = arith.constant 0.000000e+00 : f32
    %121 = vector.broadcast %cst_92 : f32 to vector<32x1xf32>
    %122 = arith.maximumf %120, %121 : vector<32x1xf32>
    %123 = vector.broadcast %113 : vector<32x1xf32> to vector<32x256xf32>
    %124 = arith.subf %107, %123 : vector<32x256xf32>
    %cst_93 = arith.constant 9.99999974E-6 : f32
    %125 = vector.broadcast %cst_93 : f32 to vector<32x1xf32>
    %126 = arith.addf %122, %125 : vector<32x1xf32>
    %127 = math.rsqrt %126 : vector<32x1xf32>
    %c0_94 = arith.constant 0 : index
    %c0_95 = arith.constant 0 : index
    %128 = vector.load %arg8[%c0_94, %c0_95] : memref<32x1xf32, #tpu.memory_space<vmem>>, vector<32x1xf32>
    %129 = arith.mulf %127, %128 : vector<32x1xf32>
    %130 = vector.broadcast %129 : vector<32x1xf32> to vector<32x256xf32>
    %131 = arith.mulf %124, %130 : vector<32x256xf32>
    %c0_96 = arith.constant 0 : index
    %c0_97 = arith.constant 0 : index
    %132 = vector.load %arg9[%c0_96, %c0_97] : memref<32x1xf32, #tpu.memory_space<vmem>>, vector<32x1xf32>
    %133 = vector.broadcast %132 : vector<32x1xf32> to vector<32x256xf32>
    %134 = arith.addf %131, %133 : vector<32x256xf32>
    %c0_98 = arith.constant 0 : index
    %c117_99 = arith.constant 117 : index
    %135 = vector.load %arg3[%c0_98, %c117_99] : memref<16x512xbf16, #tpu.memory_space<vmem>>, vector<16x256xbf16>
    %136 = arith.extf %135 : vector<16x256xbf16> to vector<16x256xf32>
    %137 = vector.extract_strided_slice %134 {offsets = [0, 0], sizes = [8, 256], strides = [1, 1]} : vector<32x256xf32> to vector<8x256xf32>
    %cst_100 = arith.constant 0.000000e+00 : f32
    %138 = vector.broadcast %cst_100 : f32 to vector<8x256xf32>
    %139 = arith.maximumf %137, %138 : vector<8x256xf32>
    %c0_101 = arith.constant 0 : index
    %c0_102 = arith.constant 0 : index
    %140 = vector.load %arg11[%c0_101, %c0_102] : memref<32x256xf32, #tpu.memory_space<vmem>>, vector<8x256xf32>
    tpu.vector_store %arg11[%c0_101, %c0_102], %139 {strides = array<i32>} : memref<32x256xf32, #tpu.memory_space<vmem>>, vector<8x256xf32>,
    %141 = vector.extract_strided_slice %134 {offsets = [24, 0], sizes = [8, 256], strides = [1, 1]} : vector<32x256xf32> to vector<8x256xf32>
    %cst_103 = arith.constant 0.000000e+00 : f32
    %142 = vector.broadcast %cst_103 : f32 to vector<8x256xf32>
    %143 = arith.maximumf %141, %142 : vector<8x256xf32>
    %c24 = arith.constant 24 : index
    %c0_104 = arith.constant 0 : index
    %144 = vector.load %arg11[%c24, %c0_104] : memref<32x256xf32, #tpu.memory_space<vmem>>, vector<8x256xf32>
    tpu.vector_store %arg11[%c24, %c0_104], %143 {strides = array<i32>} : memref<32x256xf32, #tpu.memory_space<vmem>>, vector<8x256xf32>,
    %145 = vector.extract_strided_slice %134 {offsets = [8, 0], sizes = [16, 256], strides = [1, 1]} : vector<32x256xf32> to vector<16x256xf32>
    %146 = arith.addf %145, %136 : vector<16x256xf32>
    %cst_105 = arith.constant 0.000000e+00 : f32
    %147 = vector.broadcast %cst_105 : f32 to vector<16x256xf32>
    %148 = arith.maximumf %146, %147 : vector<16x256xf32>
    %c8 = arith.constant 8 : index
    %c0_106 = arith.constant 0 : index
    %149 = vector.load %arg11[%c8, %c0_106] : memref<32x256xf32, #tpu.memory_space<vmem>>, vector<16x256xf32>
    tpu.vector_store %arg11[%c8, %c0_106], %148 {strides = array<i32>} : memref<32x256xf32, #tpu.memory_space<vmem>>, vector<16x256xf32>,
    return
  }
}

</mosaic_0001>

<llo_original>
// kernel: fwd.2
$region0: #{fwd.2}
  #allocation0 [shape = 'u32[]', space=smem, size = 0x4, offset = 0x4, fixed_abs, tag = 'smem constant byte address 0x4 - core index']
  #allocation1 [shape = 'u32[72,128]{1,0:T(1,128)}', space=vmem, size = 0x9000, scoped, tag = 'internal scratch']
  #allocation2 [shape = 'bf16[16,1024]{1,0:T(8,128)(2,1)}', space=vmem, size = 0x8000, scoped, tag = 'scratch operand']
  %s0 = inlined_call_operand.vmem [shape: bf16[16,1024], index: 0, kind: input, shape index: {}]
  %s1 = inlined_call_operand.vmem [shape: bf16[16,144], index: 1, kind: input, shape index: {}]
  %s2 = inlined_call_operand.vmem [shape: f32[16,1], index: 2, kind: input, shape index: {}]
  %s3 = inlined_call_operand.vmem [shape: f32[16,1], index: 3, kind: input, shape index: {}]
  %s4 = inlined_call_operand.vmem [shape: bf16[16,144], index: 4, kind: input, shape index: {}]
  %s5 = inlined_call_operand.vmem [shape: f32[16,1], index: 5, kind: input, shape index: {}]
  %s6 = inlined_call_operand.vmem [shape: f32[16,1], index: 6, kind: input, shape index: {}]
  %s7 = inlined_call_operand.vmem [shape: f32[1,768], index: 7, kind: input, shape index: {}]
  %s8 = inlined_call_operand.vmem [shape: f32[16,768], index: 8, kind: output, shape index: {}]
  %s9 = sld [smem:[#allocation0]]
  $region42: #{fwd.2} parent=0
    _
  %s11 = ssub.s32 1, %s9
  %s12 = scalar_select 0, %s11, %s9
  // Predicated region
  $region2: #{fwd.2} parent=0 // pred_check
    _
  $region3: #{fwd.2} parent=0 // pred_check_branch
    %14 = sbr.rel (0) target = $region5
  $region4: #{fwd.2} parent=0 // pred_region
    _
  $region5: #{fwd.2} parent=0 // pred_fallthru
    _
  // Predicated region
  $region6: #{fwd.2} parent=0 // pred_check
    _
  $region7: #{fwd.2} parent=0 // pred_check_branch
    %16 = sbr.rel (0) target = $region9
  $region8: #{fwd.2} parent=0 // pred_region
    _
  $region9: #{fwd.2} parent=0 // pred_fallthru
    _
  // Predicated region
  $region10: #{fwd.2} parent=0 // pred_check
    _
  $region11: #{fwd.2} parent=0 // pred_check_branch
    %18 = sbr.rel (0) target = $region13
  $region12: #{fwd.2} parent=0 // pred_region
    _
  $region13: #{fwd.2} parent=0 // pred_fallthru
    _
  // Predicated region
  $region14: #{fwd.2} parent=0 // pred_check
    _
  $region15: #{fwd.2} parent=0 // pred_check_branch
    %20 = sbr.rel (0) target = $region17
  $region16: #{fwd.2} parent=0 // pred_region
    _
  $region17: #{fwd.2} parent=0 // pred_fallthru
    _
  // Predicated region
  $region18: #{fwd.2} parent=0 // pred_check
    _
  $region19: #{fwd.2} parent=0 // pred_check_branch
    %22 = sbr.rel (0) target = $region21
  $region20: #{fwd.2} parent=0 // pred_region
    _
  $region21: #{fwd.2} parent=0 // pred_fallthru
    _
  // Predicated region
  $region22: #{fwd.2} parent=0 // pred_check
    _
  $region23: #{fwd.2} parent=0 // pred_check_branch
    %24 = sbr.rel (0) target = $region25
  $region24: #{fwd.2} parent=0 // pred_region
    _
  $region25: #{fwd.2} parent=0 // pred_fallthru
    _
  // Predicated region
  $region26: #{fwd.2} parent=0 // pred_check
    _
  $region27: #{fwd.2} parent=0 // pred_check_branch
    %26 = sbr.rel (0) target = $region29
  $region28: #{fwd.2} parent=0 // pred_region
    _
  $region29: #{fwd.2} parent=0 // pred_fallthru
    _
  // Predicated region
  $region30: #{fwd.2} parent=0 // pred_check
    _
  $region31: #{fwd.2} parent=0 // pred_check_branch
    %28 = sbr.rel (0) target = $region33
  $region32: #{fwd.2} parent=0 // pred_region
    _
  $region33: #{fwd.2} parent=0 // pred_fallthru
    _
  %v30 = vld [vmem:[%s7] sm:$0x3f]
  %v31 = vld [vmem:[%s1] sm:$0xf]
  %v32 = vld [vmem:[%s1 + $0x8] sm:$0xf]
  %v33 = vld [vmem:[%s0] sm:$0xff]
  %v34 = vld [vmem:[%s0 + $0x8] sm:$0xff]
  %v35 = vld [vmem:[%s0 + $0x10] sm:$0xff]
  %v36 = vld [vmem:[%s0 + $0x18] sm:$0xf]
  %v37 = vld [vmem:[%s0 + $0x20] sm:$0xff]
  %v38 = vld [vmem:[%s0 + $0x28] sm:$0xff]
  %v39 = vld [vmem:[%s0 + $0x30] sm:$0xff]
  %v40 = vld [vmem:[%s0 + $0x38] sm:$0xf]
  %v43 = vunpack.c.l.b16 %v31
  %v44 = vunpack.c.l.b16 %v32
  %v45 = vpack.c.b16 %v44, %v43
  %46 = vrot.lane.b32.xlu0 %v45, 112
  %v47 = vpop.permute.xlu0 %46
  %v56 = vunpack.c.l.b16 %v33
  %v57 = vunpack.c.h.b16 %v33
  %v58 = vunpack.c.l.b16 %v34
  %v59 = vunpack.c.h.b16 %v34
  %v60 = vunpack.c.l.b16 %v35
  %v61 = vunpack.c.h.b16 %v35
  %v62 = vunpack.c.l.b16 %v36
  %v63 = vunpack.c.l.b16 %v37
  %v64 = vunpack.c.h.b16 %v37
  %v65 = vunpack.c.l.b16 %v38
  %v66 = vunpack.c.h.b16 %v38
  %v67 = vunpack.c.l.b16 %v39
  %v68 = vunpack.c.h.b16 %v39
  %v69 = vunpack.c.l.b16 %v40
  %v70 = vpack.c.b16 %v63, %v56
  %v71 = vpack.c.b16 %v64, %v57
  %v72 = vpack.c.b16 %v65, %v58
  %v73 = vpack.c.b16 %v66, %v59
  %v74 = vpack.c.b16 %v67, %v60
  %v75 = vpack.c.b16 %v68, %v61
  %v76 = vpack.c.b16 %v69, %v62
  %77 = vrot.lane.b32.xlu0 %v70, 18
  %v78 = vpop.permute.xlu0 %77
  %79 = vrot.lane.b32.xlu0 %v71, 18
  %v80 = vpop.permute.xlu0 %79
  %81 = vrot.lane.b32.xlu0 %v72, 18
  %v82 = vpop.permute.xlu0 %81
  %83 = vrot.lane.b32.xlu0 %v73, 18
  %v84 = vpop.permute.xlu0 %83
  %85 = vrot.lane.b32.xlu0 %v74, 18
  %v86 = vpop.permute.xlu0 %85
  %87 = vrot.lane.b32.xlu0 %v75, 18
  %v88 = vpop.permute.xlu0 %87
  %89 = vrot.lane.b32.xlu0 %v76, 18
  %v90 = vpop.permute.xlu0 %89
  %vm91 = vcmask 146432
  %v92 = vsel %vm91, %v78, %v80
  %v93 = vsel %vm91, %v80, %v82
  %v94 = vsel %vm91, %v82, %v84
  %v95 = vsel %vm91, %v84, %v86
  %v96 = vsel %vm91, %v86, %v88
  %v97 = vsel %vm91, %v88, %v90
  %vm104 = vcmask 130048
  %v106 = vsel %vm104, %v47, 0
  %108 = vmatpush.bf16.msra.mxu0 0
  %109 = vmatpush.bf16.msra.mxu0 0
  %110 = vmatpush.bf16.msra.mxu0 0
  %111 = vmatpush.bf16.msra.mxu0 0
  %112 = vmatpush.bf16.msra.mxu0 0
  %113 = vmatpush.bf16.msra.mxu0 0
  %114 = vmatpush.bf16.msra.mxu0 0
  %115 = vmatpush.bf16.msra.mxu0 %v92
  %116 = vmatmul.bf16.gmra.mxu0 %v106
  %v117 = vpop.f32.mrf.mxu0
  %v118 = vadd.f32 0.0, %v117
  %v119 = vpop.f32.mrf.mxu0
  %v120 = vadd.f32 0.0, %v119
  %121 = vdwg.mxu0
  %122 = vmatpush.bf16.msra.mxu0 0
  %123 = vmatpush.bf16.msra.mxu0 0
  %124 = vmatpush.bf16.msra.mxu0 0
  %125 = vmatpush.bf16.msra.mxu0 0
  %126 = vmatpush.bf16.msra.mxu0 0
  %127 = vmatpush.bf16.msra.mxu0 0
  %128 = vmatpush.bf16.msra.mxu0 0
  %129 = vmatpush.bf16.msra.mxu0 %v93
  %130 = vmatmul.bf16.gmra.mxu0 %v106
  %v131 = vpop.f32.mrf.mxu0
  %v132 = vadd.f32 0.0, %v131
  %v133 = vpop.f32.mrf.mxu0
  %v134 = vadd.f32 0.0, %v133
  %135 = vdwg.mxu0
  %136 = vmatpush.bf16.msra.mxu0 0
  %137 = vmatpush.bf16.msra.mxu0 0
  %138 = vmatpush.bf16.msra.mxu0 0
  %139 = vmatpush.bf16.msra.mxu0 0
  %140 = vmatpush.bf16.msra.mxu0 0
  %141 = vmatpush.bf16.msra.mxu0 0
  %142 = vmatpush.bf16.msra.mxu0 0
  %143 = vmatpush.bf16.msra.mxu0 %v94
  %144 = vmatmul.bf16.gmra.mxu0 %v106
  %v145 = vpop.f32.mrf.mxu0
  %v146 = vadd.f32 0.0, %v145
  %v147 = vpop.f32.mrf.mxu0
  %v148 = vadd.f32 0.0, %v147
  %149 = vdwg.mxu0
  %150 = vmatpush.bf16.msra.mxu0 0
  %151 = vmatpush.bf16.msra.mxu0 0
  %152 = vmatpush.bf16.msra.mxu0 0
  %153 = vmatpush.bf16.msra.mxu0 0
  %154 = vmatpush.bf16.msra.mxu0 0
  %155 = vmatpush.bf16.msra.mxu0 0
  %156 = vmatpush.bf16.msra.mxu0 0
  %157 = vmatpush.bf16.msra.mxu0 %v95
  %158 = vmatmul.bf16.gmra.mxu0 %v106
  %v159 = vpop.f32.mrf.mxu0
  %v160 = vadd.f32 0.0, %v159
  %v161 = vpop.f32.mrf.mxu0
  %v162 = vadd.f32 0.0, %v161
  %163 = vdwg.mxu0
  %164 = vmatpush.bf16.msra.mxu0 0
  %165 = vmatpush.bf16.msra.mxu0 0
  %166 = vmatpush.bf16.msra.mxu0 0
  %167 = vmatpush.bf16.msra.mxu0 0
  %168 = vmatpush.bf16.msra.mxu0 0
  %169 = vmatpush.bf16.msra.mxu0 0
  %170 = vmatpush.bf16.msra.mxu0 0
  %171 = vmatpush.bf16.msra.mxu0 %v96
  %172 = vmatmul.bf16.gmra.mxu0 %v106
  %v173 = vpop.f32.mrf.mxu0
  %v174 = vadd.f32 0.0, %v173
  %v175 = vpop.f32.mrf.mxu0
  %v176 = vadd.f32 0.0, %v175
  %177 = vdwg.mxu0
  %178 = vmatpush.bf16.msra.mxu0 0
  %179 = vmatpush.bf16.msra.mxu0 0
  %180 = vmatpush.bf16.msra.mxu0 0
  %181 = vmatpush.bf16.msra.mxu0 0
  %182 = vmatpush.bf16.msra.mxu0 0
  %183 = vmatpush.bf16.msra.mxu0 0
  %184 = vmatpush.bf16.msra.mxu0 0
  %185 = vmatpush.bf16.msra.mxu0 %v97
  %186 = vmatmul.bf16.gmra.mxu0 %v106
  %v187 = vpop.f32.mrf.mxu0
  %v188 = vadd.f32 0.0, %v187
  %v189 = vpop.f32.mrf.mxu0
  %v190 = vadd.f32 0.0, %v189
  %191 = vdwg.mxu0
  %192 = vrot.lane.b32.xlu0 %v70, 19
  %v193 = vpop.permute.xlu0 %192
  %194 = vrot.lane.b32.xlu0 %v71, 19
  %v195 = vpop.permute.xlu0 %194
  %196 = vrot.lane.b32.xlu0 %v72, 19
  %v197 = vpop.permute.xlu0 %196
  %198 = vrot.lane.b32.xlu0 %v73, 19
  %v199 = vpop.permute.xlu0 %198
  %200 = vrot.lane.b32.xlu0 %v74, 19
  %v201 = vpop.permute.xlu0 %200
  %202 = vrot.lane.b32.xlu0 %v75, 19
  %v203 = vpop.permute.xlu0 %202
  %204 = vrot.lane.b32.xlu0 %v76, 19
  %v205 = vpop.permute.xlu0 %204
  %vm206 = vcmask 154624
  %v207 = vsel %vm206, %v193, %v195
  %v208 = vsel %vm206, %v195, %v197
  %v209 = vsel %vm206, %v197, %v199
  %v210 = vsel %vm206, %v199, %v201
  %v211 = vsel %vm206, %v201, %v203
  %v212 = vsel %vm206, %v203, %v205
  %v220 = vsel %vm104, %v45, 0
  %222 = vmatpush.bf16.msra.mxu0 0
  %223 = vmatpush.bf16.msra.mxu0 0
  %224 = vmatpush.bf16.msra.mxu0 0
  %225 = vmatpush.bf16.msra.mxu0 0
  %226 = vmatpush.bf16.msra.mxu0 0
  %227 = vmatpush.bf16.msra.mxu0 0
  %228 = vmatpush.bf16.msra.mxu0 0
  %229 = vmatpush.bf16.msra.mxu0 %v207
  %230 = vmatmul.bf16.gmra.mxu0 %v220
  %v231 = vpop.f32.mrf.mxu0
  %v232 = vadd.f32 %v118, %v231
  %v233 = vpop.f32.mrf.mxu0
  %v234 = vadd.f32 %v120, %v233
  %235 = vdwg.mxu0
  %236 = vmatpush.bf16.msra.mxu0 0
  %237 = vmatpush.bf16.msra.mxu0 0
  %238 = vmatpush.bf16.msra.mxu0 0
  %239 = vmatpush.bf16.msra.mxu0 0
  %240 = vmatpush.bf16.msra.mxu0 0
  %241 = vmatpush.bf16.msra.mxu0 0
  %242 = vmatpush.bf16.msra.mxu0 0
  %243 = vmatpush.bf16.msra.mxu0 %v208
  %244 = vmatmul.bf16.gmra.mxu0 %v220
  %v245 = vpop.f32.mrf.mxu0
  %v246 = vadd.f32 %v132, %v245
  %v247 = vpop.f32.mrf.mxu0
  %v248 = vadd.f32 %v134, %v247
  %249 = vdwg.mxu0
  %250 = vmatpush.bf16.msra.mxu0 0
  %251 = vmatpush.bf16.msra.mxu0 0
  %252 = vmatpush.bf16.msra.mxu0 0
  %253 = vmatpush.bf16.msra.mxu0 0
  %254 = vmatpush.bf16.msra.mxu0 0
  %255 = vmatpush.bf16.msra.mxu0 0
  %256 = vmatpush.bf16.msra.mxu0 0
  %257 = vmatpush.bf16.msra.mxu0 %v209
  %258 = vmatmul.bf16.gmra.mxu0 %v220
  %v259 = vpop.f32.mrf.mxu0
  %v260 = vadd.f32 %v146, %v259
  %v261 = vpop.f32.mrf.mxu0
  %v262 = vadd.f32 %v148, %v261
  %263 = vdwg.mxu0
  %264 = vmatpush.bf16.msra.mxu0 0
  %265 = vmatpush.bf16.msra.mxu0 0
  %266 = vmatpush.bf16.msra.mxu0 0
  %267 = vmatpush.bf16.msra.mxu0 0
  %268 = vmatpush.bf16.msra.mxu0 0
  %269 = vmatpush.bf16.msra.mxu0 0
  %270 = vmatpush.bf16.msra.mxu0 0
  %271 = vmatpush.bf16.msra.mxu0 %v210
  %272 = vmatmul.bf16.gmra.mxu0 %v220
  %v273 = vpop.f32.mrf.mxu0
  %v274 = vadd.f32 %v160, %v273
  %v275 = vpop.f32.mrf.mxu0
  %v276 = vadd.f32 %v162, %v275
  %277 = vdwg.mxu0
  %278 = vmatpush.bf16.msra.mxu0 0
  %279 = vmatpush.bf16.msra.mxu0 0
  %280 = vmatpush.bf16.msra.mxu0 0
  %281 = vmatpush.bf16.msra.mxu0 0
  %282 = vmatpush.bf16.msra.mxu0 0
  %283 = vmatpush.bf16.msra.mxu0 0
  %284 = vmatpush.bf16.msra.mxu0 0
  %285 = vmatpush.bf16.msra.mxu0 %v211
  %286 = vmatmul.bf16.gmra.mxu0 %v220
  %v287 = vpop.f32.mrf.mxu0
  %v288 = vadd.f32 %v174, %v287
  %v289 = vpop.f32.mrf.mxu0
  %v290 = vadd.f32 %v176, %v289
  %291 = vdwg.mxu0
  %292 = vmatpush.bf16.msra.mxu0 0
  %293 = vmatpush.bf16.msra.mxu0 0
  %294 = vmatpush.bf16.msra.mxu0 0
  %295 = vmatpush.bf16.msra.mxu0 0
  %296 = vmatpush.bf16.msra.mxu0 0
  %297 = vmatpush.bf16.msra.mxu0 0
  %298 = vmatpush.bf16.msra.mxu0 0
  %299 = vmatpush.bf16.msra.mxu0 %v212
  %300 = vmatmul.bf16.gmra.mxu0 %v220
  %v301 = vpop.f32.mrf.mxu0
  %v302 = vadd.f32 %v188, %v301
  %v303 = vpop.f32.mrf.mxu0
  %v304 = vadd.f32 %v190, %v303
  %305 = vdwg.mxu0
  %306 = vrot.lane.b32.xlu0 %v45, 96
  %v307 = vpop.permute.xlu0 %306
  %308 = vrot.lane.b32.xlu0 %v70, 17
  %v309 = vpop.permute.xlu0 %308
  %310 = vrot.lane.b32.xlu0 %v71, 17
  %v311 = vpop.permute.xlu0 %310
  %312 = vrot.lane.b32.xlu0 %v72, 17
  %v313 = vpop.permute.xlu0 %312
  %314 = vrot.lane.b32.xlu0 %v73, 17
  %v315 = vpop.permute.xlu0 %314
  %316 = vrot.lane.b32.xlu0 %v74, 17
  %v317 = vpop.permute.xlu0 %316
  %318 = vrot.lane.b32.xlu0 %v75, 17
  %v319 = vpop.permute.xlu0 %318
  %320 = vrot.lane.b32.xlu0 %v76, 17
  %v321 = vpop.permute.xlu0 %320
  %vm322 = vcmask 138240
  %v323 = vsel %vm322, %v309, %v311
  %v324 = vsel %vm322, %v311, %v313
  %v325 = vsel %vm322, %v313, %v315
  %v326 = vsel %vm322, %v315, %v317
  %v327 = vsel %vm322, %v317, %v319
  %v328 = vsel %vm322, %v319, %v321
  %v336 = vsel %vm104, %v307, 0
  %338 = vmatpush.bf16.msra.mxu0 0
  %339 = vmatpush.bf16.msra.mxu0 0
  %340 = vmatpush.bf16.msra.mxu0 0
  %341 = vmatpush.bf16.msra.mxu0 0
  %342 = vmatpush.bf16.msra.mxu0 0
  %343 = vmatpush.bf16.msra.mxu0 0
  %344 = vmatpush.bf16.msra.mxu0 0
  %345 = vmatpush.bf16.msra.mxu0 %v323
  %346 = vmatmul.bf16.gmra.mxu0 %v336
  %v347 = vpop.f32.mrf.mxu0
  %v348 = vadd.f32 0.0, %v347
  %v349 = vpop.f32.mrf.mxu0
  %v350 = vadd.f32 0.0, %v349
  %351 = vdwg.mxu0
  %352 = vmatpush.bf16.msra.mxu0 0
  %353 = vmatpush.bf16.msra.mxu0 0
  %354 = vmatpush.bf16.msra.mxu0 0
  %355 = vmatpush.bf16.msra.mxu0 0
  %356 = vmatpush.bf16.msra.mxu0 0
  %357 = vmatpush.bf16.msra.mxu0 0
  %358 = vmatpush.bf16.msra.mxu0 0
  %359 = vmatpush.bf16.msra.mxu0 %v324
  %360 = vmatmul.bf16.gmra.mxu0 %v336
  %v361 = vpop.f32.mrf.mxu0
  %v362 = vadd.f32 0.0, %v361
  %v363 = vpop.f32.mrf.mxu0
  %v364 = vadd.f32 0.0, %v363
  %365 = vdwg.mxu0
  %366 = vmatpush.bf16.msra.mxu0 0
  %367 = vmatpush.bf16.msra.mxu0 0
  %368 = vmatpush.bf16.msra.mxu0 0
  %369 = vmatpush.bf16.msra.mxu0 0
  %370 = vmatpush.bf16.msra.mxu0 0
  %371 = vmatpush.bf16.msra.mxu0 0
  %372 = vmatpush.bf16.msra.mxu0 0
  %373 = vmatpush.bf16.msra.mxu0 %v325
  %374 = vmatmul.bf16.gmra.mxu0 %v336
  %v375 = vpop.f32.mrf.mxu0
  %v376 = vadd.f32 0.0, %v375
  %v377 = vpop.f32.mrf.mxu0
  %v378 = vadd.f32 0.0, %v377
  %379 = vdwg.mxu0
  %380 = vmatpush.bf16.msra.mxu0 0
  %381 = vmatpush.bf16.msra.mxu0 0
  %382 = vmatpush.bf16.msra.mxu0 0
  %383 = vmatpush.bf16.msra.mxu0 0
  %384 = vmatpush.bf16.msra.mxu0 0
  %385 = vmatpush.bf16.msra.mxu0 0
  %386 = vmatpush.bf16.msra.mxu0 0
  %387 = vmatpush.bf16.msra.mxu0 %v326
  %388 = vmatmul.bf16.gmra.mxu0 %v336
  %v389 = vpop.f32.mrf.mxu0
  %v390 = vadd.f32 0.0, %v389
  %v391 = vpop.f32.mrf.mxu0
  %v392 = vadd.f32 0.0, %v391
  %393 = vdwg.mxu0
  %394 = vmatpush.bf16.msra.mxu0 0
  %395 = vmatpush.bf16.msra.mxu0 0
  %396 = vmatpush.bf16.msra.mxu0 0
  %397 = vmatpush.bf16.msra.mxu0 0
  %398 = vmatpush.bf16.msra.mxu0 0
  %399 = vmatpush.bf16.msra.mxu0 0
  %400 = vmatpush.bf16.msra.mxu0 0
  %401 = vmatpush.bf16.msra.mxu0 %v327
  %402 = vmatmul.bf16.gmra.mxu0 %v336
  %v403 = vpop.f32.mrf.mxu0
  %v404 = vadd.f32 0.0, %v403
  %v405 = vpop.f32.mrf.mxu0
  %v406 = vadd.f32 0.0, %v405
  %407 = vdwg.mxu0
  %408 = vmatpush.bf16.msra.mxu0 0
  %409 = vmatpush.bf16.msra.mxu0 0
  %410 = vmatpush.bf16.msra.mxu0 0
  %411 = vmatpush.bf16.msra.mxu0 0
  %412 = vmatpush.bf16.msra.mxu0 0
  %413 = vmatpush.bf16.msra.mxu0 0
  %414 = vmatpush.bf16.msra.mxu0 0
  %415 = vmatpush.bf16.msra.mxu0 %v328
  %416 = vmatmul.bf16.gmra.mxu0 %v336
  %v417 = vpop.f32.mrf.mxu0
  %v418 = vadd.f32 0.0, %v417
  %v419 = vpop.f32.mrf.mxu0
  %v420 = vadd.f32 0.0, %v419
  %421 = vdwg.mxu0
  %v422 = vadd.f32 %v232, %v348
  %v423 = vadd.f32 %v246, %v362
  %v424 = vadd.f32 %v260, %v376
  %v425 = vadd.f32 %v274, %v390
  %v426 = vadd.f32 %v288, %v404
  %v427 = vadd.f32 %v302, %v418
  %v428 = vadd.f32 %v234, %v350
  %v429 = vadd.f32 %v248, %v364
  %v430 = vadd.f32 %v262, %v378
  %v431 = vadd.f32 %v276, %v392
  %v432 = vadd.f32 %v290, %v406
  %v433 = vadd.f32 %v304, %v420
  %434 = vrot.lane.b32.xlu0 %v45, 80
  %v435 = vpop.permute.xlu0 %434
  %436 = vrot.lane.b32.xlu0 %v70, 1
  %v437 = vpop.permute.xlu0 %436
  %438 = vrot.lane.b32.xlu0 %v71, 1
  %v439 = vpop.permute.xlu0 %438
  %440 = vrot.lane.b32.xlu0 %v72, 1
  %v441 = vpop.permute.xlu0 %440
  %442 = vrot.lane.b32.xlu0 %v73, 1
  %v443 = vpop.permute.xlu0 %442
  %444 = vrot.lane.b32.xlu0 %v74, 1
  %v445 = vpop.permute.xlu0 %444
  %446 = vrot.lane.b32.xlu0 %v75, 1
  %v447 = vpop.permute.xlu0 %446
  %448 = vrot.lane.b32.xlu0 %v76, 1
  %v449 = vpop.permute.xlu0 %448
  %vm450 = vcmask 7168
  %v451 = vsel %vm450, %v437, %v439
  %v452 = vsel %vm450, %v439, %v441
  %v453 = vsel %vm450, %v441, %v443
  %v454 = vsel %vm450, %v443, %v445
  %v455 = vsel %vm450, %v445, %v447
  %v456 = vsel %vm450, %v447, %v449
  %v464 = vsel %vm104, %v435, 0
  %466 = vmatpush.bf16.msra.mxu0 0
  %467 = vmatpush.bf16.msra.mxu0 0
  %468 = vmatpush.bf16.msra.mxu0 0
  %469 = vmatpush.bf16.msra.mxu0 0
  %470 = vmatpush.bf16.msra.mxu0 0
  %471 = vmatpush.bf16.msra.mxu0 0
  %472 = vmatpush.bf16.msra.mxu0 0
  %473 = vmatpush.bf16.msra.mxu0 %v451
  %474 = vmatmul.bf16.gmra.mxu0 %v464
  %v475 = vpop.f32.mrf.mxu0
  %v476 = vadd.f32 0.0, %v475
  %v477 = vpop.f32.mrf.mxu0
  %v478 = vadd.f32 0.0, %v477
  %479 = vdwg.mxu0
  %480 = vmatpush.bf16.msra.mxu0 0
  %481 = vmatpush.bf16.msra.mxu0 0
  %482 = vmatpush.bf16.msra.mxu0 0
  %483 = vmatpush.bf16.msra.mxu0 0
  %484 = vmatpush.bf16.msra.mxu0 0
  %485 = vmatpush.bf16.msra.mxu0 0
  %486 = vmatpush.bf16.msra.mxu0 0
  %487 = vmatpush.bf16.msra.mxu0 %v452
  %488 = vmatmul.bf16.gmra.mxu0 %v464
  %v489 = vpop.f32.mrf.mxu0
  %v490 = vadd.f32 0.0, %v489
  %v491 = vpop.f32.mrf.mxu0
  %v492 = vadd.f32 0.0, %v491
  %493 = vdwg.mxu0
  %494 = vmatpush.bf16.msra.mxu0 0
  %495 = vmatpush.bf16.msra.mxu0 0
  %496 = vmatpush.bf16.msra.mxu0 0
  %497 = vmatpush.bf16.msra.mxu0 0
  %498 = vmatpush.bf16.msra.mxu0 0
  %499 = vmatpush.bf16.msra.mxu0 0
  %500 = vmatpush.bf16.msra.mxu0 0
  %501 = vmatpush.bf16.msra.mxu0 %v453
  %502 = vmatmul.bf16.gmra.mxu0 %v464
  %v503 = vpop.f32.mrf.mxu0
  %v504 = vadd.f32 0.0, %v503
  %v505 = vpop.f32.mrf.mxu0
  %v506 = vadd.f32 0.0, %v505
  %507 = vdwg.mxu0
  %508 = vmatpush.bf16.msra.mxu0 0
  %509 = vmatpush.bf16.msra.mxu0 0
  %510 = vmatpush.bf16.msra.mxu0 0
  %511 = vmatpush.bf16.msra.mxu0 0
  %512 = vmatpush.bf16.msra.mxu0 0
  %513 = vmatpush.bf16.msra.mxu0 0
  %514 = vmatpush.bf16.msra.mxu0 0
  %515 = vmatpush.bf16.msra.mxu0 %v454
  %516 = vmatmul.bf16.gmra.mxu0 %v464
  %v517 = vpop.f32.mrf.mxu0
  %v518 = vadd.f32 0.0, %v517
  %v519 = vpop.f32.mrf.mxu0
  %v520 = vadd.f32 0.0, %v519
  %521 = vdwg.mxu0
  %522 = vmatpush.bf16.msra.mxu0 0
  %523 = vmatpush.bf16.msra.mxu0 0
  %524 = vmatpush.bf16.msra.mxu0 0
  %525 = vmatpush.bf16.msra.mxu0 0
  %526 = vmatpush.bf16.msra.mxu0 0
  %527 = vmatpush.bf16.msra.mxu0 0
  %528 = vmatpush.bf16.msra.mxu0 0
  %529 = vmatpush.bf16.msra.mxu0 %v455
  %530 = vmatmul.bf16.gmra.mxu0 %v464
  %v531 = vpop.f32.mrf.mxu0
  %v532 = vadd.f32 0.0, %v531
  %v533 = vpop.f32.mrf.mxu0
  %v534 = vadd.f32 0.0, %v533
  %535 = vdwg.mxu0
  %536 = vmatpush.bf16.msra.mxu0 0
  %537 = vmatpush.bf16.msra.mxu0 0
  %538 = vmatpush.bf16.msra.mxu0 0
  %539 = vmatpush.bf16.msra.mxu0 0
  %540 = vmatpush.bf16.msra.mxu0 0
  %541 = vmatpush.bf16.msra.mxu0 0
  %542 = vmatpush.bf16.msra.mxu0 0
  %543 = vmatpush.bf16.msra.mxu0 %v456
  %544 = vmatmul.bf16.gmra.mxu0 %v464
  %v545 = vpop.f32.mrf.mxu0
  %v546 = vadd.f32 0.0, %v545
  %v547 = vpop.f32.mrf.mxu0
  %v548 = vadd.f32 0.0, %v547
  %549 = vdwg.mxu0
  %v550 = vadd.f32 %v422, %v476
  %v551 = vadd.f32 %v423, %v490
  %v552 = vadd.f32 %v424, %v504
  %v553 = vadd.f32 %v425, %v518
  %v554 = vadd.f32 %v426, %v532
  %v555 = vadd.f32 %v427, %v546
  %v556 = vadd.f32 %v428, %v478
  %v557 = vadd.f32 %v429, %v492
  %v558 = vadd.f32 %v430, %v506
  %v559 = vadd.f32 %v431, %v520
  %v560 = vadd.f32 %v432, %v534
  %v561 = vadd.f32 %v433, %v548
  %v562 = vld [vmem:[%s0 + $0x4] sm:$0xff]
  %v563 = vld [vmem:[%s0 + $0xc] sm:$0xff]
  %v564 = vld [vmem:[%s0 + $0x14] sm:$0xff]
  %v565 = vld [vmem:[%s0 + $0x24] sm:$0xff]
  %v566 = vld [vmem:[%s0 + $0x2c] sm:$0xff]
  %v567 = vld [vmem:[%s0 + $0x34] sm:$0xff]
  %568 = vrot.lane.b32.xlu0 %v45, 64
  %v569 = vpop.permute.xlu0 %568
  %v576 = vunpack.c.l.b16 %v562
  %v577 = vunpack.c.h.b16 %v562
  %v578 = vunpack.c.l.b16 %v563
  %v579 = vunpack.c.h.b16 %v563
  %v580 = vunpack.c.l.b16 %v564
  %v581 = vunpack.c.h.b16 %v564
  %v582 = vunpack.c.l.b16 %v565
  %v583 = vunpack.c.h.b16 %v565
  %v584 = vunpack.c.l.b16 %v566
  %v585 = vunpack.c.h.b16 %v566
  %v586 = vunpack.c.l.b16 %v567
  %v587 = vunpack.c.h.b16 %v567
  %v588 = vpack.c.b16 %v582, %v576
  %v589 = vpack.c.b16 %v583, %v577
  %v590 = vpack.c.b16 %v584, %v578
  %v591 = vpack.c.b16 %v585, %v579
  %v592 = vpack.c.b16 %v586, %v580
  %v593 = vpack.c.b16 %v587, %v581
  %v601 = vsel %vm104, %v569, 0
  %603 = vmatpush.bf16.msra.mxu0 0
  %604 = vmatpush.bf16.msra.mxu0 0
  %605 = vmatpush.bf16.msra.mxu0 0
  %606 = vmatpush.bf16.msra.mxu0 0
  %607 = vmatpush.bf16.msra.mxu0 0
  %608 = vmatpush.bf16.msra.mxu0 0
  %609 = vmatpush.bf16.msra.mxu0 0
  %610 = vmatpush.bf16.msra.mxu0 %v588
  %611 = vmatmul.bf16.gmra.mxu0 %v601
  %v612 = vpop.f32.mrf.mxu0
  %v613 = vadd.f32 0.0, %v612
  %v614 = vpop.f32.mrf.mxu0
  %v615 = vadd.f32 0.0, %v614
  %616 = vdwg.mxu0
  %617 = vmatpush.bf16.msra.mxu0 0
  %618 = vmatpush.bf16.msra.mxu0 0
  %619 = vmatpush.bf16.msra.mxu0 0
  %620 = vmatpush.bf16.msra.mxu0 0
  %621 = vmatpush.bf16.msra.mxu0 0
  %622 = vmatpush.bf16.msra.mxu0 0
  %623 = vmatpush.bf16.msra.mxu0 0
  %624 = vmatpush.bf16.msra.mxu0 %v589
  %625 = vmatmul.bf16.gmra.mxu0 %v601
  %v626 = vpop.f32.mrf.mxu0
  %v627 = vadd.f32 0.0, %v626
  %v628 = vpop.f32.mrf.mxu0
  %v629 = vadd.f32 0.0, %v628
  %630 = vdwg.mxu0
  %631 = vmatpush.bf16.msra.mxu0 0
  %632 = vmatpush.bf16.msra.mxu0 0
  %633 = vmatpush.bf16.msra.mxu0 0
  %634 = vmatpush.bf16.msra.mxu0 0
  %635 = vmatpush.bf16.msra.mxu0 0
  %636 = vmatpush.bf16.msra.mxu0 0
  %637 = vmatpush.bf16.msra.mxu0 0
  %638 = vmatpush.bf16.msra.mxu0 %v590
  %639 = vmatmul.bf16.gmra.mxu0 %v601
  %v640 = vpop.f32.mrf.mxu0
  %v641 = vadd.f32 0.0, %v640
  %v642 = vpop.f32.mrf.mxu0
  %v643 = vadd.f32 0.0, %v642
  %644 = vdwg.mxu0
  %645 = vmatpush.bf16.msra.mxu0 0
  %646 = vmatpush.bf16.msra.mxu0 0
  %647 = vmatpush.bf16.msra.mxu0 0
  %648 = vmatpush.bf16.msra.mxu0 0
  %649 = vmatpush.bf16.msra.mxu0 0
  %650 = vmatpush.bf16.msra.mxu0 0
  %651 = vmatpush.bf16.msra.mxu0 0
  %652 = vmatpush.bf16.msra.mxu0 %v591
  %653 = vmatmul.bf16.gmra.mxu0 %v601
  %v654 = vpop.f32.mrf.mxu0
  %v655 = vadd.f32 0.0, %v654
  %v656 = vpop.f32.mrf.mxu0
  %v657 = vadd.f32 0.0, %v656
  %658 = vdwg.mxu0
  %659 = vmatpush.bf16.msra.mxu0 0
  %660 = vmatpush.bf16.msra.mxu0 0
  %661 = vmatpush.bf16.msra.mxu0 0
  %662 = vmatpush.bf16.msra.mxu0 0
  %663 = vmatpush.bf16.msra.mxu0 0
  %664 = vmatpush.bf16.msra.mxu0 0
  %665 = vmatpush.bf16.msra.mxu0 0
  %666 = vmatpush.bf16.msra.mxu0 %v592
  %667 = vmatmul.bf16.gmra.mxu0 %v601
  %v668 = vpop.f32.mrf.mxu0
  %v669 = vadd.f32 0.0, %v668
  %v670 = vpop.f32.mrf.mxu0
  %v671 = vadd.f32 0.0, %v670
  %672 = vdwg.mxu0
  %673 = vmatpush.bf16.msra.mxu0 0
  %674 = vmatpush.bf16.msra.mxu0 0
  %675 = vmatpush.bf16.msra.mxu0 0
  %676 = vmatpush.bf16.msra.mxu0 0
  %677 = vmatpush.bf16.msra.mxu0 0
  %678 = vmatpush.bf16.msra.mxu0 0
  %679 = vmatpush.bf16.msra.mxu0 0
  %680 = vmatpush.bf16.msra.mxu0 %v593
  %681 = vmatmul.bf16.gmra.mxu0 %v601
  %v682 = vpop.f32.mrf.mxu0
  %v683 = vadd.f32 0.0, %v682
  %v684 = vpop.f32.mrf.mxu0
  %v685 = vadd.f32 0.0, %v684
  %686 = vdwg.mxu0
  %v687 = vadd.f32 %v550, %v613
  %v688 = vadd.f32 %v551, %v627
  %v689 = vadd.f32 %v552, %v641
  %v690 = vadd.f32 %v553, %v655
  %v691 = vadd.f32 %v554, %v669
  %v692 = vadd.f32 %v555, %v683
  %v693 = vadd.f32 %v556, %v615
  %v694 = vadd.f32 %v557, %v629
  %v695 = vadd.f32 %v558, %v643
  %v696 = vadd.f32 %v559, %v657
  %v697 = vadd.f32 %v560, %v671
  %v698 = vadd.f32 %v561, %v685
  %v699 = vld [vmem:[%s0 + $0x4] sm:$0xff]
  %v700 = vld [vmem:[%s0 + $0xc] sm:$0xff]
  %v701 = vld [vmem:[%s0 + $0x14] sm:$0xff]
  %v702 = vld [vmem:[%s0 + $0x1c] sm:$0xf]
  %v703 = vld [vmem:[%s0 + $0x24] sm:$0xff]
  %v704 = vld [vmem:[%s0 + $0x2c] sm:$0xff]
  %v705 = vld [vmem:[%s0 + $0x34] sm:$0xff]
  %v706 = vld [vmem:[%s0 + $0x3c] sm:$0xf]
  %707 = vrot.lane.b32.xlu0 %v45, 48
  %v708 = vpop.permute.xlu0 %707
  %v717 = vunpack.c.l.b16 %v699
  %v718 = vunpack.c.h.b16 %v699
  %v719 = vunpack.c.l.b16 %v700
  %v720 = vunpack.c.h.b16 %v700
  %v721 = vunpack.c.l.b16 %v701
  %v722 = vunpack.c.h.b16 %v701
  %v723 = vunpack.c.l.b16 %v702
  %v724 = vunpack.c.l.b16 %v703
  %v725 = vunpack.c.h.b16 %v703
  %v726 = vunpack.c.l.b16 %v704
  %v727 = vunpack.c.h.b16 %v704
  %v728 = vunpack.c.l.b16 %v705
  %v729 = vunpack.c.h.b16 %v705
  %v730 = vunpack.c.l.b16 %v706
  %v731 = vpack.c.b16 %v724, %v717
  %v732 = vpack.c.b16 %v725, %v718
  %v733 = vpack.c.b16 %v726, %v719
  %v734 = vpack.c.b16 %v727, %v720
  %v735 = vpack.c.b16 %v728, %v721
  %v736 = vpack.c.b16 %v729, %v722
  %v737 = vpack.c.b16 %v730, %v723
  %738 = vrot.lane.b32.xlu0 %v731, 127
  %v739 = vpop.permute.xlu0 %738
  %740 = vrot.lane.b32.xlu0 %v732, 127
  %v741 = vpop.permute.xlu0 %740
  %742 = vrot.lane.b32.xlu0 %v733, 127
  %v743 = vpop.permute.xlu0 %742
  %744 = vrot.lane.b32.xlu0 %v734, 127
  %v745 = vpop.permute.xlu0 %744
  %746 = vrot.lane.b32.xlu0 %v735, 127
  %v747 = vpop.permute.xlu0 %746
  %748 = vrot.lane.b32.xlu0 %v736, 127
  %v749 = vpop.permute.xlu0 %748
  %750 = vrot.lane.b32.xlu0 %v737, 127
  %v751 = vpop.permute.xlu0 %750
  %vm752 = vcmask 1039360
  %v753 = vsel %vm752, %v739, %v741
  %v754 = vsel %vm752, %v741, %v743
  %v755 = vsel %vm752, %v743, %v745
  %v756 = vsel %vm752, %v745, %v747
  %v757 = vsel %vm752, %v747, %v749
  %v758 = vsel %vm752, %v749, %v751
  %v766 = vsel %vm104, %v708, 0
  %768 = vmatpush.bf16.msra.mxu0 0
  %769 = vmatpush.bf16.msra.mxu0 0
  %770 = vmatpush.bf16.msra.mxu0 0
  %771 = vmatpush.bf16.msra.mxu0 0
  %772 = vmatpush.bf16.msra.mxu0 0
  %773 = vmatpush.bf16.msra.mxu0 0
  %774 = vmatpush.bf16.msra.mxu0 0
  %775 = vmatpush.bf16.msra.mxu0 %v753
  %776 = vmatmul.bf16.gmra.mxu0 %v766
  %v777 = vpop.f32.mrf.mxu0
  %v778 = vadd.f32 0.0, %v777
  %v779 = vpop.f32.mrf.mxu0
  %v780 = vadd.f32 0.0, %v779
  %781 = vdwg.mxu0
  %782 = vmatpush.bf16.msra.mxu0 0
  %783 = vmatpush.bf16.msra.mxu0 0
  %784 = vmatpush.bf16.msra.mxu0 0
  %785 = vmatpush.bf16.msra.mxu0 0
  %786 = vmatpush.bf16.msra.mxu0 0
  %787 = vmatpush.bf16.msra.mxu0 0
  %788 = vmatpush.bf16.msra.mxu0 0
  %789 = vmatpush.bf16.msra.mxu0 %v754
  %790 = vmatmul.bf16.gmra.mxu0 %v766
  %v791 = vpop.f32.mrf.mxu0
  %v792 = vadd.f32 0.0, %v791
  %v793 = vpop.f32.mrf.mxu0
  %v794 = vadd.f32 0.0, %v793
  %795 = vdwg.mxu0
  %796 = vmatpush.bf16.msra.mxu0 0
  %797 = vmatpush.bf16.msra.mxu0 0
  %798 = vmatpush.bf16.msra.mxu0 0
  %799 = vmatpush.bf16.msra.mxu0 0
  %800 = vmatpush.bf16.msra.mxu0 0
  %801 = vmatpush.bf16.msra.mxu0 0
  %802 = vmatpush.bf16.msra.mxu0 0
  %803 = vmatpush.bf16.msra.mxu0 %v755
  %804 = vmatmul.bf16.gmra.mxu0 %v766
  %v805 = vpop.f32.mrf.mxu0
  %v806 = vadd.f32 0.0, %v805
  %v807 = vpop.f32.mrf.mxu0
  %v808 = vadd.f32 0.0, %v807
  %809 = vdwg.mxu0
  %810 = vmatpush.bf16.msra.mxu0 0
  %811 = vmatpush.bf16.msra.mxu0 0
  %812 = vmatpush.bf16.msra.mxu0 0
  %813 = vmatpush.bf16.msra.mxu0 0
  %814 = vmatpush.bf16.msra.mxu0 0
  %815 = vmatpush.bf16.msra.mxu0 0
  %816 = vmatpush.bf16.msra.mxu0 0
  %817 = vmatpush.bf16.msra.mxu0 %v756
  %818 = vmatmul.bf16.gmra.mxu0 %v766
  %v819 = vpop.f32.mrf.mxu0
  %v820 = vadd.f32 0.0, %v819
  %v821 = vpop.f32.mrf.mxu0
  %v822 = vadd.f32 0.0, %v821
  %823 = vdwg.mxu0
  %824 = vmatpush.bf16.msra.mxu0 0
  %825 = vmatpush.bf16.msra.mxu0 0
  %826 = vmatpush.bf16.msra.mxu0 0
  %827 = vmatpush.bf16.msra.mxu0 0
  %828 = vmatpush.bf16.msra.mxu0 0
  %829 = vmatpush.bf16.msra.mxu0 0
  %830 = vmatpush.bf16.msra.mxu0 0
  %831 = vmatpush.bf16.msra.mxu0 %v757
  %832 = vmatmul.bf16.gmra.mxu0 %v766
  %v833 = vpop.f32.mrf.mxu0
  %v834 = vadd.f32 0.0, %v833
  %v835 = vpop.f32.mrf.mxu0
  %v836 = vadd.f32 0.0, %v835
  %837 = vdwg.mxu0
  %838 = vmatpush.bf16.msra.mxu0 0
  %839 = vmatpush.bf16.msra.mxu0 0
  %840 = vmatpush.bf16.msra.mxu0 0
  %841 = vmatpush.bf16.msra.mxu0 0
  %842 = vmatpush.bf16.msra.mxu0 0
  %843 = vmatpush.bf16.msra.mxu0 0
  %844 = vmatpush.bf16.msra.mxu0 0
  %845 = vmatpush.bf16.msra.mxu0 %v758
  %846 = vmatmul.bf16.gmra.mxu0 %v766
  %v847 = vpop.f32.mrf.mxu0
  %v848 = vadd.f32 0.0, %v847
  %v849 = vpop.f32.mrf.mxu0
  %v850 = vadd.f32 0.0, %v849
  %851 = vdwg.mxu0
  %v852 = vadd.f32 %v687, %v778
  %v853 = vadd.f32 %v688, %v792
  %v854 = vadd.f32 %v689, %v806
  %v855 = vadd.f32 %v690, %v820
  %v856 = vadd.f32 %v691, %v834
  %v857 = vadd.f32 %v692, %v848
  %v858 = vadd.f32 %v693, %v780
  %v859 = vadd.f32 %v694, %v794
  %v860 = vadd.f32 %v695, %v808
  %v861 = vadd.f32 %v696, %v822
  %v862 = vadd.f32 %v697, %v836
  %v863 = vadd.f32 %v698, %v850
  %864 = vrot.lane.b32.xlu0 %v45, 32
  %v865 = vpop.permute.xlu0 %864
  %866 = vrot.lane.b32.xlu0 %v731, 111
  %v867 = vpop.permute.xlu0 %866
  %868 = vrot.lane.b32.xlu0 %v732, 111
  %v869 = vpop.permute.xlu0 %868
  %870 = vrot.lane.b32.xlu0 %v733, 111
  %v871 = vpop.permute.xlu0 %870
  %872 = vrot.lane.b32.xlu0 %v734, 111
  %v873 = vpop.permute.xlu0 %872
  %874 = vrot.lane.b32.xlu0 %v735, 111
  %v875 = vpop.permute.xlu0 %874
  %876 = vrot.lane.b32.xlu0 %v736, 111
  %v877 = vpop.permute.xlu0 %876
  %878 = vrot.lane.b32.xlu0 %v737, 111
  %v879 = vpop.permute.xlu0 %878
  %vm880 = vcmask 908288
  %v881 = vsel %vm880, %v867, %v869
  %v882 = vsel %vm880, %v869, %v871
  %v883 = vsel %vm880, %v871, %v873
  %v884 = vsel %vm880, %v873, %v875
  %v885 = vsel %vm880, %v875, %v877
  %v886 = vsel %vm880, %v877, %v879
  %v894 = vsel %vm104, %v865, 0
  %896 = vmatpush.bf16.msra.mxu0 0
  %897 = vmatpush.bf16.msra.mxu0 0
  %898 = vmatpush.bf16.msra.mxu0 0
  %899 = vmatpush.bf16.msra.mxu0 0
  %900 = vmatpush.bf16.msra.mxu0 0
  %901 = vmatpush.bf16.msra.mxu0 0
  %902 = vmatpush.bf16.msra.mxu0 0
  %903 = vmatpush.bf16.msra.mxu0 %v881
  %904 = vmatmul.bf16.gmra.mxu0 %v894
  %v905 = vpop.f32.mrf.mxu0
  %v906 = vadd.f32 0.0, %v905
  %v907 = vpop.f32.mrf.mxu0
  %v908 = vadd.f32 0.0, %v907
  %909 = vdwg.mxu0
  %910 = vmatpush.bf16.msra.mxu0 0
  %911 = vmatpush.bf16.msra.mxu0 0
  %912 = vmatpush.bf16.msra.mxu0 0
  %913 = vmatpush.bf16.msra.mxu0 0
  %914 = vmatpush.bf16.msra.mxu0 0
  %915 = vmatpush.bf16.msra.mxu0 0
  %916 = vmatpush.bf16.msra.mxu0 0
  %917 = vmatpush.bf16.msra.mxu0 %v882
  %918 = vmatmul.bf16.gmra.mxu0 %v894
  %v919 = vpop.f32.mrf.mxu0
  %v920 = vadd.f32 0.0, %v919
  %v921 = vpop.f32.mrf.mxu0
  %v922 = vadd.f32 0.0, %v921
  %923 = vdwg.mxu0
  %924 = vmatpush.bf16.msra.mxu0 0
  %925 = vmatpush.bf16.msra.mxu0 0
  %926 = vmatpush.bf16.msra.mxu0 0
  %927 = vmatpush.bf16.msra.mxu0 0
  %928 = vmatpush.bf16.msra.mxu0 0
  %929 = vmatpush.bf16.msra.mxu0 0
  %930 = vmatpush.bf16.msra.mxu0 0
  %931 = vmatpush.bf16.msra.mxu0 %v883
  %932 = vmatmul.bf16.gmra.mxu0 %v894
  %v933 = vpop.f32.mrf.mxu0
  %v934 = vadd.f32 0.0, %v933
  %v935 = vpop.f32.mrf.mxu0
  %v936 = vadd.f32 0.0, %v935
  %937 = vdwg.mxu0
  %938 = vmatpush.bf16.msra.mxu0 0
  %939 = vmatpush.bf16.msra.mxu0 0
  %940 = vmatpush.bf16.msra.mxu0 0
  %941 = vmatpush.bf16.msra.mxu0 0
  %942 = vmatpush.bf16.msra.mxu0 0
  %943 = vmatpush.bf16.msra.mxu0 0
  %944 = vmatpush.bf16.msra.mxu0 0
  %945 = vmatpush.bf16.msra.mxu0 %v884
  %946 = vmatmul.bf16.gmra.mxu0 %v894
  %v947 = vpop.f32.mrf.mxu0
  %v948 = vadd.f32 0.0, %v947
  %v949 = vpop.f32.mrf.mxu0
  %v950 = vadd.f32 0.0, %v949
  %951 = vdwg.mxu0
  %952 = vmatpush.bf16.msra.mxu0 0
  %953 = vmatpush.bf16.msra.mxu0 0
  %954 = vmatpush.bf16.msra.mxu0 0
  %955 = vmatpush.bf16.msra.mxu0 0
  %956 = vmatpush.bf16.msra.mxu0 0
  %957 = vmatpush.bf16.msra.mxu0 0
  %958 = vmatpush.bf16.msra.mxu0 0
  %959 = vmatpush.bf16.msra.mxu0 %v885
  %960 = vmatmul.bf16.gmra.mxu0 %v894
  %v961 = vpop.f32.mrf.mxu0
  %v962 = vadd.f32 0.0, %v961
  %v963 = vpop.f32.mrf.mxu0
  %v964 = vadd.f32 0.0, %v963
  %965 = vdwg.mxu0
  %966 = vmatpush.bf16.msra.mxu0 0
  %967 = vmatpush.bf16.msra.mxu0 0
  %968 = vmatpush.bf16.msra.mxu0 0
  %969 = vmatpush.bf16.msra.mxu0 0
  %970 = vmatpush.bf16.msra.mxu0 0
  %971 = vmatpush.bf16.msra.mxu0 0
  %972 = vmatpush.bf16.msra.mxu0 0
  %973 = vmatpush.bf16.msra.mxu0 %v886
  %974 = vmatmul.bf16.gmra.mxu0 %v894
  %v975 = vpop.f32.mrf.mxu0
  %v976 = vadd.f32 0.0, %v975
  %v977 = vpop.f32.mrf.mxu0
  %v978 = vadd.f32 0.0, %v977
  %979 = vdwg.mxu0
  %v980 = vadd.f32 %v852, %v906
  %v981 = vadd.f32 %v853, %v920
  %v982 = vadd.f32 %v854, %v934
  %v983 = vadd.f32 %v855, %v948
  %v984 = vadd.f32 %v856, %v962
  %v985 = vadd.f32 %v857, %v976
  %v986 = vadd.f32 %v858, %v908
  %v987 = vadd.f32 %v859, %v922
  %v988 = vadd.f32 %v860, %v936
  %v989 = vadd.f32 %v861, %v950
  %v990 = vadd.f32 %v862, %v964
  %v991 = vadd.f32 %v863, %v978
  %992 = vrot.lane.b32.xlu0 %v45, 16
  %v993 = vpop.permute.xlu0 %992
  %994 = vrot.lane.b32.xlu0 %v731, 110
  %v995 = vpop.permute.xlu0 %994
  %996 = vrot.lane.b32.xlu0 %v732, 110
  %v997 = vpop.permute.xlu0 %996
  %998 = vrot.lane.b32.xlu0 %v733, 110
  %v999 = vpop.permute.xlu0 %998
  %1000 = vrot.lane.b32.xlu0 %v734, 110
  %v1001 = vpop.permute.xlu0 %1000
  %1002 = vrot.lane.b32.xlu0 %v735, 110
  %v1003 = vpop.permute.xlu0 %1002
  %1004 = vrot.lane.b32.xlu0 %v736, 110
  %v1005 = vpop.permute.xlu0 %1004
  %1006 = vrot.lane.b32.xlu0 %v737, 110
  %v1007 = vpop.permute.xlu0 %1006
  %vm1008 = vcmask 900096
  %v1009 = vsel %vm1008, %v995, %v997
  %v1010 = vsel %vm1008, %v997, %v999
  %v1011 = vsel %vm1008, %v999, %v1001
  %v1012 = vsel %vm1008, %v1001, %v1003
  %v1013 = vsel %vm1008, %v1003, %v1005
  %v1014 = vsel %vm1008, %v1005, %v1007
  %v1022 = vsel %vm104, %v993, 0
  %1024 = vmatpush.bf16.msra.mxu0 0
  %1025 = vmatpush.bf16.msra.mxu0 0
  %1026 = vmatpush.bf16.msra.mxu0 0
  %1027 = vmatpush.bf16.msra.mxu0 0
  %1028 = vmatpush.bf16.msra.mxu0 0
  %1029 = vmatpush.bf16.msra.mxu0 0
  %1030 = vmatpush.bf16.msra.mxu0 0
  %1031 = vmatpush.bf16.msra.mxu0 %v1009
  %1032 = vmatmul.bf16.gmra.mxu0 %v1022
  %v1033 = vpop.f32.mrf.mxu0
  %v1034 = vadd.f32 0.0, %v1033
  %v1035 = vpop.f32.mrf.mxu0
  %v1036 = vadd.f32 0.0, %v1035
  %1037 = vdwg.mxu0
  %1038 = vmatpush.bf16.msra.mxu0 0
  %1039 = vmatpush.bf16.msra.mxu0 0
  %1040 = vmatpush.bf16.msra.mxu0 0
  %1041 = vmatpush.bf16.msra.mxu0 0
  %1042 = vmatpush.bf16.msra.mxu0 0
  %1043 = vmatpush.bf16.msra.mxu0 0
  %1044 = vmatpush.bf16.msra.mxu0 0
  %1045 = vmatpush.bf16.msra.mxu0 %v1010
  %1046 = vmatmul.bf16.gmra.mxu0 %v1022
  %v1047 = vpop.f32.mrf.mxu0
  %v1048 = vadd.f32 0.0, %v1047
  %v1049 = vpop.f32.mrf.mxu0
  %v1050 = vadd.f32 0.0, %v1049
  %1051 = vdwg.mxu0
  %1052 = vmatpush.bf16.msra.mxu0 0
  %1053 = vmatpush.bf16.msra.mxu0 0
  %1054 = vmatpush.bf16.msra.mxu0 0
  %1055 = vmatpush.bf16.msra.mxu0 0
  %1056 = vmatpush.bf16.msra.mxu0 0
  %1057 = vmatpush.bf16.msra.mxu0 0
  %1058 = vmatpush.bf16.msra.mxu0 0
  %1059 = vmatpush.bf16.msra.mxu0 %v1011
  %1060 = vmatmul.bf16.gmra.mxu0 %v1022
  %v1061 = vpop.f32.mrf.mxu0
  %v1062 = vadd.f32 0.0, %v1061
  %v1063 = vpop.f32.mrf.mxu0
  %v1064 = vadd.f32 0.0, %v1063
  %1065 = vdwg.mxu0
  %1066 = vmatpush.bf16.msra.mxu0 0
  %1067 = vmatpush.bf16.msra.mxu0 0
  %1068 = vmatpush.bf16.msra.mxu0 0
  %1069 = vmatpush.bf16.msra.mxu0 0
  %1070 = vmatpush.bf16.msra.mxu0 0
  %1071 = vmatpush.bf16.msra.mxu0 0
  %1072 = vmatpush.bf16.msra.mxu0 0
  %1073 = vmatpush.bf16.msra.mxu0 %v1012
  %1074 = vmatmul.bf16.gmra.mxu0 %v1022
  %v1075 = vpop.f32.mrf.mxu0
  %v1076 = vadd.f32 0.0, %v1075
  %v1077 = vpop.f32.mrf.mxu0
  %v1078 = vadd.f32 0.0, %v1077
  %1079 = vdwg.mxu0
  %1080 = vmatpush.bf16.msra.mxu0 0
  %1081 = vmatpush.bf16.msra.mxu0 0
  %1082 = vmatpush.bf16.msra.mxu0 0
  %1083 = vmatpush.bf16.msra.mxu0 0
  %1084 = vmatpush.bf16.msra.mxu0 0
  %1085 = vmatpush.bf16.msra.mxu0 0
  %1086 = vmatpush.bf16.msra.mxu0 0
  %1087 = vmatpush.bf16.msra.mxu0 %v1013
  %1088 = vmatmul.bf16.gmra.mxu0 %v1022
  %v1089 = vpop.f32.mrf.mxu0
  %v1090 = vadd.f32 0.0, %v1089
  %v1091 = vpop.f32.mrf.mxu0
  %v1092 = vadd.f32 0.0, %v1091
  %1093 = vdwg.mxu0
  %1094 = vmatpush.bf16.msra.mxu0 0
  %1095 = vmatpush.bf16.msra.mxu0 0
  %1096 = vmatpush.bf16.msra.mxu0 0
  %1097 = vmatpush.bf16.msra.mxu0 0
  %1098 = vmatpush.bf16.msra.mxu0 0
  %1099 = vmatpush.bf16.msra.mxu0 0
  %1100 = vmatpush.bf16.msra.mxu0 0
  %1101 = vmatpush.bf16.msra.mxu0 %v1014
  %1102 = vmatmul.bf16.gmra.mxu0 %v1022
  %v1103 = vpop.f32.mrf.mxu0
  %v1104 = vadd.f32 0.0, %v1103
  %v1105 = vpop.f32.mrf.mxu0
  %v1106 = vadd.f32 0.0, %v1105
  %1107 = vdwg.mxu0
  %v1108 = vadd.f32 %v980, %v1034
  %v1109 = vadd.f32 %v981, %v1048
  %v1110 = vadd.f32 %v982, %v1062
  %v1111 = vadd.f32 %v983, %v1076
  %v1112 = vadd.f32 %v984, %v1090
  %v1113 = vadd.f32 %v985, %v1104
  %v1114 = vadd.f32 %v986, %v1036
  %v1115 = vadd.f32 %v987, %v1050
  %v1116 = vadd.f32 %v988, %v1064
  %v1117 = vadd.f32 %v989, %v1078
  %v1118 = vadd.f32 %v990, %v1092
  %v1119 = vadd.f32 %v991, %v1106
  %v1120 = vld [vmem:[%s1 + $0x4] sm:$0xf]
  %v1121 = vld [vmem:[%s1 + $0xc] sm:$0xf]
  %v1124 = vunpack.c.l.b16 %v1120
  %v1125 = vunpack.c.l.b16 %v1121
  %v1126 = vpack.c.b16 %v1125, %v1124
  %1127 = vrot.lane.b32.xlu0 %v731, 109
  %v1128 = vpop.permute.xlu0 %1127
  %1129 = vrot.lane.b32.xlu0 %v732, 109
  %v1130 = vpop.permute.xlu0 %1129
  %1131 = vrot.lane.b32.xlu0 %v733, 109
  %v1132 = vpop.permute.xlu0 %1131
  %1133 = vrot.lane.b32.xlu0 %v734, 109
  %v1134 = vpop.permute.xlu0 %1133
  %1135 = vrot.lane.b32.xlu0 %v735, 109
  %v1136 = vpop.permute.xlu0 %1135
  %1137 = vrot.lane.b32.xlu0 %v736, 109
  %v1138 = vpop.permute.xlu0 %1137
  %1139 = vrot.lane.b32.xlu0 %v737, 109
  %v1140 = vpop.permute.xlu0 %1139
  %vm1141 = vcmask 891904
  %v1142 = vsel %vm1141, %v1128, %v1130
  %v1143 = vsel %vm1141, %v1130, %v1132
  %v1144 = vsel %vm1141, %v1132, %v1134
  %v1145 = vsel %vm1141, %v1134, %v1136
  %v1146 = vsel %vm1141, %v1136, %v1138
  %v1147 = vsel %vm1141, %v1138, %v1140
  %v1155 = vsel %vm104, %v1126, 0
  %1157 = vmatpush.bf16.msra.mxu0 0
  %1158 = vmatpush.bf16.msra.mxu0 0
  %1159 = vmatpush.bf16.msra.mxu0 0
  %1160 = vmatpush.bf16.msra.mxu0 0
  %1161 = vmatpush.bf16.msra.mxu0 0
  %1162 = vmatpush.bf16.msra.mxu0 0
  %1163 = vmatpush.bf16.msra.mxu0 0
  %1164 = vmatpush.bf16.msra.mxu0 %v1142
  %1165 = vmatmul.bf16.gmra.mxu0 %v1155
  %v1166 = vpop.f32.mrf.mxu0
  %v1167 = vadd.f32 0.0, %v1166
  %v1168 = vpop.f32.mrf.mxu0
  %v1169 = vadd.f32 0.0, %v1168
  %1170 = vdwg.mxu0
  %1171 = vmatpush.bf16.msra.mxu0 0
  %1172 = vmatpush.bf16.msra.mxu0 0
  %1173 = vmatpush.bf16.msra.mxu0 0
  %1174 = vmatpush.bf16.msra.mxu0 0
  %1175 = vmatpush.bf16.msra.mxu0 0
  %1176 = vmatpush.bf16.msra.mxu0 0
  %1177 = vmatpush.bf16.msra.mxu0 0
  %1178 = vmatpush.bf16.msra.mxu0 %v1143
  %1179 = vmatmul.bf16.gmra.mxu0 %v1155
  %v1180 = vpop.f32.mrf.mxu0
  %v1181 = vadd.f32 0.0, %v1180
  %v1182 = vpop.f32.mrf.mxu0
  %v1183 = vadd.f32 0.0, %v1182
  %1184 = vdwg.mxu0
  %1185 = vmatpush.bf16.msra.mxu0 0
  %1186 = vmatpush.bf16.msra.mxu0 0
  %1187 = vmatpush.bf16.msra.mxu0 0
  %1188 = vmatpush.bf16.msra.mxu0 0
  %1189 = vmatpush.bf16.msra.mxu0 0
  %1190 = vmatpush.bf16.msra.mxu0 0
  %1191 = vmatpush.bf16.msra.mxu0 0
  %1192 = vmatpush.bf16.msra.mxu0 %v1144
  %1193 = vmatmul.bf16.gmra.mxu0 %v1155
  %v1194 = vpop.f32.mrf.mxu0
  %v1195 = vadd.f32 0.0, %v1194
  %v1196 = vpop.f32.mrf.mxu0
  %v1197 = vadd.f32 0.0, %v1196
  %1198 = vdwg.mxu0
  %1199 = vmatpush.bf16.msra.mxu0 0
  %1200 = vmatpush.bf16.msra.mxu0 0
  %1201 = vmatpush.bf16.msra.mxu0 0
  %1202 = vmatpush.bf16.msra.mxu0 0
  %1203 = vmatpush.bf16.msra.mxu0 0
  %1204 = vmatpush.bf16.msra.mxu0 0
  %1205 = vmatpush.bf16.msra.mxu0 0
  %1206 = vmatpush.bf16.msra.mxu0 %v1145
  %1207 = vmatmul.bf16.gmra.mxu0 %v1155
  %v1208 = vpop.f32.mrf.mxu0
  %v1209 = vadd.f32 0.0, %v1208
  %v1210 = vpop.f32.mrf.mxu0
  %v1211 = vadd.f32 0.0, %v1210
  %1212 = vdwg.mxu0
  %1213 = vmatpush.bf16.msra.mxu0 0
  %1214 = vmatpush.bf16.msra.mxu0 0
  %1215 = vmatpush.bf16.msra.mxu0 0
  %1216 = vmatpush.bf16.msra.mxu0 0
  %1217 = vmatpush.bf16.msra.mxu0 0
  %1218 = vmatpush.bf16.msra.mxu0 0
  %1219 = vmatpush.bf16.msra.mxu0 0
  %1220 = vmatpush.bf16.msra.mxu0 %v1146
  %1221 = vmatmul.bf16.gmra.mxu0 %v1155
  %v1222 = vpop.f32.mrf.mxu0
  %v1223 = vadd.f32 0.0, %v1222
  %v1224 = vpop.f32.mrf.mxu0
  %v1225 = vadd.f32 0.0, %v1224
  %1226 = vdwg.mxu0
  %1227 = vmatpush.bf16.msra.mxu0 0
  %1228 = vmatpush.bf16.msra.mxu0 0
  %1229 = vmatpush.bf16.msra.mxu0 0
  %1230 = vmatpush.bf16.msra.mxu0 0
  %1231 = vmatpush.bf16.msra.mxu0 0
  %1232 = vmatpush.bf16.msra.mxu0 0
  %1233 = vmatpush.bf16.msra.mxu0 0
  %1234 = vmatpush.bf16.msra.mxu0 %v1147
  %1235 = vmatmul.bf16.gmra.mxu0 %v1155
  %v1236 = vpop.f32.mrf.mxu0
  %v1237 = vadd.f32 0.0, %v1236
  %v1238 = vpop.f32.mrf.mxu0
  %v1239 = vadd.f32 0.0, %v1238
  %1240 = vdwg.mxu0
  %v1241 = vadd.f32 %v1108, %v1167
  %v1242 = vadd.f32 %v1109, %v1181
  %v1243 = vadd.f32 %v1110, %v1195
  %v1244 = vadd.f32 %v1111, %v1209
  %v1245 = vadd.f32 %v1112, %v1223
  %v1246 = vadd.f32 %v1113, %v1237
  %v1247 = vadd.f32 %v1114, %v1169
  %v1248 = vadd.f32 %v1115, %v1183
  %v1249 = vadd.f32 %v1116, %v1197
  %v1250 = vadd.f32 %v1117, %v1211
  %v1251 = vadd.f32 %v1118, %v1225
  %v1252 = vadd.f32 %v1119, %v1239
  %v1254 = vperm.slane %v30, 0
  %v1255 = vperm.slane %v30, 1
  %v1256 = vperm.slane %v30, 2
  %v1257 = vperm.slane %v30, 3
  %v1258 = vperm.slane %v30, 4
  %v1259 = vperm.slane %v30, 5
  %v1266 = vmul.f32 %v1241, %v1254
  %v1267 = vmul.f32 %v1242, %v1255
  %v1268 = vmul.f32 %v1243, %v1256
  %v1269 = vmul.f32 %v1244, %v1257
  %v1270 = vmul.f32 %v1245, %v1258
  %v1271 = vmul.f32 %v1246, %v1259
  %v1272 = vmul.f32 %v1247, %v1254
  %v1273 = vmul.f32 %v1248, %v1255
  %v1274 = vmul.f32 %v1249, %v1256
  %v1275 = vmul.f32 %v1250, %v1257
  %v1276 = vmul.f32 %v1251, %v1258
  %v1277 = vmul.f32 %v1252, %v1259
  %v1278 = vadd.f32 %v1266, %v1267
  %v1279 = vadd.f32 %v1278, %v1268
  %v1280 = vadd.f32 %v1279, %v1269
  %v1281 = vadd.f32 %v1280, %v1270
  %v1282 = vadd.f32 %v1281, %v1271
  %1283 = vadd.xlane.f32.xlu0 %v1282
  %v1284 = vpop.xlane.xlu0 %1283
  %v1285 = vadd.f32 %v1272, %v1273
  %v1286 = vadd.f32 %v1285, %v1274
  %v1287 = vadd.f32 %v1286, %v1275
  %v1288 = vadd.f32 %v1287, %v1276
  %v1289 = vadd.f32 %v1288, %v1277
  %1290 = vadd.xlane.f32.xlu0 %v1289
  %v1291 = vpop.xlane.xlu0 %1290
  %v1292 = vmul.f32 %v1284, 0.001953125
  %v1293 = vmul.f32 %v1291, 0.001953125
  %v1294 = vmul.f32 %v1266, %v1266
  %v1295 = vmul.f32 %v1267, %v1267
  %v1296 = vmul.f32 %v1268, %v1268
  %v1297 = vmul.f32 %v1269, %v1269
  %v1298 = vmul.f32 %v1270, %v1270
  %v1299 = vmul.f32 %v1271, %v1271
  %v1300 = vmul.f32 %v1272, %v1272
  %v1301 = vmul.f32 %v1273, %v1273
  %v1302 = vmul.f32 %v1274, %v1274
  %v1303 = vmul.f32 %v1275, %v1275
  %v1304 = vmul.f32 %v1276, %v1276
  %v1305 = vmul.f32 %v1277, %v1277
  %v1306 = vadd.f32 %v1294, %v1295
  %v1307 = vadd.f32 %v1306, %v1296
  %v1308 = vadd.f32 %v1307, %v1297
  %v1309 = vadd.f32 %v1308, %v1298
  %v1310 = vadd.f32 %v1309, %v1299
  %1311 = vadd.xlane.f32.xlu0 %v1310
  %v1312 = vpop.xlane.xlu0 %1311
  %v1313 = vadd.f32 %v1300, %v1301
  %v1314 = vadd.f32 %v1313, %v1302
  %v1315 = vadd.f32 %v1314, %v1303
  %v1316 = vadd.f32 %v1315, %v1304
  %v1317 = vadd.f32 %v1316, %v1305
  %1318 = vadd.xlane.f32.xlu0 %v1317
  %v1319 = vpop.xlane.xlu0 %1318
  %v1320 = vmul.f32 %v1312, 0.001953125
  %v1321 = vmul.f32 %v1319, 0.001953125
  %v1322 = vmul.f32 %v1292, %v1292
  %v1323 = vmul.f32 %v1293, %v1293
  %v1324 = vsub.f32 %v1320, %v1322
  %v1325 = vsub.f32 %v1321, %v1323
  %v1326 = vmax.f32 %v1324, 0.0
  %v1327 = vmax.f32 %v1325, 0.0
  %v1328 = vsub.f32 %v1241, %v1292
  %v1329 = vsub.f32 %v1242, %v1292
  %v1330 = vsub.f32 %v1243, %v1292
  %v1331 = vsub.f32 %v1244, %v1292
  %v1332 = vsub.f32 %v1245, %v1292
  %v1333 = vsub.f32 %v1246, %v1292
  %v1334 = vsub.f32 %v1247, %v1293
  %v1335 = vsub.f32 %v1248, %v1293
  %v1336 = vsub.f32 %v1249, %v1293
  %v1337 = vsub.f32 %v1250, %v1293
  %v1338 = vsub.f32 %v1251, %v1293
  %v1339 = vsub.f32 %v1252, %v1293
  %v1340 = vadd.f32 %v1326, 1e-05
  %v1341 = vadd.f32 %v1327, 1e-05
  %v1342 = vrsqrt.pop %v1340
  %v1343 = vmul.f32 %v1342, %v1340
  %v1344 = vmul.f32 %v1343, %v1342
  %v1345 = vmul.f32 0.5, %v1344
  %v1346 = vsub.f32 1.5, %v1345
  %v1347 = vmul.f32 %v1342, %v1346
  %vm1348 = vweird.f32 %v1340
  %vm1349 = vweird.f32 %v1342
  %vm1350 = vmor %vm1348, %vm1349
  %v1351 = vsel %vm1350, %v1342, %v1347
  %v1352 = vrsqrt.pop %v1341
  %v1353 = vmul.f32 %v1352, %v1341
  %v1354 = vmul.f32 %v1353, %v1352
  %v1355 = vmul.f32 0.5, %v1354
  %v1356 = vsub.f32 1.5, %v1355
  %v1357 = vmul.f32 %v1352, %v1356
  %vm1358 = vweird.f32 %v1341
  %vm1359 = vweird.f32 %v1352
  %vm1360 = vmor %vm1358, %vm1359
  %v1361 = vsel %vm1360, %v1352, %v1357
  %v1362 = vld [vmem:[%s2] sm:$0xff]
  %v1363 = vld [vmem:[%s2 + $0x8] sm:$0xff]
  %v1364 = vmul.f32 %v1351, %v1362
  %v1365 = vmul.f32 %v1361, %v1363
  %1367 = vset.pattern.permute.xlu0 0
  %1368 = vperm.xlu0 %1367, %v1364
  %v1369 = vpop.permute.xlu0 %1368
  %1372 = vset.pattern.permute.xlu0 0
  %1373 = vperm.xlu0 %1372, %v1365
  %v1374 = vpop.permute.xlu0 %1373
  %v1376 = vmul.f32 %v1328, %v1369
  %v1377 = vmul.f32 %v1329, %v1369
  %v1378 = vmul.f32 %v1330, %v1369
  %v1379 = vmul.f32 %v1331, %v1369
  %v1380 = vmul.f32 %v1332, %v1369
  %v1381 = vmul.f32 %v1333, %v1369
  %v1382 = vmul.f32 %v1334, %v1374
  %v1383 = vmul.f32 %v1335, %v1374
  %v1384 = vmul.f32 %v1336, %v1374
  %v1385 = vmul.f32 %v1337, %v1374
  %v1386 = vmul.f32 %v1338, %v1374
  %v1387 = vmul.f32 %v1339, %v1374
  %v1388 = vld [vmem:[%s3] sm:$0xff]
  %v1389 = vld [vmem:[%s3 + $0x8] sm:$0xff]
  %1391 = vset.pattern.permute.xlu0 0
  %1392 = vperm.xlu0 %1391, %v1388
  %v1393 = vpop.permute.xlu0 %1392
  %1396 = vset.pattern.permute.xlu0 0
  %1397 = vperm.xlu0 %1396, %v1389
  %v1398 = vpop.permute.xlu0 %1397
  %v1400 = vadd.f32 %v1376, %v1393
  %v1401 = vadd.f32 %v1377, %v1393
  %v1402 = vadd.f32 %v1378, %v1393
  %v1403 = vadd.f32 %v1379, %v1393
  %v1404 = vadd.f32 %v1380, %v1393
  %v1405 = vadd.f32 %v1381, %v1393
  %v1406 = vadd.f32 %v1382, %v1398
  %v1407 = vadd.f32 %v1383, %v1398
  %v1408 = vadd.f32 %v1384, %v1398
  %v1409 = vadd.f32 %v1385, %v1398
  %v1410 = vadd.f32 %v1386, %v1398
  %v1411 = vadd.f32 %v1387, %v1398
  %v1412 = vmax.f32 %v1400, 0.0
  %v1413 = vmax.f32 %v1401, 0.0
  %v1414 = vmax.f32 %v1402, 0.0
  %v1415 = vmax.f32 %v1403, 0.0
  %v1416 = vmax.f32 %v1404, 0.0
  %v1417 = vmax.f32 %v1405, 0.0
  %v1418 = vmax.f32 %v1406, 0.0
  %v1419 = vmax.f32 %v1407, 0.0
  %v1420 = vmax.f32 %v1408, 0.0
  %v1421 = vmax.f32 %v1409, 0.0
  %v1422 = vmax.f32 %v1410, 0.0
  %v1423 = vmax.f32 %v1411, 0.0
  %v1424 = vmul.f32 %v1412, %v1254
  %v1425 = vmul.f32 %v1413, %v1255
  %v1426 = vmul.f32 %v1414, %v1256
  %v1427 = vmul.f32 %v1415, %v1257
  %v1428 = vmul.f32 %v1416, %v1258
  %v1429 = vmul.f32 %v1417, %v1259
  %v1430 = vmul.f32 %v1418, %v1254
  %v1431 = vmul.f32 %v1419, %v1255
  %v1432 = vmul.f32 %v1420, %v1256
  %v1433 = vmul.f32 %v1421, %v1257
  %v1434 = vmul.f32 %v1422, %v1258
  %v1435 = vmul.f32 %v1423, %v1259
  %1436 = vst [vmem:[#allocation2] sm:$0xf] 0
  %1437 = vst [vmem:[#allocation2 + $0x20] sm:$0xf] 0
  %1438 = vst [vmem:[#allocation2 + $0x1c] sm:$0xf] 0
  %1439 = vst [vmem:[#allocation2 + $0x3c] sm:$0xf] 0
  %v1440 = vpack.c.bf16 %v1425, %v1424
  %v1441 = vpack.c.bf16 %v1427, %v1426
  %v1442 = vpack.c.bf16 %v1429, %v1428
  %v1443 = vpack.c.bf16 %v1431, %v1430
  %v1444 = vpack.c.bf16 %v1433, %v1432
  %v1445 = vpack.c.bf16 %v1435, %v1434
  %1446 = vst [vmem:[#allocation2 + $0x4] sm:$0xff] %v1440
  %1447 = vst [vmem:[#allocation2 + $0xc] sm:$0xff] %v1441
  %1448 = vst [vmem:[#allocation2 + $0x14] sm:$0xff] %v1442
  %1449 = vst [vmem:[#allocation2 + $0x24] sm:$0xff] %v1443
  %1450 = vst [vmem:[#allocation2 + $0x2c] sm:$0xff] %v1444
  %1451 = vst [vmem:[#allocation2 + $0x34] sm:$0xff] %v1445
  %v1452 = vld [vmem:[%s4] sm:$0xf]
  %v1453 = vld [vmem:[%s4 + $0x8] sm:$0xf]
  %v1454 = vld [vmem:[#allocation2] sm:$0xff]
  %v1455 = vld [vmem:[#allocation2 + $0x8] sm:$0xff]
  %v1456 = vld [vmem:[#allocation2 + $0x10] sm:$0xff]
  %v1457 = vld [vmem:[#allocation2 + $0x18] sm:$0xf]
  %v1458 = vld [vmem:[#allocation2 + $0x20] sm:$0xff]
  %v1459 = vld [vmem:[#allocation2 + $0x28] sm:$0xff]
  %v1460 = vld [vmem:[#allocation2 + $0x30] sm:$0xff]
  %v1461 = vld [vmem:[#allocation2 + $0x38] sm:$0xf]
  %v1464 = vunpack.c.l.b16 %v1452
  %v1465 = vunpack.c.l.b16 %v1453
  %v1466 = vpack.c.b16 %v1465, %v1464
  %1467 = vrot.lane.b32.xlu0 %v1466, 112
  %v1468 = vpop.permute.xlu0 %1467
  %v1477 = vunpack.c.l.b16 %v1454
  %v1478 = vunpack.c.h.b16 %v1454
  %v1479 = vunpack.c.l.b16 %v1455
  %v1480 = vunpack.c.h.b16 %v1455
  %v1481 = vunpack.c.l.b16 %v1456
  %v1482 = vunpack.c.h.b16 %v1456
  %v1483 = vunpack.c.l.b16 %v1457
  %v1484 = vunpack.c.l.b16 %v1458
  %v1485 = vunpack.c.h.b16 %v1458
  %v1486 = vunpack.c.l.b16 %v1459
  %v1487 = vunpack.c.h.b16 %v1459
  %v1488 = vunpack.c.l.b16 %v1460
  %v1489 = vunpack.c.h.b16 %v1460
  %v1490 = vunpack.c.l.b16 %v1461
  %v1491 = vpack.c.b16 %v1484, %v1477
  %v1492 = vpack.c.b16 %v1485, %v1478
  %v1493 = vpack.c.b16 %v1486, %v1479
  %v1494 = vpack.c.b16 %v1487, %v1480
  %v1495 = vpack.c.b16 %v1488, %v1481
  %v1496 = vpack.c.b16 %v1489, %v1482
  %v1497 = vpack.c.b16 %v1490, %v1483
  %1498 = vrot.lane.b32.xlu0 %v1491, 18
  %v1499 = vpop.permute.xlu0 %1498
  %1500 = vrot.lane.b32.xlu0 %v1492, 18
  %v1501 = vpop.permute.xlu0 %1500
  %1502 = vrot.lane.b32.xlu0 %v1493, 18
  %v1503 = vpop.permute.xlu0 %1502
  %1504 = vrot.lane.b32.xlu0 %v1494, 18
  %v1505 = vpop.permute.xlu0 %1504
  %1506 = vrot.lane.b32.xlu0 %v1495, 18
  %v1507 = vpop.permute.xlu0 %1506
  %1508 = vrot.lane.b32.xlu0 %v1496, 18
  %v1509 = vpop.permute.xlu0 %1508
  %1510 = vrot.lane.b32.xlu0 %v1497, 18
  %v1511 = vpop.permute.xlu0 %1510
  %v1512 = vsel %vm91, %v1499, %v1501
  %v1513 = vsel %vm91, %v1501, %v1503
  %v1514 = vsel %vm91, %v1503, %v1505
  %v1515 = vsel %vm91, %v1505, %v1507
  %v1516 = vsel %vm91, %v1507, %v1509
  %v1517 = vsel %vm91, %v1509, %v1511
  %v1525 = vsel %vm104, %v1468, 0
  %1527 = vmatpush.bf16.msra.mxu0 0
  %1528 = vmatpush.bf16.msra.mxu0 0
  %1529 = vmatpush.bf16.msra.mxu0 0
  %1530 = vmatpush.bf16.msra.mxu0 0
  %1531 = vmatpush.bf16.msra.mxu0 0
  %1532 = vmatpush.bf16.msra.mxu0 0
  %1533 = vmatpush.bf16.msra.mxu0 0
  %1534 = vmatpush.bf16.msra.mxu0 %v1512
  %1535 = vmatmul.bf16.gmra.mxu0 %v1525
  %v1536 = vpop.f32.mrf.mxu0
  %v1537 = vadd.f32 0.0, %v1536
  %v1538 = vpop.f32.mrf.mxu0
  %v1539 = vadd.f32 0.0, %v1538
  %1540 = vdwg.mxu0
  %1541 = vmatpush.bf16.msra.mxu0 0
  %1542 = vmatpush.bf16.msra.mxu0 0
  %1543 = vmatpush.bf16.msra.mxu0 0
  %1544 = vmatpush.bf16.msra.mxu0 0
  %1545 = vmatpush.bf16.msra.mxu0 0
  %1546 = vmatpush.bf16.msra.mxu0 0
  %1547 = vmatpush.bf16.msra.mxu0 0
  %1548 = vmatpush.bf16.msra.mxu0 %v1513
  %1549 = vmatmul.bf16.gmra.mxu0 %v1525
  %v1550 = vpop.f32.mrf.mxu0
  %v1551 = vadd.f32 0.0, %v1550
  %v1552 = vpop.f32.mrf.mxu0
  %v1553 = vadd.f32 0.0, %v1552
  %1554 = vdwg.mxu0
  %1555 = vmatpush.bf16.msra.mxu0 0
  %1556 = vmatpush.bf16.msra.mxu0 0
  %1557 = vmatpush.bf16.msra.mxu0 0
  %1558 = vmatpush.bf16.msra.mxu0 0
  %1559 = vmatpush.bf16.msra.mxu0 0
  %1560 = vmatpush.bf16.msra.mxu0 0
  %1561 = vmatpush.bf16.msra.mxu0 0
  %1562 = vmatpush.bf16.msra.mxu0 %v1514
  %1563 = vmatmul.bf16.gmra.mxu0 %v1525
  %v1564 = vpop.f32.mrf.mxu0
  %v1565 = vadd.f32 0.0, %v1564
  %v1566 = vpop.f32.mrf.mxu0
  %v1567 = vadd.f32 0.0, %v1566
  %1568 = vdwg.mxu0
  %1569 = vmatpush.bf16.msra.mxu0 0
  %1570 = vmatpush.bf16.msra.mxu0 0
  %1571 = vmatpush.bf16.msra.mxu0 0
  %1572 = vmatpush.bf16.msra.mxu0 0
  %1573 = vmatpush.bf16.msra.mxu0 0
  %1574 = vmatpush.bf16.msra.mxu0 0
  %1575 = vmatpush.bf16.msra.mxu0 0
  %1576 = vmatpush.bf16.msra.mxu0 %v1515
  %1577 = vmatmul.bf16.gmra.mxu0 %v1525
  %v1578 = vpop.f32.mrf.mxu0
  %v1579 = vadd.f32 0.0, %v1578
  %v1580 = vpop.f32.mrf.mxu0
  %v1581 = vadd.f32 0.0, %v1580
  %1582 = vdwg.mxu0
  %1583 = vmatpush.bf16.msra.mxu0 0
  %1584 = vmatpush.bf16.msra.mxu0 0
  %1585 = vmatpush.bf16.msra.mxu0 0
  %1586 = vmatpush.bf16.msra.mxu0 0
  %1587 = vmatpush.bf16.msra.mxu0 0
  %1588 = vmatpush.bf16.msra.mxu0 0
  %1589 = vmatpush.bf16.msra.mxu0 0
  %1590 = vmatpush.bf16.msra.mxu0 %v1516
  %1591 = vmatmul.bf16.gmra.mxu0 %v1525
  %v1592 = vpop.f32.mrf.mxu0
  %v1593 = vadd.f32 0.0, %v1592
  %v1594 = vpop.f32.mrf.mxu0
  %v1595 = vadd.f32 0.0, %v1594
  %1596 = vdwg.mxu0
  %1597 = vmatpush.bf16.msra.mxu0 0
  %1598 = vmatpush.bf16.msra.mxu0 0
  %1599 = vmatpush.bf16.msra.mxu0 0
  %1600 = vmatpush.bf16.msra.mxu0 0
  %1601 = vmatpush.bf16.msra.mxu0 0
  %1602 = vmatpush.bf16.msra.mxu0 0
  %1603 = vmatpush.bf16.msra.mxu0 0
  %1604 = vmatpush.bf16.msra.mxu0 %v1517
  %1605 = vmatmul.bf16.gmra.mxu0 %v1525
  %v1606 = vpop.f32.mrf.mxu0
  %v1607 = vadd.f32 0.0, %v1606
  %v1608 = vpop.f32.mrf.mxu0
  %v1609 = vadd.f32 0.0, %v1608
  %1610 = vdwg.mxu0
  %1611 = vrot.lane.b32.xlu0 %v1491, 19
  %v1612 = vpop.permute.xlu0 %1611
  %1613 = vrot.lane.b32.xlu0 %v1492, 19
  %v1614 = vpop.permute.xlu0 %1613
  %1615 = vrot.lane.b32.xlu0 %v1493, 19
  %v1616 = vpop.permute.xlu0 %1615
  %1617 = vrot.lane.b32.xlu0 %v1494, 19
  %v1618 = vpop.permute.xlu0 %1617
  %1619 = vrot.lane.b32.xlu0 %v1495, 19
  %v1620 = vpop.permute.xlu0 %1619
  %1621 = vrot.lane.b32.xlu0 %v1496, 19
  %v1622 = vpop.permute.xlu0 %1621
  %1623 = vrot.lane.b32.xlu0 %v1497, 19
  %v1624 = vpop.permute.xlu0 %1623
  %v1625 = vsel %vm206, %v1612, %v1614
  %v1626 = vsel %vm206, %v1614, %v1616
  %v1627 = vsel %vm206, %v1616, %v1618
  %v1628 = vsel %vm206, %v1618, %v1620
  %v1629 = vsel %vm206, %v1620, %v1622
  %v1630 = vsel %vm206, %v1622, %v1624
  %v1638 = vsel %vm104, %v1466, 0
  %1640 = vmatpush.bf16.msra.mxu0 0
  %1641 = vmatpush.bf16.msra.mxu0 0
  %1642 = vmatpush.bf16.msra.mxu0 0
  %1643 = vmatpush.bf16.msra.mxu0 0
  %1644 = vmatpush.bf16.msra.mxu0 0
  %1645 = vmatpush.bf16.msra.mxu0 0
  %1646 = vmatpush.bf16.msra.mxu0 0
  %1647 = vmatpush.bf16.msra.mxu0 %v1625
  %1648 = vmatmul.bf16.gmra.mxu0 %v1638
  %v1649 = vpop.f32.mrf.mxu0
  %v1650 = vadd.f32 %v1537, %v1649
  %v1651 = vpop.f32.mrf.mxu0
  %v1652 = vadd.f32 %v1539, %v1651
  %1653 = vdwg.mxu0
  %1654 = vmatpush.bf16.msra.mxu0 0
  %1655 = vmatpush.bf16.msra.mxu0 0
  %1656 = vmatpush.bf16.msra.mxu0 0
  %1657 = vmatpush.bf16.msra.mxu0 0
  %1658 = vmatpush.bf16.msra.mxu0 0
  %1659 = vmatpush.bf16.msra.mxu0 0
  %1660 = vmatpush.bf16.msra.mxu0 0
  %1661 = vmatpush.bf16.msra.mxu0 %v1626
  %1662 = vmatmul.bf16.gmra.mxu0 %v1638
  %v1663 = vpop.f32.mrf.mxu0
  %v1664 = vadd.f32 %v1551, %v1663
  %v1665 = vpop.f32.mrf.mxu0
  %v1666 = vadd.f32 %v1553, %v1665
  %1667 = vdwg.mxu0
  %1668 = vmatpush.bf16.msra.mxu0 0
  %1669 = vmatpush.bf16.msra.mxu0 0
  %1670 = vmatpush.bf16.msra.mxu0 0
  %1671 = vmatpush.bf16.msra.mxu0 0
  %1672 = vmatpush.bf16.msra.mxu0 0
  %1673 = vmatpush.bf16.msra.mxu0 0
  %1674 = vmatpush.bf16.msra.mxu0 0
  %1675 = vmatpush.bf16.msra.mxu0 %v1627
  %1676 = vmatmul.bf16.gmra.mxu0 %v1638
  %v1677 = vpop.f32.mrf.mxu0
  %v1678 = vadd.f32 %v1565, %v1677
  %v1679 = vpop.f32.mrf.mxu0
  %v1680 = vadd.f32 %v1567, %v1679
  %1681 = vdwg.mxu0
  %1682 = vmatpush.bf16.msra.mxu0 0
  %1683 = vmatpush.bf16.msra.mxu0 0
  %1684 = vmatpush.bf16.msra.mxu0 0
  %1685 = vmatpush.bf16.msra.mxu0 0
  %1686 = vmatpush.bf16.msra.mxu0 0
  %1687 = vmatpush.bf16.msra.mxu0 0
  %1688 = vmatpush.bf16.msra.mxu0 0
  %1689 = vmatpush.bf16.msra.mxu0 %v1628
  %1690 = vmatmul.bf16.gmra.mxu0 %v1638
  %v1691 = vpop.f32.mrf.mxu0
  %v1692 = vadd.f32 %v1579, %v1691
  %v1693 = vpop.f32.mrf.mxu0
  %v1694 = vadd.f32 %v1581, %v1693
  %1695 = vdwg.mxu0
  %1696 = vmatpush.bf16.msra.mxu0 0
  %1697 = vmatpush.bf16.msra.mxu0 0
  %1698 = vmatpush.bf16.msra.mxu0 0
  %1699 = vmatpush.bf16.msra.mxu0 0
  %1700 = vmatpush.bf16.msra.mxu0 0
  %1701 = vmatpush.bf16.msra.mxu0 0
  %1702 = vmatpush.bf16.msra.mxu0 0
  %1703 = vmatpush.bf16.msra.mxu0 %v1629
  %1704 = vmatmul.bf16.gmra.mxu0 %v1638
  %v1705 = vpop.f32.mrf.mxu0
  %v1706 = vadd.f32 %v1593, %v1705
  %v1707 = vpop.f32.mrf.mxu0
  %v1708 = vadd.f32 %v1595, %v1707
  %1709 = vdwg.mxu0
  %1710 = vmatpush.bf16.msra.mxu0 0
  %1711 = vmatpush.bf16.msra.mxu0 0
  %1712 = vmatpush.bf16.msra.mxu0 0
  %1713 = vmatpush.bf16.msra.mxu0 0
  %1714 = vmatpush.bf16.msra.mxu0 0
  %1715 = vmatpush.bf16.msra.mxu0 0
  %1716 = vmatpush.bf16.msra.mxu0 0
  %1717 = vmatpush.bf16.msra.mxu0 %v1630
  %1718 = vmatmul.bf16.gmra.mxu0 %v1638
  %v1719 = vpop.f32.mrf.mxu0
  %v1720 = vadd.f32 %v1607, %v1719
  %v1721 = vpop.f32.mrf.mxu0
  %v1722 = vadd.f32 %v1609, %v1721
  %1723 = vdwg.mxu0
  %1724 = vrot.lane.b32.xlu0 %v1466, 96
  %v1725 = vpop.permute.xlu0 %1724
  %1726 = vrot.lane.b32.xlu0 %v1491, 17
  %v1727 = vpop.permute.xlu0 %1726
  %1728 = vrot.lane.b32.xlu0 %v1492, 17
  %v1729 = vpop.permute.xlu0 %1728
  %1730 = vrot.lane.b32.xlu0 %v1493, 17
  %v1731 = vpop.permute.xlu0 %1730
  %1732 = vrot.lane.b32.xlu0 %v1494, 17
  %v1733 = vpop.permute.xlu0 %1732
  %1734 = vrot.lane.b32.xlu0 %v1495, 17
  %v1735 = vpop.permute.xlu0 %1734
  %1736 = vrot.lane.b32.xlu0 %v1496, 17
  %v1737 = vpop.permute.xlu0 %1736
  %1738 = vrot.lane.b32.xlu0 %v1497, 17
  %v1739 = vpop.permute.xlu0 %1738
  %v1740 = vsel %vm322, %v1727, %v1729
  %v1741 = vsel %vm322, %v1729, %v1731
  %v1742 = vsel %vm322, %v1731, %v1733
  %v1743 = vsel %vm322, %v1733, %v1735
  %v1744 = vsel %vm322, %v1735, %v1737
  %v1745 = vsel %vm322, %v1737, %v1739
  %v1753 = vsel %vm104, %v1725, 0
  %1755 = vmatpush.bf16.msra.mxu0 0
  %1756 = vmatpush.bf16.msra.mxu0 0
  %1757 = vmatpush.bf16.msra.mxu0 0
  %1758 = vmatpush.bf16.msra.mxu0 0
  %1759 = vmatpush.bf16.msra.mxu0 0
  %1760 = vmatpush.bf16.msra.mxu0 0
  %1761 = vmatpush.bf16.msra.mxu0 0
  %1762 = vmatpush.bf16.msra.mxu0 %v1740
  %1763 = vmatmul.bf16.gmra.mxu0 %v1753
  %v1764 = vpop.f32.mrf.mxu0
  %v1765 = vadd.f32 0.0, %v1764
  %v1766 = vpop.f32.mrf.mxu0
  %v1767 = vadd.f32 0.0, %v1766
  %1768 = vdwg.mxu0
  %1769 = vmatpush.bf16.msra.mxu0 0
  %1770 = vmatpush.bf16.msra.mxu0 0
  %1771 = vmatpush.bf16.msra.mxu0 0
  %1772 = vmatpush.bf16.msra.mxu0 0
  %1773 = vmatpush.bf16.msra.mxu0 0
  %1774 = vmatpush.bf16.msra.mxu0 0
  %1775 = vmatpush.bf16.msra.mxu0 0
  %1776 = vmatpush.bf16.msra.mxu0 %v1741
  %1777 = vmatmul.bf16.gmra.mxu0 %v1753
  %v1778 = vpop.f32.mrf.mxu0
  %v1779 = vadd.f32 0.0, %v1778
  %v1780 = vpop.f32.mrf.mxu0
  %v1781 = vadd.f32 0.0, %v1780
  %1782 = vdwg.mxu0
  %1783 = vmatpush.bf16.msra.mxu0 0
  %1784 = vmatpush.bf16.msra.mxu0 0
  %1785 = vmatpush.bf16.msra.mxu0 0
  %1786 = vmatpush.bf16.msra.mxu0 0
  %1787 = vmatpush.bf16.msra.mxu0 0
  %1788 = vmatpush.bf16.msra.mxu0 0
  %1789 = vmatpush.bf16.msra.mxu0 0
  %1790 = vmatpush.bf16.msra.mxu0 %v1742
  %1791 = vmatmul.bf16.gmra.mxu0 %v1753
  %v1792 = vpop.f32.mrf.mxu0
  %v1793 = vadd.f32 0.0, %v1792
  %v1794 = vpop.f32.mrf.mxu0
  %v1795 = vadd.f32 0.0, %v1794
  %1796 = vdwg.mxu0
  %1797 = vmatpush.bf16.msra.mxu0 0
  %1798 = vmatpush.bf16.msra.mxu0 0
  %1799 = vmatpush.bf16.msra.mxu0 0
  %1800 = vmatpush.bf16.msra.mxu0 0
  %1801 = vmatpush.bf16.msra.mxu0 0
  %1802 = vmatpush.bf16.msra.mxu0 0
  %1803 = vmatpush.bf16.msra.mxu0 0
  %1804 = vmatpush.bf16.msra.mxu0 %v1743
  %1805 = vmatmul.bf16.gmra.mxu0 %v1753
  %v1806 = vpop.f32.mrf.mxu0
  %v1807 = vadd.f32 0.0, %v1806
  %v1808 = vpop.f32.mrf.mxu0
  %v1809 = vadd.f32 0.0, %v1808
  %1810 = vdwg.mxu0
  %1811 = vmatpush.bf16.msra.mxu0 0
  %1812 = vmatpush.bf16.msra.mxu0 0
  %1813 = vmatpush.bf16.msra.mxu0 0
  %1814 = vmatpush.bf16.msra.mxu0 0
  %1815 = vmatpush.bf16.msra.mxu0 0
  %1816 = vmatpush.bf16.msra.mxu0 0
  %1817 = vmatpush.bf16.msra.mxu0 0
  %1818 = vmatpush.bf16.msra.mxu0 %v1744
  %1819 = vmatmul.bf16.gmra.mxu0 %v1753
  %v1820 = vpop.f32.mrf.mxu0
  %v1821 = vadd.f32 0.0, %v1820
  %v1822 = vpop.f32.mrf.mxu0
  %v1823 = vadd.f32 0.0, %v1822
  %1824 = vdwg.mxu0
  %1825 = vmatpush.bf16.msra.mxu0 0
  %1826 = vmatpush.bf16.msra.mxu0 0
  %1827 = vmatpush.bf16.msra.mxu0 0
  %1828 = vmatpush.bf16.msra.mxu0 0
  %1829 = vmatpush.bf16.msra.mxu0 0
  %1830 = vmatpush.bf16.msra.mxu0 0
  %1831 = vmatpush.bf16.msra.mxu0 0
  %1832 = vmatpush.bf16.msra.mxu0 %v1745
  %1833 = vmatmul.bf16.gmra.mxu0 %v1753
  %v1834 = vpop.f32.mrf.mxu0
  %v1835 = vadd.f32 0.0, %v1834
  %v1836 = vpop.f32.mrf.mxu0
  %v1837 = vadd.f32 0.0, %v1836
  %1838 = vdwg.mxu0
  %v1839 = vadd.f32 %v1650, %v1765
  %v1840 = vadd.f32 %v1664, %v1779
  %v1841 = vadd.f32 %v1678, %v1793
  %v1842 = vadd.f32 %v1692, %v1807
  %v1843 = vadd.f32 %v1706, %v1821
  %v1844 = vadd.f32 %v1720, %v1835
  %v1845 = vadd.f32 %v1652, %v1767
  %v1846 = vadd.f32 %v1666, %v1781
  %v1847 = vadd.f32 %v1680, %v1795
  %v1848 = vadd.f32 %v1694, %v1809
  %v1849 = vadd.f32 %v1708, %v1823
  %v1850 = vadd.f32 %v1722, %v1837
  %1851 = vrot.lane.b32.xlu0 %v1466, 80
  %v1852 = vpop.permute.xlu0 %1851
  %1853 = vrot.lane.b32.xlu0 %v1491, 1
  %v1854 = vpop.permute.xlu0 %1853
  %1855 = vrot.lane.b32.xlu0 %v1492, 1
  %v1856 = vpop.permute.xlu0 %1855
  %1857 = vrot.lane.b32.xlu0 %v1493, 1
  %v1858 = vpop.permute.xlu0 %1857
  %1859 = vrot.lane.b32.xlu0 %v1494, 1
  %v1860 = vpop.permute.xlu0 %1859
  %1861 = vrot.lane.b32.xlu0 %v1495, 1
  %v1862 = vpop.permute.xlu0 %1861
  %1863 = vrot.lane.b32.xlu0 %v1496, 1
  %v1864 = vpop.permute.xlu0 %1863
  %1865 = vrot.lane.b32.xlu0 %v1497, 1
  %v1866 = vpop.permute.xlu0 %1865
  %v1867 = vsel %vm450, %v1854, %v1856
  %v1868 = vsel %vm450, %v1856, %v1858
  %v1869 = vsel %vm450, %v1858, %v1860
  %v1870 = vsel %vm450, %v1860, %v1862
  %v1871 = vsel %vm450, %v1862, %v1864
  %v1872 = vsel %vm450, %v1864, %v1866
  %v1880 = vsel %vm104, %v1852, 0
  %1882 = vmatpush.bf16.msra.mxu0 0
  %1883 = vmatpush.bf16.msra.mxu0 0
  %1884 = vmatpush.bf16.msra.mxu0 0
  %1885 = vmatpush.bf16.msra.mxu0 0
  %1886 = vmatpush.bf16.msra.mxu0 0
  %1887 = vmatpush.bf16.msra.mxu0 0
  %1888 = vmatpush.bf16.msra.mxu0 0
  %1889 = vmatpush.bf16.msra.mxu0 %v1867
  %1890 = vmatmul.bf16.gmra.mxu0 %v1880
  %v1891 = vpop.f32.mrf.mxu0
  %v1892 = vadd.f32 0.0, %v1891
  %v1893 = vpop.f32.mrf.mxu0
  %v1894 = vadd.f32 0.0, %v1893
  %1895 = vdwg.mxu0
  %1896 = vmatpush.bf16.msra.mxu0 0
  %1897 = vmatpush.bf16.msra.mxu0 0
  %1898 = vmatpush.bf16.msra.mxu0 0
  %1899 = vmatpush.bf16.msra.mxu0 0
  %1900 = vmatpush.bf16.msra.mxu0 0
  %1901 = vmatpush.bf16.msra.mxu0 0
  %1902 = vmatpush.bf16.msra.mxu0 0
  %1903 = vmatpush.bf16.msra.mxu0 %v1868
  %1904 = vmatmul.bf16.gmra.mxu0 %v1880
  %v1905 = vpop.f32.mrf.mxu0
  %v1906 = vadd.f32 0.0, %v1905
  %v1907 = vpop.f32.mrf.mxu0
  %v1908 = vadd.f32 0.0, %v1907
  %1909 = vdwg.mxu0
  %1910 = vmatpush.bf16.msra.mxu0 0
  %1911 = vmatpush.bf16.msra.mxu0 0
  %1912 = vmatpush.bf16.msra.mxu0 0
  %1913 = vmatpush.bf16.msra.mxu0 0
  %1914 = vmatpush.bf16.msra.mxu0 0
  %1915 = vmatpush.bf16.msra.mxu0 0
  %1916 = vmatpush.bf16.msra.mxu0 0
  %1917 = vmatpush.bf16.msra.mxu0 %v1869
  %1918 = vmatmul.bf16.gmra.mxu0 %v1880
  %v1919 = vpop.f32.mrf.mxu0
  %v1920 = vadd.f32 0.0, %v1919
  %v1921 = vpop.f32.mrf.mxu0
  %v1922 = vadd.f32 0.0, %v1921
  %1923 = vdwg.mxu0
  %1924 = vmatpush.bf16.msra.mxu0 0
  %1925 = vmatpush.bf16.msra.mxu0 0
  %1926 = vmatpush.bf16.msra.mxu0 0
  %1927 = vmatpush.bf16.msra.mxu0 0
  %1928 = vmatpush.bf16.msra.mxu0 0
  %1929 = vmatpush.bf16.msra.mxu0 0
  %1930 = vmatpush.bf16.msra.mxu0 0
  %1931 = vmatpush.bf16.msra.mxu0 %v1870
  %1932 = vmatmul.bf16.gmra.mxu0 %v1880
  %v1933 = vpop.f32.mrf.mxu0
  %v1934 = vadd.f32 0.0, %v1933
  %v1935 = vpop.f32.mrf.mxu0
  %v1936 = vadd.f32 0.0, %v1935
  %1937 = vdwg.mxu0
  %1938 = vmatpush.bf16.msra.mxu0 0
  %1939 = vmatpush.bf16.msra.mxu0 0
  %1940 = vmatpush.bf16.msra.mxu0 0
  %1941 = vmatpush.bf16.msra.mxu0 0
  %1942 = vmatpush.bf16.msra.mxu0 0
  %1943 = vmatpush.bf16.msra.mxu0 0
  %1944 = vmatpush.bf16.msra.mxu0 0
  %1945 = vmatpush.bf16.msra.mxu0 %v1871
  %1946 = vmatmul.bf16.gmra.mxu0 %v1880
  %v1947 = vpop.f32.mrf.mxu0
  %v1948 = vadd.f32 0.0, %v1947
  %v1949 = vpop.f32.mrf.mxu0
  %v1950 = vadd.f32 0.0, %v1949
  %1951 = vdwg.mxu0
  %1952 = vmatpush.bf16.msra.mxu0 0
  %1953 = vmatpush.bf16.msra.mxu0 0
  %1954 = vmatpush.bf16.msra.mxu0 0
  %1955 = vmatpush.bf16.msra.mxu0 0
  %1956 = vmatpush.bf16.msra.mxu0 0
  %1957 = vmatpush.bf16.msra.mxu0 0
  %1958 = vmatpush.bf16.msra.mxu0 0
  %1959 = vmatpush.bf16.msra.mxu0 %v1872
  %1960 = vmatmul.bf16.gmra.mxu0 %v1880
  %v1961 = vpop.f32.mrf.mxu0
  %v1962 = vadd.f32 0.0, %v1961
  %v1963 = vpop.f32.mrf.mxu0
  %v1964 = vadd.f32 0.0, %v1963
  %1965 = vdwg.mxu0
  %v1966 = vadd.f32 %v1839, %v1892
  %v1967 = vadd.f32 %v1840, %v1906
  %v1968 = vadd.f32 %v1841, %v1920
  %v1969 = vadd.f32 %v1842, %v1934
  %v1970 = vadd.f32 %v1843, %v1948
  %v1971 = vadd.f32 %v1844, %v1962
  %v1972 = vadd.f32 %v1845, %v1894
  %v1973 = vadd.f32 %v1846, %v1908
  %v1974 = vadd.f32 %v1847, %v1922
  %v1975 = vadd.f32 %v1848, %v1936
  %v1976 = vadd.f32 %v1849, %v1950
  %v1977 = vadd.f32 %v1850, %v1964
  %v1978 = vld [vmem:[#allocation2 + $0x4] sm:$0xff]
  %v1979 = vld [vmem:[#allocation2 + $0xc] sm:$0xff]
  %v1980 = vld [vmem:[#allocation2 + $0x14] sm:$0xff]
  %v1981 = vld [vmem:[#allocation2 + $0x24] sm:$0xff]
  %v1982 = vld [vmem:[#allocation2 + $0x2c] sm:$0xff]
  %v1983 = vld [vmem:[#allocation2 + $0x34] sm:$0xff]
  %1984 = vrot.lane.b32.xlu0 %v1466, 64
  %v1985 = vpop.permute.xlu0 %1984
  %v1992 = vunpack.c.l.b16 %v1978
  %v1993 = vunpack.c.h.b16 %v1978
  %v1994 = vunpack.c.l.b16 %v1979
  %v1995 = vunpack.c.h.b16 %v1979
  %v1996 = vunpack.c.l.b16 %v1980
  %v1997 = vunpack.c.h.b16 %v1980
  %v1998 = vunpack.c.l.b16 %v1981
  %v1999 = vunpack.c.h.b16 %v1981
  %v2000 = vunpack.c.l.b16 %v1982
  %v2001 = vunpack.c.h.b16 %v1982
  %v2002 = vunpack.c.l.b16 %v1983
  %v2003 = vunpack.c.h.b16 %v1983
  %v2004 = vpack.c.b16 %v1998, %v1992
  %v2005 = vpack.c.b16 %v1999, %v1993
  %v2006 = vpack.c.b16 %v2000, %v1994
  %v2007 = vpack.c.b16 %v2001, %v1995
  %v2008 = vpack.c.b16 %v2002, %v1996
  %v2009 = vpack.c.b16 %v2003, %v1997
  %v2017 = vsel %vm104, %v1985, 0
  %2019 = vmatpush.bf16.msra.mxu0 0
  %2020 = vmatpush.bf16.msra.mxu0 0
  %2021 = vmatpush.bf16.msra.mxu0 0
  %2022 = vmatpush.bf16.msra.mxu0 0
  %2023 = vmatpush.bf16.msra.mxu0 0
  %2024 = vmatpush.bf16.msra.mxu0 0
  %2025 = vmatpush.bf16.msra.mxu0 0
  %2026 = vmatpush.bf16.msra.mxu0 %v2004
  %2027 = vmatmul.bf16.gmra.mxu0 %v2017
  %v2028 = vpop.f32.mrf.mxu0
  %v2029 = vadd.f32 0.0, %v2028
  %v2030 = vpop.f32.mrf.mxu0
  %v2031 = vadd.f32 0.0, %v2030
  %2032 = vdwg.mxu0
  %2033 = vmatpush.bf16.msra.mxu0 0
  %2034 = vmatpush.bf16.msra.mxu0 0
  %2035 = vmatpush.bf16.msra.mxu0 0
  %2036 = vmatpush.bf16.msra.mxu0 0
  %2037 = vmatpush.bf16.msra.mxu0 0
  %2038 = vmatpush.bf16.msra.mxu0 0
  %2039 = vmatpush.bf16.msra.mxu0 0
  %2040 = vmatpush.bf16.msra.mxu0 %v2005
  %2041 = vmatmul.bf16.gmra.mxu0 %v2017
  %v2042 = vpop.f32.mrf.mxu0
  %v2043 = vadd.f32 0.0, %v2042
  %v2044 = vpop.f32.mrf.mxu0
  %v2045 = vadd.f32 0.0, %v2044
  %2046 = vdwg.mxu0
  %2047 = vmatpush.bf16.msra.mxu0 0
  %2048 = vmatpush.bf16.msra.mxu0 0
  %2049 = vmatpush.bf16.msra.mxu0 0
  %2050 = vmatpush.bf16.msra.mxu0 0
  %2051 = vmatpush.bf16.msra.mxu0 0
  %2052 = vmatpush.bf16.msra.mxu0 0
  %2053 = vmatpush.bf16.msra.mxu0 0
  %2054 = vmatpush.bf16.msra.mxu0 %v2006
  %2055 = vmatmul.bf16.gmra.mxu0 %v2017
  %v2056 = vpop.f32.mrf.mxu0
  %v2057 = vadd.f32 0.0, %v2056
  %v2058 = vpop.f32.mrf.mxu0
  %v2059 = vadd.f32 0.0, %v2058
  %2060 = vdwg.mxu0
  %2061 = vmatpush.bf16.msra.mxu0 0
  %2062 = vmatpush.bf16.msra.mxu0 0
  %2063 = vmatpush.bf16.msra.mxu0 0
  %2064 = vmatpush.bf16.msra.mxu0 0
  %2065 = vmatpush.bf16.msra.mxu0 0
  %2066 = vmatpush.bf16.msra.mxu0 0
  %2067 = vmatpush.bf16.msra.mxu0 0
  %2068 = vmatpush.bf16.msra.mxu0 %v2007
  %2069 = vmatmul.bf16.gmra.mxu0 %v2017
  %v2070 = vpop.f32.mrf.mxu0
  %v2071 = vadd.f32 0.0, %v2070
  %v2072 = vpop.f32.mrf.mxu0
  %v2073 = vadd.f32 0.0, %v2072
  %2074 = vdwg.mxu0
  %2075 = vmatpush.bf16.msra.mxu0 0
  %2076 = vmatpush.bf16.msra.mxu0 0
  %2077 = vmatpush.bf16.msra.mxu0 0
  %2078 = vmatpush.bf16.msra.mxu0 0
  %2079 = vmatpush.bf16.msra.mxu0 0
  %2080 = vmatpush.bf16.msra.mxu0 0
  %2081 = vmatpush.bf16.msra.mxu0 0
  %2082 = vmatpush.bf16.msra.mxu0 %v2008
  %2083 = vmatmul.bf16.gmra.mxu0 %v2017
  %v2084 = vpop.f32.mrf.mxu0
  %v2085 = vadd.f32 0.0, %v2084
  %v2086 = vpop.f32.mrf.mxu0
  %v2087 = vadd.f32 0.0, %v2086
  %2088 = vdwg.mxu0
  %2089 = vmatpush.bf16.msra.mxu0 0
  %2090 = vmatpush.bf16.msra.mxu0 0
  %2091 = vmatpush.bf16.msra.mxu0 0
  %2092 = vmatpush.bf16.msra.mxu0 0
  %2093 = vmatpush.bf16.msra.mxu0 0
  %2094 = vmatpush.bf16.msra.mxu0 0
  %2095 = vmatpush.bf16.msra.mxu0 0
  %2096 = vmatpush.bf16.msra.mxu0 %v2009
  %2097 = vmatmul.bf16.gmra.mxu0 %v2017
  %v2098 = vpop.f32.mrf.mxu0
  %v2099 = vadd.f32 0.0, %v2098
  %v2100 = vpop.f32.mrf.mxu0
  %v2101 = vadd.f32 0.0, %v2100
  %2102 = vdwg.mxu0
  %v2103 = vadd.f32 %v1966, %v2029
  %v2104 = vadd.f32 %v1967, %v2043
  %v2105 = vadd.f32 %v1968, %v2057
  %v2106 = vadd.f32 %v1969, %v2071
  %v2107 = vadd.f32 %v1970, %v2085
  %v2108 = vadd.f32 %v1971, %v2099
  %v2109 = vadd.f32 %v1972, %v2031
  %v2110 = vadd.f32 %v1973, %v2045
  %v2111 = vadd.f32 %v1974, %v2059
  %v2112 = vadd.f32 %v1975, %v2073
  %v2113 = vadd.f32 %v1976, %v2087
  %v2114 = vadd.f32 %v1977, %v2101
  %v2115 = vld [vmem:[#allocation2 + $0x4] sm:$0xff]
  %v2116 = vld [vmem:[#allocation2 + $0xc] sm:$0xff]
  %v2117 = vld [vmem:[#allocation2 + $0x14] sm:$0xff]
  %v2118 = vld [vmem:[#allocation2 + $0x1c] sm:$0xf]
  %v2119 = vld [vmem:[#allocation2 + $0x24] sm:$0xff]
  %v2120 = vld [vmem:[#allocation2 + $0x2c] sm:$0xff]
  %v2121 = vld [vmem:[#allocation2 + $0x34] sm:$0xff]
  %v2122 = vld [vmem:[#allocation2 + $0x3c] sm:$0xf]
  %2123 = vrot.lane.b32.xlu0 %v1466, 48
  %v2124 = vpop.permute.xlu0 %2123
  %v2133 = vunpack.c.l.b16 %v2115
  %v2134 = vunpack.c.h.b16 %v2115
  %v2135 = vunpack.c.l.b16 %v2116
  %v2136 = vunpack.c.h.b16 %v2116
  %v2137 = vunpack.c.l.b16 %v2117
  %v2138 = vunpack.c.h.b16 %v2117
  %v2139 = vunpack.c.l.b16 %v2118
  %v2140 = vunpack.c.l.b16 %v2119
  %v2141 = vunpack.c.h.b16 %v2119
  %v2142 = vunpack.c.l.b16 %v2120
  %v2143 = vunpack.c.h.b16 %v2120
  %v2144 = vunpack.c.l.b16 %v2121
  %v2145 = vunpack.c.h.b16 %v2121
  %v2146 = vunpack.c.l.b16 %v2122
  %v2147 = vpack.c.b16 %v2140, %v2133
  %v2148 = vpack.c.b16 %v2141, %v2134
  %v2149 = vpack.c.b16 %v2142, %v2135
  %v2150 = vpack.c.b16 %v2143, %v2136
  %v2151 = vpack.c.b16 %v2144, %v2137
  %v2152 = vpack.c.b16 %v2145, %v2138
  %v2153 = vpack.c.b16 %v2146, %v2139
  %2154 = vrot.lane.b32.xlu0 %v2147, 127
  %v2155 = vpop.permute.xlu0 %2154
  %2156 = vrot.lane.b32.xlu0 %v2148, 127
  %v2157 = vpop.permute.xlu0 %2156
  %2158 = vrot.lane.b32.xlu0 %v2149, 127
  %v2159 = vpop.permute.xlu0 %2158
  %2160 = vrot.lane.b32.xlu0 %v2150, 127
  %v2161 = vpop.permute.xlu0 %2160
  %2162 = vrot.lane.b32.xlu0 %v2151, 127
  %v2163 = vpop.permute.xlu0 %2162
  %2164 = vrot.lane.b32.xlu0 %v2152, 127
  %v2165 = vpop.permute.xlu0 %2164
  %2166 = vrot.lane.b32.xlu0 %v2153, 127
  %v2167 = vpop.permute.xlu0 %2166
  %v2168 = vsel %vm752, %v2155, %v2157
  %v2169 = vsel %vm752, %v2157, %v2159
  %v2170 = vsel %vm752, %v2159, %v2161
  %v2171 = vsel %vm752, %v2161, %v2163
  %v2172 = vsel %vm752, %v2163, %v2165
  %v2173 = vsel %vm752, %v2165, %v2167
  %v2181 = vsel %vm104, %v2124, 0
  %2183 = vmatpush.bf16.msra.mxu0 0
  %2184 = vmatpush.bf16.msra.mxu0 0
  %2185 = vmatpush.bf16.msra.mxu0 0
  %2186 = vmatpush.bf16.msra.mxu0 0
  %2187 = vmatpush.bf16.msra.mxu0 0
  %2188 = vmatpush.bf16.msra.mxu0 0
  %2189 = vmatpush.bf16.msra.mxu0 0
  %2190 = vmatpush.bf16.msra.mxu0 %v2168
  %2191 = vmatmul.bf16.gmra.mxu0 %v2181
  %v2192 = vpop.f32.mrf.mxu0
  %v2193 = vadd.f32 0.0, %v2192
  %v2194 = vpop.f32.mrf.mxu0
  %v2195 = vadd.f32 0.0, %v2194
  %2196 = vdwg.mxu0
  %2197 = vmatpush.bf16.msra.mxu0 0
  %2198 = vmatpush.bf16.msra.mxu0 0
  %2199 = vmatpush.bf16.msra.mxu0 0
  %2200 = vmatpush.bf16.msra.mxu0 0
  %2201 = vmatpush.bf16.msra.mxu0 0
  %2202 = vmatpush.bf16.msra.mxu0 0
  %2203 = vmatpush.bf16.msra.mxu0 0
  %2204 = vmatpush.bf16.msra.mxu0 %v2169
  %2205 = vmatmul.bf16.gmra.mxu0 %v2181
  %v2206 = vpop.f32.mrf.mxu0
  %v2207 = vadd.f32 0.0, %v2206
  %v2208 = vpop.f32.mrf.mxu0
  %v2209 = vadd.f32 0.0, %v2208
  %2210 = vdwg.mxu0
  %2211 = vmatpush.bf16.msra.mxu0 0
  %2212 = vmatpush.bf16.msra.mxu0 0
  %2213 = vmatpush.bf16.msra.mxu0 0
  %2214 = vmatpush.bf16.msra.mxu0 0
  %2215 = vmatpush.bf16.msra.mxu0 0
  %2216 = vmatpush.bf16.msra.mxu0 0
  %2217 = vmatpush.bf16.msra.mxu0 0
  %2218 = vmatpush.bf16.msra.mxu0 %v2170
  %2219 = vmatmul.bf16.gmra.mxu0 %v2181
  %v2220 = vpop.f32.mrf.mxu0
  %v2221 = vadd.f32 0.0, %v2220
  %v2222 = vpop.f32.mrf.mxu0
  %v2223 = vadd.f32 0.0, %v2222
  %2224 = vdwg.mxu0
  %2225 = vmatpush.bf16.msra.mxu0 0
  %2226 = vmatpush.bf16.msra.mxu0 0
  %2227 = vmatpush.bf16.msra.mxu0 0
  %2228 = vmatpush.bf16.msra.mxu0 0
  %2229 = vmatpush.bf16.msra.mxu0 0
  %2230 = vmatpush.bf16.msra.mxu0 0
  %2231 = vmatpush.bf16.msra.mxu0 0
  %2232 = vmatpush.bf16.msra.mxu0 %v2171
  %2233 = vmatmul.bf16.gmra.mxu0 %v2181
  %v2234 = vpop.f32.mrf.mxu0
  %v2235 = vadd.f32 0.0, %v2234
  %v2236 = vpop.f32.mrf.mxu0
  %v2237 = vadd.f32 0.0, %v2236
  %2238 = vdwg.mxu0
  %2239 = vmatpush.bf16.msra.mxu0 0
  %2240 = vmatpush.bf16.msra.mxu0 0
  %2241 = vmatpush.bf16.msra.mxu0 0
  %2242 = vmatpush.bf16.msra.mxu0 0
  %2243 = vmatpush.bf16.msra.mxu0 0
  %2244 = vmatpush.bf16.msra.mxu0 0
  %2245 = vmatpush.bf16.msra.mxu0 0
  %2246 = vmatpush.bf16.msra.mxu0 %v2172
  %2247 = vmatmul.bf16.gmra.mxu0 %v2181
  %v2248 = vpop.f32.mrf.mxu0
  %v2249 = vadd.f32 0.0, %v2248
  %v2250 = vpop.f32.mrf.mxu0
  %v2251 = vadd.f32 0.0, %v2250
  %2252 = vdwg.mxu0
  %2253 = vmatpush.bf16.msra.mxu0 0
  %2254 = vmatpush.bf16.msra.mxu0 0
  %2255 = vmatpush.bf16.msra.mxu0 0
  %2256 = vmatpush.bf16.msra.mxu0 0
  %2257 = vmatpush.bf16.msra.mxu0 0
  %2258 = vmatpush.bf16.msra.mxu0 0
  %2259 = vmatpush.bf16.msra.mxu0 0
  %2260 = vmatpush.bf16.msra.mxu0 %v2173
  %2261 = vmatmul.bf16.gmra.mxu0 %v2181
  %v2262 = vpop.f32.mrf.mxu0
  %v2263 = vadd.f32 0.0, %v2262
  %v2264 = vpop.f32.mrf.mxu0
  %v2265 = vadd.f32 0.0, %v2264
  %2266 = vdwg.mxu0
  %v2267 = vadd.f32 %v2103, %v2193
  %v2268 = vadd.f32 %v2104, %v2207
  %v2269 = vadd.f32 %v2105, %v2221
  %v2270 = vadd.f32 %v2106, %v2235
  %v2271 = vadd.f32 %v2107, %v2249
  %v2272 = vadd.f32 %v2108, %v2263
  %v2273 = vadd.f32 %v2109, %v2195
  %v2274 = vadd.f32 %v2110, %v2209
  %v2275 = vadd.f32 %v2111, %v2223
  %v2276 = vadd.f32 %v2112, %v2237
  %v2277 = vadd.f32 %v2113, %v2251
  %v2278 = vadd.f32 %v2114, %v2265
  %2279 = vrot.lane.b32.xlu0 %v1466, 32
  %v2280 = vpop.permute.xlu0 %2279
  %2281 = vrot.lane.b32.xlu0 %v2147, 111
  %v2282 = vpop.permute.xlu0 %2281
  %2283 = vrot.lane.b32.xlu0 %v2148, 111
  %v2284 = vpop.permute.xlu0 %2283
  %2285 = vrot.lane.b32.xlu0 %v2149, 111
  %v2286 = vpop.permute.xlu0 %2285
  %2287 = vrot.lane.b32.xlu0 %v2150, 111
  %v2288 = vpop.permute.xlu0 %2287
  %2289 = vrot.lane.b32.xlu0 %v2151, 111
  %v2290 = vpop.permute.xlu0 %2289
  %2291 = vrot.lane.b32.xlu0 %v2152, 111
  %v2292 = vpop.permute.xlu0 %2291
  %2293 = vrot.lane.b32.xlu0 %v2153, 111
  %v2294 = vpop.permute.xlu0 %2293
  %v2295 = vsel %vm880, %v2282, %v2284
  %v2296 = vsel %vm880, %v2284, %v2286
  %v2297 = vsel %vm880, %v2286, %v2288
  %v2298 = vsel %vm880, %v2288, %v2290
  %v2299 = vsel %vm880, %v2290, %v2292
  %v2300 = vsel %vm880, %v2292, %v2294
  %v2308 = vsel %vm104, %v2280, 0
  %2310 = vmatpush.bf16.msra.mxu0 0
  %2311 = vmatpush.bf16.msra.mxu0 0
  %2312 = vmatpush.bf16.msra.mxu0 0
  %2313 = vmatpush.bf16.msra.mxu0 0
  %2314 = vmatpush.bf16.msra.mxu0 0
  %2315 = vmatpush.bf16.msra.mxu0 0
  %2316 = vmatpush.bf16.msra.mxu0 0
  %2317 = vmatpush.bf16.msra.mxu0 %v2295
  %2318 = vmatmul.bf16.gmra.mxu0 %v2308
  %v2319 = vpop.f32.mrf.mxu0
  %v2320 = vadd.f32 0.0, %v2319
  %v2321 = vpop.f32.mrf.mxu0
  %v2322 = vadd.f32 0.0, %v2321
  %2323 = vdwg.mxu0
  %2324 = vmatpush.bf16.msra.mxu0 0
  %2325 = vmatpush.bf16.msra.mxu0 0
  %2326 = vmatpush.bf16.msra.mxu0 0
  %2327 = vmatpush.bf16.msra.mxu0 0
  %2328 = vmatpush.bf16.msra.mxu0 0
  %2329 = vmatpush.bf16.msra.mxu0 0
  %2330 = vmatpush.bf16.msra.mxu0 0
  %2331 = vmatpush.bf16.msra.mxu0 %v2296
  %2332 = vmatmul.bf16.gmra.mxu0 %v2308
  %v2333 = vpop.f32.mrf.mxu0
  %v2334 = vadd.f32 0.0, %v2333
  %v2335 = vpop.f32.mrf.mxu0
  %v2336 = vadd.f32 0.0, %v2335
  %2337 = vdwg.mxu0
  %2338 = vmatpush.bf16.msra.mxu0 0
  %2339 = vmatpush.bf16.msra.mxu0 0
  %2340 = vmatpush.bf16.msra.mxu0 0
  %2341 = vmatpush.bf16.msra.mxu0 0
  %2342 = vmatpush.bf16.msra.mxu0 0
  %2343 = vmatpush.bf16.msra.mxu0 0
  %2344 = vmatpush.bf16.msra.mxu0 0
  %2345 = vmatpush.bf16.msra.mxu0 %v2297
  %2346 = vmatmul.bf16.gmra.mxu0 %v2308
  %v2347 = vpop.f32.mrf.mxu0
  %v2348 = vadd.f32 0.0, %v2347
  %v2349 = vpop.f32.mrf.mxu0
  %v2350 = vadd.f32 0.0, %v2349
  %2351 = vdwg.mxu0
  %2352 = vmatpush.bf16.msra.mxu0 0
  %2353 = vmatpush.bf16.msra.mxu0 0
  %2354 = vmatpush.bf16.msra.mxu0 0
  %2355 = vmatpush.bf16.msra.mxu0 0
  %2356 = vmatpush.bf16.msra.mxu0 0
  %2357 = vmatpush.bf16.msra.mxu0 0
  %2358 = vmatpush.bf16.msra.mxu0 0
  %2359 = vmatpush.bf16.msra.mxu0 %v2298
  %2360 = vmatmul.bf16.gmra.mxu0 %v2308
  %v2361 = vpop.f32.mrf.mxu0
  %v2362 = vadd.f32 0.0, %v2361
  %v2363 = vpop.f32.mrf.mxu0
  %v2364 = vadd.f32 0.0, %v2363
  %2365 = vdwg.mxu0
  %2366 = vmatpush.bf16.msra.mxu0 0
  %2367 = vmatpush.bf16.msra.mxu0 0
  %2368 = vmatpush.bf16.msra.mxu0 0
  %2369 = vmatpush.bf16.msra.mxu0 0
  %2370 = vmatpush.bf16.msra.mxu0 0
  %2371 = vmatpush.bf16.msra.mxu0 0
  %2372 = vmatpush.bf16.msra.mxu0 0
  %2373 = vmatpush.bf16.msra.mxu0 %v2299
  %2374 = vmatmul.bf16.gmra.mxu0 %v2308
  %v2375 = vpop.f32.mrf.mxu0
  %v2376 = vadd.f32 0.0, %v2375
  %v2377 = vpop.f32.mrf.mxu0
  %v2378 = vadd.f32 0.0, %v2377
  %2379 = vdwg.mxu0
  %2380 = vmatpush.bf16.msra.mxu0 0
  %2381 = vmatpush.bf16.msra.mxu0 0
  %2382 = vmatpush.bf16.msra.mxu0 0
  %2383 = vmatpush.bf16.msra.mxu0 0
  %2384 = vmatpush.bf16.msra.mxu0 0
  %2385 = vmatpush.bf16.msra.mxu0 0
  %2386 = vmatpush.bf16.msra.mxu0 0
  %2387 = vmatpush.bf16.msra.mxu0 %v2300
  %2388 = vmatmul.bf16.gmra.mxu0 %v2308
  %v2389 = vpop.f32.mrf.mxu0
  %v2390 = vadd.f32 0.0, %v2389
  %v2391 = vpop.f32.mrf.mxu0
  %v2392 = vadd.f32 0.0, %v2391
  %2393 = vdwg.mxu0
  %v2394 = vadd.f32 %v2267, %v2320
  %v2395 = vadd.f32 %v2268, %v2334
  %v2396 = vadd.f32 %v2269, %v2348
  %v2397 = vadd.f32 %v2270, %v2362
  %v2398 = vadd.f32 %v2271, %v2376
  %v2399 = vadd.f32 %v2272, %v2390
  %v2400 = vadd.f32 %v2273, %v2322
  %v2401 = vadd.f32 %v2274, %v2336
  %v2402 = vadd.f32 %v2275, %v2350
  %v2403 = vadd.f32 %v2276, %v2364
  %v2404 = vadd.f32 %v2277, %v2378
  %v2405 = vadd.f32 %v2278, %v2392
  %2406 = vrot.lane.b32.xlu0 %v1466, 16
  %v2407 = vpop.permute.xlu0 %2406
  %2408 = vrot.lane.b32.xlu0 %v2147, 110
  %v2409 = vpop.permute.xlu0 %2408
  %2410 = vrot.lane.b32.xlu0 %v2148, 110
  %v2411 = vpop.permute.xlu0 %2410
  %2412 = vrot.lane.b32.xlu0 %v2149, 110
  %v2413 = vpop.permute.xlu0 %2412
  %2414 = vrot.lane.b32.xlu0 %v2150, 110
  %v2415 = vpop.permute.xlu0 %2414
  %2416 = vrot.lane.b32.xlu0 %v2151, 110
  %v2417 = vpop.permute.xlu0 %2416
  %2418 = vrot.lane.b32.xlu0 %v2152, 110
  %v2419 = vpop.permute.xlu0 %2418
  %2420 = vrot.lane.b32.xlu0 %v2153, 110
  %v2421 = vpop.permute.xlu0 %2420
  %v2422 = vsel %vm1008, %v2409, %v2411
  %v2423 = vsel %vm1008, %v2411, %v2413
  %v2424 = vsel %vm1008, %v2413, %v2415
  %v2425 = vsel %vm1008, %v2415, %v2417
  %v2426 = vsel %vm1008, %v2417, %v2419
  %v2427 = vsel %vm1008, %v2419, %v2421
  %v2435 = vsel %vm104, %v2407, 0
  %2437 = vmatpush.bf16.msra.mxu0 0
  %2438 = vmatpush.bf16.msra.mxu0 0
  %2439 = vmatpush.bf16.msra.mxu0 0
  %2440 = vmatpush.bf16.msra.mxu0 0
  %2441 = vmatpush.bf16.msra.mxu0 0
  %2442 = vmatpush.bf16.msra.mxu0 0
  %2443 = vmatpush.bf16.msra.mxu0 0
  %2444 = vmatpush.bf16.msra.mxu0 %v2422
  %2445 = vmatmul.bf16.gmra.mxu0 %v2435
  %v2446 = vpop.f32.mrf.mxu0
  %v2447 = vadd.f32 0.0, %v2446
  %v2448 = vpop.f32.mrf.mxu0
  %v2449 = vadd.f32 0.0, %v2448
  %2450 = vdwg.mxu0
  %2451 = vmatpush.bf16.msra.mxu0 0
  %2452 = vmatpush.bf16.msra.mxu0 0
  %2453 = vmatpush.bf16.msra.mxu0 0
  %2454 = vmatpush.bf16.msra.mxu0 0
  %2455 = vmatpush.bf16.msra.mxu0 0
  %2456 = vmatpush.bf16.msra.mxu0 0
  %2457 = vmatpush.bf16.msra.mxu0 0
  %2458 = vmatpush.bf16.msra.mxu0 %v2423
  %2459 = vmatmul.bf16.gmra.mxu0 %v2435
  %v2460 = vpop.f32.mrf.mxu0
  %v2461 = vadd.f32 0.0, %v2460
  %v2462 = vpop.f32.mrf.mxu0
  %v2463 = vadd.f32 0.0, %v2462
  %2464 = vdwg.mxu0
  %2465 = vmatpush.bf16.msra.mxu0 0
  %2466 = vmatpush.bf16.msra.mxu0 0
  %2467 = vmatpush.bf16.msra.mxu0 0
  %2468 = vmatpush.bf16.msra.mxu0 0
  %2469 = vmatpush.bf16.msra.mxu0 0
  %2470 = vmatpush.bf16.msra.mxu0 0
  %2471 = vmatpush.bf16.msra.mxu0 0
  %2472 = vmatpush.bf16.msra.mxu0 %v2424
  %2473 = vmatmul.bf16.gmra.mxu0 %v2435
  %v2474 = vpop.f32.mrf.mxu0
  %v2475 = vadd.f32 0.0, %v2474
  %v2476 = vpop.f32.mrf.mxu0
  %v2477 = vadd.f32 0.0, %v2476
  %2478 = vdwg.mxu0
  %2479 = vmatpush.bf16.msra.mxu0 0
  %2480 = vmatpush.bf16.msra.mxu0 0
  %2481 = vmatpush.bf16.msra.mxu0 0
  %2482 = vmatpush.bf16.msra.mxu0 0
  %2483 = vmatpush.bf16.msra.mxu0 0
  %2484 = vmatpush.bf16.msra.mxu0 0
  %2485 = vmatpush.bf16.msra.mxu0 0
  %2486 = vmatpush.bf16.msra.mxu0 %v2425
  %2487 = vmatmul.bf16.gmra.mxu0 %v2435
  %v2488 = vpop.f32.mrf.mxu0
  %v2489 = vadd.f32 0.0, %v2488
  %v2490 = vpop.f32.mrf.mxu0
  %v2491 = vadd.f32 0.0, %v2490
  %2492 = vdwg.mxu0
  %2493 = vmatpush.bf16.msra.mxu0 0
  %2494 = vmatpush.bf16.msra.mxu0 0
  %2495 = vmatpush.bf16.msra.mxu0 0
  %2496 = vmatpush.bf16.msra.mxu0 0
  %2497 = vmatpush.bf16.msra.mxu0 0
  %2498 = vmatpush.bf16.msra.mxu0 0
  %2499 = vmatpush.bf16.msra.mxu0 0
  %2500 = vmatpush.bf16.msra.mxu0 %v2426
  %2501 = vmatmul.bf16.gmra.mxu0 %v2435
  %v2502 = vpop.f32.mrf.mxu0
  %v2503 = vadd.f32 0.0, %v2502
  %v2504 = vpop.f32.mrf.mxu0
  %v2505 = vadd.f32 0.0, %v2504
  %2506 = vdwg.mxu0
  %2507 = vmatpush.bf16.msra.mxu0 0
  %2508 = vmatpush.bf16.msra.mxu0 0
  %2509 = vmatpush.bf16.msra.mxu0 0
  %2510 = vmatpush.bf16.msra.mxu0 0
  %2511 = vmatpush.bf16.msra.mxu0 0
  %2512 = vmatpush.bf16.msra.mxu0 0
  %2513 = vmatpush.bf16.msra.mxu0 0
  %2514 = vmatpush.bf16.msra.mxu0 %v2427
  %2515 = vmatmul.bf16.gmra.mxu0 %v2435
  %v2516 = vpop.f32.mrf.mxu0
  %v2517 = vadd.f32 0.0, %v2516
  %v2518 = vpop.f32.mrf.mxu0
  %v2519 = vadd.f32 0.0, %v2518
  %2520 = vdwg.mxu0
  %v2521 = vadd.f32 %v2394, %v2447
  %v2522 = vadd.f32 %v2395, %v2461
  %v2523 = vadd.f32 %v2396, %v2475
  %v2524 = vadd.f32 %v2397, %v2489
  %v2525 = vadd.f32 %v2398, %v2503
  %v2526 = vadd.f32 %v2399, %v2517
  %v2527 = vadd.f32 %v2400, %v2449
  %v2528 = vadd.f32 %v2401, %v2463
  %v2529 = vadd.f32 %v2402, %v2477
  %v2530 = vadd.f32 %v2403, %v2491
  %v2531 = vadd.f32 %v2404, %v2505
  %v2532 = vadd.f32 %v2405, %v2519
  %v2533 = vld [vmem:[%s4 + $0x4] sm:$0xf]
  %v2534 = vld [vmem:[%s4 + $0xc] sm:$0xf]
  %v2537 = vunpack.c.l.b16 %v2533
  %v2538 = vunpack.c.l.b16 %v2534
  %v2539 = vpack.c.b16 %v2538, %v2537
  %2540 = vrot.lane.b32.xlu0 %v2147, 109
  %v2541 = vpop.permute.xlu0 %2540
  %2542 = vrot.lane.b32.xlu0 %v2148, 109
  %v2543 = vpop.permute.xlu0 %2542
  %2544 = vrot.lane.b32.xlu0 %v2149, 109
  %v2545 = vpop.permute.xlu0 %2544
  %2546 = vrot.lane.b32.xlu0 %v2150, 109
  %v2547 = vpop.permute.xlu0 %2546
  %2548 = vrot.lane.b32.xlu0 %v2151, 109
  %v2549 = vpop.permute.xlu0 %2548
  %2550 = vrot.lane.b32.xlu0 %v2152, 109
  %v2551 = vpop.permute.xlu0 %2550
  %2552 = vrot.lane.b32.xlu0 %v2153, 109
  %v2553 = vpop.permute.xlu0 %2552
  %v2554 = vsel %vm1141, %v2541, %v2543
  %v2555 = vsel %vm1141, %v2543, %v2545
  %v2556 = vsel %vm1141, %v2545, %v2547
  %v2557 = vsel %vm1141, %v2547, %v2549
  %v2558 = vsel %vm1141, %v2549, %v2551
  %v2559 = vsel %vm1141, %v2551, %v2553
  %v2567 = vsel %vm104, %v2539, 0
  %2569 = vmatpush.bf16.msra.mxu0 0
  %2570 = vmatpush.bf16.msra.mxu0 0
  %2571 = vmatpush.bf16.msra.mxu0 0
  %2572 = vmatpush.bf16.msra.mxu0 0
  %2573 = vmatpush.bf16.msra.mxu0 0
  %2574 = vmatpush.bf16.msra.mxu0 0
  %2575 = vmatpush.bf16.msra.mxu0 0
  %2576 = vmatpush.bf16.msra.mxu0 %v2554
  %2577 = vmatmul.bf16.gmra.mxu0 %v2567
  %v2578 = vpop.f32.mrf.mxu0
  %v2579 = vadd.f32 0.0, %v2578
  %v2580 = vpop.f32.mrf.mxu0
  %v2581 = vadd.f32 0.0, %v2580
  %2582 = vdwg.mxu0
  %2583 = vmatpush.bf16.msra.mxu0 0
  %2584 = vmatpush.bf16.msra.mxu0 0
  %2585 = vmatpush.bf16.msra.mxu0 0
  %2586 = vmatpush.bf16.msra.mxu0 0
  %2587 = vmatpush.bf16.msra.mxu0 0
  %2588 = vmatpush.bf16.msra.mxu0 0
  %2589 = vmatpush.bf16.msra.mxu0 0
  %2590 = vmatpush.bf16.msra.mxu0 %v2555
  %2591 = vmatmul.bf16.gmra.mxu0 %v2567
  %v2592 = vpop.f32.mrf.mxu0
  %v2593 = vadd.f32 0.0, %v2592
  %v2594 = vpop.f32.mrf.mxu0
  %v2595 = vadd.f32 0.0, %v2594
  %2596 = vdwg.mxu0
  %2597 = vmatpush.bf16.msra.mxu0 0
  %2598 = vmatpush.bf16.msra.mxu0 0
  %2599 = vmatpush.bf16.msra.mxu0 0
  %2600 = vmatpush.bf16.msra.mxu0 0
  %2601 = vmatpush.bf16.msra.mxu0 0
  %2602 = vmatpush.bf16.msra.mxu0 0
  %2603 = vmatpush.bf16.msra.mxu0 0
  %2604 = vmatpush.bf16.msra.mxu0 %v2556
  %2605 = vmatmul.bf16.gmra.mxu0 %v2567
  %v2606 = vpop.f32.mrf.mxu0
  %v2607 = vadd.f32 0.0, %v2606
  %v2608 = vpop.f32.mrf.mxu0
  %v2609 = vadd.f32 0.0, %v2608
  %2610 = vdwg.mxu0
  %2611 = vmatpush.bf16.msra.mxu0 0
  %2612 = vmatpush.bf16.msra.mxu0 0
  %2613 = vmatpush.bf16.msra.mxu0 0
  %2614 = vmatpush.bf16.msra.mxu0 0
  %2615 = vmatpush.bf16.msra.mxu0 0
  %2616 = vmatpush.bf16.msra.mxu0 0
  %2617 = vmatpush.bf16.msra.mxu0 0
  %2618 = vmatpush.bf16.msra.mxu0 %v2557
  %2619 = vmatmul.bf16.gmra.mxu0 %v2567
  %v2620 = vpop.f32.mrf.mxu0
  %v2621 = vadd.f32 0.0, %v2620
  %v2622 = vpop.f32.mrf.mxu0
  %v2623 = vadd.f32 0.0, %v2622
  %2624 = vdwg.mxu0
  %2625 = vmatpush.bf16.msra.mxu0 0
  %2626 = vmatpush.bf16.msra.mxu0 0
  %2627 = vmatpush.bf16.msra.mxu0 0
  %2628 = vmatpush.bf16.msra.mxu0 0
  %2629 = vmatpush.bf16.msra.mxu0 0
  %2630 = vmatpush.bf16.msra.mxu0 0
  %2631 = vmatpush.bf16.msra.mxu0 0
  %2632 = vmatpush.bf16.msra.mxu0 %v2558
  %2633 = vmatmul.bf16.gmra.mxu0 %v2567
  %v2634 = vpop.f32.mrf.mxu0
  %v2635 = vadd.f32 0.0, %v2634
  %v2636 = vpop.f32.mrf.mxu0
  %v2637 = vadd.f32 0.0, %v2636
  %2638 = vdwg.mxu0
  %2639 = vmatpush.bf16.msra.mxu0 0
  %2640 = vmatpush.bf16.msra.mxu0 0
  %2641 = vmatpush.bf16.msra.mxu0 0
  %2642 = vmatpush.bf16.msra.mxu0 0
  %2643 = vmatpush.bf16.msra.mxu0 0
  %2644 = vmatpush.bf16.msra.mxu0 0
  %2645 = vmatpush.bf16.msra.mxu0 0
  %2646 = vmatpush.bf16.msra.mxu0 %v2559
  %2647 = vmatmul.bf16.gmra.mxu0 %v2567
  %v2648 = vpop.f32.mrf.mxu0
  %v2649 = vadd.f32 0.0, %v2648
  %v2650 = vpop.f32.mrf.mxu0
  %v2651 = vadd.f32 0.0, %v2650
  %2652 = vdwg.mxu0
  %v2653 = vadd.f32 %v2521, %v2579
  %v2654 = vadd.f32 %v2522, %v2593
  %v2655 = vadd.f32 %v2523, %v2607
  %v2656 = vadd.f32 %v2524, %v2621
  %v2657 = vadd.f32 %v2525, %v2635
  %v2658 = vadd.f32 %v2526, %v2649
  %v2659 = vadd.f32 %v2527, %v2581
  %v2660 = vadd.f32 %v2528, %v2595
  %v2661 = vadd.f32 %v2529, %v2609
  %v2662 = vadd.f32 %v2530, %v2623
  %v2663 = vadd.f32 %v2531, %v2637
  %v2664 = vadd.f32 %v2532, %v2651
  %v2665 = vmul.f32 %v2653, %v1254
  %v2666 = vmul.f32 %v2654, %v1255
  %v2667 = vmul.f32 %v2655, %v1256
  %v2668 = vmul.f32 %v2656, %v1257
  %v2669 = vmul.f32 %v2657, %v1258
  %v2670 = vmul.f32 %v2658, %v1259
  %v2671 = vmul.f32 %v2659, %v1254
  %v2672 = vmul.f32 %v2660, %v1255
  %v2673 = vmul.f32 %v2661, %v1256
  %v2674 = vmul.f32 %v2662, %v1257
  %v2675 = vmul.f32 %v2663, %v1258
  %v2676 = vmul.f32 %v2664, %v1259
  %v2677 = vadd.f32 %v2665, %v2666
  %v2678 = vadd.f32 %v2677, %v2667
  %v2679 = vadd.f32 %v2678, %v2668
  %v2680 = vadd.f32 %v2679, %v2669
  %v2681 = vadd.f32 %v2680, %v2670
  %2682 = vadd.xlane.f32.xlu0 %v2681
  %v2683 = vpop.xlane.xlu0 %2682
  %v2684 = vadd.f32 %v2671, %v2672
  %v2685 = vadd.f32 %v2684, %v2673
  %v2686 = vadd.f32 %v2685, %v2674
  %v2687 = vadd.f32 %v2686, %v2675
  %v2688 = vadd.f32 %v2687, %v2676
  %2689 = vadd.xlane.f32.xlu0 %v2688
  %v2690 = vpop.xlane.xlu0 %2689
  %v2691 = vmul.f32 %v2683, 0.001953125
  %v2692 = vmul.f32 %v2690, 0.001953125
  %v2693 = vmul.f32 %v2665, %v2665
  %v2694 = vmul.f32 %v2666, %v2666
  %v2695 = vmul.f32 %v2667, %v2667
  %v2696 = vmul.f32 %v2668, %v2668
  %v2697 = vmul.f32 %v2669, %v2669
  %v2698 = vmul.f32 %v2670, %v2670
  %v2699 = vmul.f32 %v2671, %v2671
  %v2700 = vmul.f32 %v2672, %v2672
  %v2701 = vmul.f32 %v2673, %v2673
  %v2702 = vmul.f32 %v2674, %v2674
  %v2703 = vmul.f32 %v2675, %v2675
  %v2704 = vmul.f32 %v2676, %v2676
  %v2705 = vadd.f32 %v2693, %v2694
  %v2706 = vadd.f32 %v2705, %v2695
  %v2707 = vadd.f32 %v2706, %v2696
  %v2708 = vadd.f32 %v2707, %v2697
  %v2709 = vadd.f32 %v2708, %v2698
  %2710 = vadd.xlane.f32.xlu0 %v2709
  %v2711 = vpop.xlane.xlu0 %2710
  %v2712 = vadd.f32 %v2699, %v2700
  %v2713 = vadd.f32 %v2712, %v2701
  %v2714 = vadd.f32 %v2713, %v2702
  %v2715 = vadd.f32 %v2714, %v2703
  %v2716 = vadd.f32 %v2715, %v2704
  %2717 = vadd.xlane.f32.xlu0 %v2716
  %v2718 = vpop.xlane.xlu0 %2717
  %v2719 = vmul.f32 %v2711, 0.001953125
  %v2720 = vmul.f32 %v2718, 0.001953125
  %v2721 = vmul.f32 %v2691, %v2691
  %v2722 = vmul.f32 %v2692, %v2692
  %v2723 = vsub.f32 %v2719, %v2721
  %v2724 = vsub.f32 %v2720, %v2722
  %v2725 = vmax.f32 %v2723, 0.0
  %v2726 = vmax.f32 %v2724, 0.0
  %v2727 = vsub.f32 %v2653, %v2691
  %v2728 = vsub.f32 %v2654, %v2691
  %v2729 = vsub.f32 %v2655, %v2691
  %v2730 = vsub.f32 %v2656, %v2691
  %v2731 = vsub.f32 %v2657, %v2691
  %v2732 = vsub.f32 %v2658, %v2691
  %v2733 = vsub.f32 %v2659, %v2692
  %v2734 = vsub.f32 %v2660, %v2692
  %v2735 = vsub.f32 %v2661, %v2692
  %v2736 = vsub.f32 %v2662, %v2692
  %v2737 = vsub.f32 %v2663, %v2692
  %v2738 = vsub.f32 %v2664, %v2692
  %v2739 = vadd.f32 %v2725, 1e-05
  %v2740 = vadd.f32 %v2726, 1e-05
  %v2741 = vrsqrt.pop %v2739
  %v2742 = vmul.f32 %v2741, %v2739
  %v2743 = vmul.f32 %v2742, %v2741
  %v2744 = vmul.f32 0.5, %v2743
  %v2745 = vsub.f32 1.5, %v2744
  %v2746 = vmul.f32 %v2741, %v2745
  %vm2747 = vweird.f32 %v2739
  %vm2748 = vweird.f32 %v2741
  %vm2749 = vmor %vm2747, %vm2748
  %v2750 = vsel %vm2749, %v2741, %v2746
  %v2751 = vrsqrt.pop %v2740
  %v2752 = vmul.f32 %v2751, %v2740
  %v2753 = vmul.f32 %v2752, %v2751
  %v2754 = vmul.f32 0.5, %v2753
  %v2755 = vsub.f32 1.5, %v2754
  %v2756 = vmul.f32 %v2751, %v2755
  %vm2757 = vweird.f32 %v2740
  %vm2758 = vweird.f32 %v2751
  %vm2759 = vmor %vm2757, %vm2758
  %v2760 = vsel %vm2759, %v2751, %v2756
  %v2761 = vld [vmem:[%s5] sm:$0xff]
  %v2762 = vld [vmem:[%s5 + $0x8] sm:$0xff]
  %v2763 = vmul.f32 %v2750, %v2761
  %v2764 = vmul.f32 %v2760, %v2762
  %2766 = vset.pattern.permute.xlu0 0
  %2767 = vperm.xlu0 %2766, %v2763
  %v2768 = vpop.permute.xlu0 %2767
  %2771 = vset.pattern.permute.xlu0 0
  %2772 = vperm.xlu0 %2771, %v2764
  %v2773 = vpop.permute.xlu0 %2772
  %v2775 = vmul.f32 %v2727, %v2768
  %v2776 = vmul.f32 %v2728, %v2768
  %v2777 = vmul.f32 %v2729, %v2768
  %v2778 = vmul.f32 %v2730, %v2768
  %v2779 = vmul.f32 %v2731, %v2768
  %v2780 = vmul.f32 %v2732, %v2768
  %v2781 = vmul.f32 %v2733, %v2773
  %v2782 = vmul.f32 %v2734, %v2773
  %v2783 = vmul.f32 %v2735, %v2773
  %v2784 = vmul.f32 %v2736, %v2773
  %v2785 = vmul.f32 %v2737, %v2773
  %v2786 = vmul.f32 %v2738, %v2773
  %v2787 = vld [vmem:[%s6] sm:$0xff]
  %v2788 = vld [vmem:[%s6 + $0x8] sm:$0xff]
  %2790 = vset.pattern.permute.xlu0 0
  %2791 = vperm.xlu0 %2790, %v2787
  %v2792 = vpop.permute.xlu0 %2791
  %2795 = vset.pattern.permute.xlu0 0
  %2796 = vperm.xlu0 %2795, %v2788
  %v2797 = vpop.permute.xlu0 %2796
  %v2799 = vadd.f32 %v2775, %v2792
  %v2800 = vadd.f32 %v2776, %v2792
  %v2801 = vadd.f32 %v2777, %v2792
  %v2802 = vadd.f32 %v2778, %v2792
  %v2803 = vadd.f32 %v2779, %v2792
  %v2804 = vadd.f32 %v2780, %v2792
  %v2805 = vadd.f32 %v2781, %v2797
  %v2806 = vadd.f32 %v2782, %v2797
  %v2807 = vadd.f32 %v2783, %v2797
  %v2808 = vadd.f32 %v2784, %v2797
  %v2809 = vadd.f32 %v2785, %v2797
  %v2810 = vadd.f32 %v2786, %v2797
  %v2811 = vld [vmem:[%s0 + $0x4] sm:$0xff]
  %v2812 = vld [vmem:[%s0 + $0xc] sm:$0xff]
  %v2813 = vld [vmem:[%s0 + $0x14] sm:$0xff]
  %v2814 = vld [vmem:[%s0 + $0x24] sm:$0xff]
  %v2815 = vld [vmem:[%s0 + $0x2c] sm:$0xff]
  %v2816 = vld [vmem:[%s0 + $0x34] sm:$0xff]
  %v2817 = vunpack.c.l.bf16 %v2811
  %v2818 = vunpack.c.h.bf16 %v2811
  %v2819 = vunpack.c.l.bf16 %v2812
  %v2820 = vunpack.c.h.bf16 %v2812
  %v2821 = vunpack.c.l.bf16 %v2813
  %v2822 = vunpack.c.h.bf16 %v2813
  %v2823 = vunpack.c.l.bf16 %v2814
  %v2824 = vunpack.c.h.bf16 %v2814
  %v2825 = vunpack.c.l.bf16 %v2815
  %v2826 = vunpack.c.h.bf16 %v2815
  %v2827 = vunpack.c.l.bf16 %v2816
  %v2828 = vunpack.c.h.bf16 %v2816
  %v2829 = vadd.f32 %v2799, %v2817
  %v2830 = vadd.f32 %v2800, %v2818
  %v2831 = vadd.f32 %v2801, %v2819
  %v2832 = vadd.f32 %v2802, %v2820
  %v2833 = vadd.f32 %v2803, %v2821
  %v2834 = vadd.f32 %v2804, %v2822
  %v2835 = vadd.f32 %v2805, %v2823
  %v2836 = vadd.f32 %v2806, %v2824
  %v2837 = vadd.f32 %v2807, %v2825
  %v2838 = vadd.f32 %v2808, %v2826
  %v2839 = vadd.f32 %v2809, %v2827
  %v2840 = vadd.f32 %v2810, %v2828
  %v2841 = vmax.f32 %v2829, 0.0
  %v2842 = vmax.f32 %v2830, 0.0
  %v2843 = vmax.f32 %v2831, 0.0
  %v2844 = vmax.f32 %v2832, 0.0
  %v2845 = vmax.f32 %v2833, 0.0
  %v2846 = vmax.f32 %v2834, 0.0
  %v2847 = vmax.f32 %v2835, 0.0
  %v2848 = vmax.f32 %v2836, 0.0
  %v2849 = vmax.f32 %v2837, 0.0
  %v2850 = vmax.f32 %v2838, 0.0
  %v2851 = vmax.f32 %v2839, 0.0
  %v2852 = vmax.f32 %v2840, 0.0
  %2853 = vst [vmem:[%s8] sm:$0xff] %v2841
  %2854 = vst [vmem:[%s8 + $0x8] sm:$0xff] %v2842
  %2855 = vst [vmem:[%s8 + $0x10] sm:$0xff] %v2843
  %2856 = vst [vmem:[%s8 + $0x18] sm:$0xff] %v2844
  %2857 = vst [vmem:[%s8 + $0x20] sm:$0xff] %v2845
  %2858 = vst [vmem:[%s8 + $0x28] sm:$0xff] %v2846
  %2859 = vst [vmem:[%s8 + $0x30] sm:$0xff] %v2847
  %2860 = vst [vmem:[%s8 + $0x38] sm:$0xff] %v2848
  %2861 = vst [vmem:[%s8 + $0x40] sm:$0xff] %v2849
  %2862 = vst [vmem:[%s8 + $0x48] sm:$0xff] %v2850
  %2863 = vst [vmem:[%s8 + $0x50] sm:$0xff] %v2851
  %2864 = vst [vmem:[%s8 + $0x58] sm:$0xff] %v2852
  // Predicated region
  $region34: #{fwd.2} parent=0 // pred_check
    _
  $region35: #{fwd.2} parent=0 // pred_check_branch
    %2866 = sbr.rel (0) target = $region37
  $region36: #{fwd.2} parent=0 // pred_region
    _
  $region37: #{fwd.2} parent=0 // pred_fallthru
    _
  // Predicated region
  $region38: #{fwd.2} parent=0 // pred_check
    _
  $region39: #{fwd.2} parent=0 // pred_check_branch
    %2868 = sbr.rel (0) target = $region41
  $region40: #{fwd.2} parent=0 // pred_region
    _
  $region41: #{fwd.2} parent=0 // pred_fallthru
    _

// kernel: fwd.3
$region0: #{fwd.3}
  #allocation0 [shape = 'u32[]', space=smem, size = 0x4, offset = 0x4, fixed_abs, tag = 'smem constant byte address 0x4 - core index']
  #allocation1 [shape = 'u32[72,128]{1,0:T(1,128)}', space=vmem, size = 0x9000, scoped, tag = 'internal scratch']
  #allocation2 [shape = 'bf16[32,512]{1,0:T(8,128)(2,1)}', space=vmem, size = 0x8000, scoped, tag = 'scratch operand']
  %s0 = inlined_call_operand.vmem [shape: bf16[16,512], index: 0, kind: input, shape index: {}]
  %s1 = inlined_call_operand.vmem [shape: bf16[16,512], index: 1, kind: input, shape index: {}]
  %s2 = inlined_call_operand.vmem [shape: bf16[16,512], index: 2, kind: input, shape index: {}]
  %s3 = inlined_call_operand.vmem [shape: bf16[16,512], index: 3, kind: input, shape index: {}]
  %s4 = inlined_call_operand.vmem [shape: bf16[32,144], index: 4, kind: input, shape index: {}]
  %s5 = inlined_call_operand.vmem [shape: f32[32,1], index: 5, kind: input, shape index: {}]
  %s6 = inlined_call_operand.vmem [shape: f32[32,1], index: 6, kind: input, shape index: {}]
  %s7 = inlined_call_operand.vmem [shape: bf16[32,288], index: 7, kind: input, shape index: {}]
  %s8 = inlined_call_operand.vmem [shape: f32[32,1], index: 8, kind: input, shape index: {}]
  %s9 = inlined_call_operand.vmem [shape: f32[32,1], index: 9, kind: input, shape index: {}]
  %s10 = inlined_call_operand.vmem [shape: f32[1,256], index: 10, kind: input, shape index: {}]
  %s11 = inlined_call_operand.vmem [shape: f32[32,256], index: 11, kind: output, shape index: {}]
  %s12 = sld [smem:[#allocation0]]
  $region54: #{fwd.3} parent=0
    _
  %s14 = ssub.s32 1, %s12
  %s15 = scalar_select 0, %s14, %s12
  // Predicated region
  $region2: #{fwd.3} parent=0 // pred_check
    _
  $region3: #{fwd.3} parent=0 // pred_check_branch
    %17 = sbr.rel (0) target = $region5
  $region4: #{fwd.3} parent=0 // pred_region
    _
  $region5: #{fwd.3} parent=0 // pred_fallthru
    _
  // Predicated region
  $region6: #{fwd.3} parent=0 // pred_check
    _
  $region7: #{fwd.3} parent=0 // pred_check_branch
    %19 = sbr.rel (0) target = $region9
  $region8: #{fwd.3} parent=0 // pred_region
    _
  $region9: #{fwd.3} parent=0 // pred_fallthru
    _
  // Predicated region
  $region10: #{fwd.3} parent=0 // pred_check
    _
  $region11: #{fwd.3} parent=0 // pred_check_branch
    %21 = sbr.rel (0) target = $region13
  $region12: #{fwd.3} parent=0 // pred_region
    _
  $region13: #{fwd.3} parent=0 // pred_fallthru
    _
  // Predicated region
  $region14: #{fwd.3} parent=0 // pred_check
    _
  $region15: #{fwd.3} parent=0 // pred_check_branch
    %23 = sbr.rel (0) target = $region17
  $region16: #{fwd.3} parent=0 // pred_region
    _
  $region17: #{fwd.3} parent=0 // pred_fallthru
    _
  // Predicated region
  $region18: #{fwd.3} parent=0 // pred_check
    _
  $region19: #{fwd.3} parent=0 // pred_check_branch
    %25 = sbr.rel (0) target = $region21
  $region20: #{fwd.3} parent=0 // pred_region
    _
  $region21: #{fwd.3} parent=0 // pred_fallthru
    _
  // Predicated region
  $region22: #{fwd.3} parent=0 // pred_check
    _
  $region23: #{fwd.3} parent=0 // pred_check_branch
    %27 = sbr.rel (0) target = $region25
  $region24: #{fwd.3} parent=0 // pred_region
    _
  $region25: #{fwd.3} parent=0 // pred_fallthru
    _
  // Predicated region
  $region26: #{fwd.3} parent=0 // pred_check
    _
  $region27: #{fwd.3} parent=0 // pred_check_branch
    %29 = sbr.rel (0) target = $region29
  $region28: #{fwd.3} parent=0 // pred_region
    _
  $region29: #{fwd.3} parent=0 // pred_fallthru
    _
  // Predicated region
  $region30: #{fwd.3} parent=0 // pred_check
    _
  $region31: #{fwd.3} parent=0 // pred_check_branch
    %31 = sbr.rel (0) target = $region33
  $region32: #{fwd.3} parent=0 // pred_region
    _
  $region33: #{fwd.3} parent=0 // pred_fallthru
    _
  // Predicated region
  $region34: #{fwd.3} parent=0 // pred_check
    _
  $region35: #{fwd.3} parent=0 // pred_check_branch
    %33 = sbr.rel (0) target = $region37
  $region36: #{fwd.3} parent=0 // pred_region
    _
  $region37: #{fwd.3} parent=0 // pred_fallthru
    _
  // Predicated region
  $region38: #{fwd.3} parent=0 // pred_check
    _
  $region39: #{fwd.3} parent=0 // pred_check_branch
    %35 = sbr.rel (0) target = $region41
  $region40: #{fwd.3} parent=0 // pred_region
    _
  $region41: #{fwd.3} parent=0 // pred_fallthru
    _
  // Predicated region
  $region42: #{fwd.3} parent=0 // pred_check
    _
  $region43: #{fwd.3} parent=0 // pred_check_branch
    %37 = sbr.rel (0) target = $region45
  $region44: #{fwd.3} parent=0 // pred_region
    _
  $region45: #{fwd.3} parent=0 // pred_fallthru
    _
  %v39 = vld [vmem:[%s10] sm:$0x3]
  %v40 = vld [vmem:[%s4] sm:$0xf]
  %v41 = vld [vmem:[%s4 + $0x8] sm:$0xf]
  %v42 = vld [vmem:[%s4 + $0x10] sm:$0xf]
  %v43 = vld [vmem:[%s4 + $0x18] sm:$0xf]
  %v44 = vld [vmem:[%s0] sm:$0xff]
  %v45 = vld [vmem:[%s0 + $0x8] sm:$0xf]
  %v46 = vld [vmem:[%s0 + $0x10] sm:$0xff]
  %v47 = vld [vmem:[%s0 + $0x18] sm:$0xf]
  %v48 = vld [vmem:[%s1] sm:$0xff]
  %v49 = vld [vmem:[%s1 + $0x8] sm:$0xf]
  %v50 = vld [vmem:[%s1 + $0x10] sm:$0xff]
  %v51 = vld [vmem:[%s1 + $0x18] sm:$0xf]
  %v56 = vunpack.c.l.b16 %v40
  %v57 = vunpack.c.l.b16 %v41
  %v58 = vunpack.c.l.b16 %v42
  %v59 = vunpack.c.l.b16 %v43
  %v60 = vpack.c.b16 %v57, %v56
  %v61 = vpack.c.b16 %v59, %v58
  %62 = vrot.lane.b32.xlu0 %v60, 112
  %v63 = vpop.permute.xlu0 %62
  %64 = vrot.lane.b32.xlu0 %v61, 112
  %v65 = vpop.permute.xlu0 %64
  %v70 = vunpack.c.l.b16 %v48
  %v71 = vunpack.c.h.b16 %v48
  %v72 = vunpack.c.l.b16 %v49
  %v73 = vunpack.c.l.b16 %v50
  %v74 = vunpack.c.h.b16 %v50
  %v75 = vunpack.c.l.b16 %v51
  %v76 = vpack.c.b16 %v73, %v70
  %v77 = vpack.c.b16 %v74, %v71
  %v78 = vpack.c.b16 %v75, %v72
  %79 = vrot.lane.b32.xlu0 %v76, 11
  %v80 = vpop.permute.xlu0 %79
  %81 = vrot.lane.b32.xlu0 %v77, 11
  %v82 = vpop.permute.xlu0 %81
  %83 = vrot.lane.b32.xlu0 %v78, 11
  %v84 = vpop.permute.xlu0 %83
  %vm85 = vcmask 89088
  %v86 = vsel %vm85, %v80, %v82
  %v87 = vsel %vm85, %v82, %v84
  %vm90 = vcmask 130048
  %v92 = vsel %vm90, %v63, 0
  %v95 = vsel %vm90, %v65, 0
  %97 = vmatpush.bf16.msra.mxu0 0
  %98 = vmatpush.bf16.msra.mxu0 0
  %99 = vmatpush.bf16.msra.mxu0 0
  %100 = vmatpush.bf16.msra.mxu0 0
  %101 = vmatpush.bf16.msra.mxu0 0
  %102 = vmatpush.bf16.msra.mxu0 0
  %103 = vmatpush.bf16.msra.mxu0 0
  %104 = vmatpush.bf16.msra.mxu0 %v86
  %105 = vmatmul.bf16.gmra.mxu0 %v92
  %v106 = vpop.f32.mrf.mxu0
  %v107 = vadd.f32 0.0, %v106
  %v108 = vpop.f32.mrf.mxu0
  %v109 = vadd.f32 0.0, %v108
  %110 = vmatmul.bf16.gmra.mxu0 %v95
  %v111 = vpop.f32.mrf.mxu0
  %v112 = vadd.f32 0.0, %v111
  %v113 = vpop.f32.mrf.mxu0
  %v114 = vadd.f32 0.0, %v113
  %115 = vdwg.mxu0
  %116 = vmatpush.bf16.msra.mxu0 0
  %117 = vmatpush.bf16.msra.mxu0 0
  %118 = vmatpush.bf16.msra.mxu0 0
  %119 = vmatpush.bf16.msra.mxu0 0
  %120 = vmatpush.bf16.msra.mxu0 0
  %121 = vmatpush.bf16.msra.mxu0 0
  %122 = vmatpush.bf16.msra.mxu0 0
  %123 = vmatpush.bf16.msra.mxu0 %v87
  %124 = vmatmul.bf16.gmra.mxu0 %v92
  %v125 = vpop.f32.mrf.mxu0
  %v126 = vadd.f32 0.0, %v125
  %v127 = vpop.f32.mrf.mxu0
  %v128 = vadd.f32 0.0, %v127
  %129 = vmatmul.bf16.gmra.mxu0 %v95
  %v130 = vpop.f32.mrf.mxu0
  %v131 = vadd.f32 0.0, %v130
  %v132 = vpop.f32.mrf.mxu0
  %v133 = vadd.f32 0.0, %v132
  %134 = vdwg.mxu0
  %v139 = vunpack.c.l.b16 %v44
  %v140 = vunpack.c.h.b16 %v44
  %v141 = vunpack.c.l.b16 %v45
  %v142 = vunpack.c.l.b16 %v46
  %v143 = vunpack.c.h.b16 %v46
  %v144 = vunpack.c.l.b16 %v47
  %v145 = vpack.c.b16 %v142, %v139
  %v146 = vpack.c.b16 %v143, %v140
  %v147 = vpack.c.b16 %v144, %v141
  %148 = vrot.lane.b32.xlu0 %v145, 11
  %v149 = vpop.permute.xlu0 %148
  %150 = vrot.lane.b32.xlu0 %v146, 11
  %v151 = vpop.permute.xlu0 %150
  %152 = vrot.lane.b32.xlu0 %v147, 11
  %v153 = vpop.permute.xlu0 %152
  %v154 = vsel %vm85, %v149, %v151
  %v155 = vsel %vm85, %v151, %v153
  %v159 = vsel %vm90, %v60, 0
  %v162 = vsel %vm90, %v61, 0
  %164 = vmatpush.bf16.msra.mxu0 0
  %165 = vmatpush.bf16.msra.mxu0 0
  %166 = vmatpush.bf16.msra.mxu0 0
  %167 = vmatpush.bf16.msra.mxu0 0
  %168 = vmatpush.bf16.msra.mxu0 0
  %169 = vmatpush.bf16.msra.mxu0 0
  %170 = vmatpush.bf16.msra.mxu0 0
  %171 = vmatpush.bf16.msra.mxu0 %v154
  %172 = vmatmul.bf16.gmra.mxu0 %v159
  %v173 = vpop.f32.mrf.mxu0
  %v174 = vadd.f32 %v107, %v173
  %v175 = vpop.f32.mrf.mxu0
  %v176 = vadd.f32 %v109, %v175
  %177 = vmatmul.bf16.gmra.mxu0 %v162
  %v178 = vpop.f32.mrf.mxu0
  %v179 = vadd.f32 %v112, %v178
  %v180 = vpop.f32.mrf.mxu0
  %v181 = vadd.f32 %v114, %v180
  %182 = vdwg.mxu0
  %183 = vmatpush.bf16.msra.mxu0 0
  %184 = vmatpush.bf16.msra.mxu0 0
  %185 = vmatpush.bf16.msra.mxu0 0
  %186 = vmatpush.bf16.msra.mxu0 0
  %187 = vmatpush.bf16.msra.mxu0 0
  %188 = vmatpush.bf16.msra.mxu0 0
  %189 = vmatpush.bf16.msra.mxu0 0
  %190 = vmatpush.bf16.msra.mxu0 %v155
  %191 = vmatmul.bf16.gmra.mxu0 %v159
  %v192 = vpop.f32.mrf.mxu0
  %v193 = vadd.f32 %v126, %v192
  %v194 = vpop.f32.mrf.mxu0
  %v195 = vadd.f32 %v128, %v194
  %196 = vmatmul.bf16.gmra.mxu0 %v162
  %v197 = vpop.f32.mrf.mxu0
  %v198 = vadd.f32 %v131, %v197
  %v199 = vpop.f32.mrf.mxu0
  %v200 = vadd.f32 %v133, %v199
  %201 = vdwg.mxu0
  %202 = vrot.lane.b32.xlu0 %v60, 96
  %v203 = vpop.permute.xlu0 %202
  %204 = vrot.lane.b32.xlu0 %v61, 96
  %v205 = vpop.permute.xlu0 %204
  %206 = vrot.lane.b32.xlu0 %v145, 10
  %v207 = vpop.permute.xlu0 %206
  %208 = vrot.lane.b32.xlu0 %v146, 10
  %v209 = vpop.permute.xlu0 %208
  %210 = vrot.lane.b32.xlu0 %v147, 10
  %v211 = vpop.permute.xlu0 %210
  %vm212 = vcmask 80896
  %v213 = vsel %vm212, %v207, %v209
  %v214 = vsel %vm212, %v209, %v211
  %v218 = vsel %vm90, %v203, 0
  %v221 = vsel %vm90, %v205, 0
  %223 = vmatpush.bf16.msra.mxu0 0
  %224 = vmatpush.bf16.msra.mxu0 0
  %225 = vmatpush.bf16.msra.mxu0 0
  %226 = vmatpush.bf16.msra.mxu0 0
  %227 = vmatpush.bf16.msra.mxu0 0
  %228 = vmatpush.bf16.msra.mxu0 0
  %229 = vmatpush.bf16.msra.mxu0 0
  %230 = vmatpush.bf16.msra.mxu0 %v213
  %231 = vmatmul.bf16.gmra.mxu0 %v218
  %v232 = vpop.f32.mrf.mxu0
  %v233 = vadd.f32 0.0, %v232
  %v234 = vpop.f32.mrf.mxu0
  %v235 = vadd.f32 0.0, %v234
  %236 = vmatmul.bf16.gmra.mxu0 %v221
  %v237 = vpop.f32.mrf.mxu0
  %v238 = vadd.f32 0.0, %v237
  %v239 = vpop.f32.mrf.mxu0
  %v240 = vadd.f32 0.0, %v239
  %241 = vdwg.mxu0
  %242 = vmatpush.bf16.msra.mxu0 0
  %243 = vmatpush.bf16.msra.mxu0 0
  %244 = vmatpush.bf16.msra.mxu0 0
  %245 = vmatpush.bf16.msra.mxu0 0
  %246 = vmatpush.bf16.msra.mxu0 0
  %247 = vmatpush.bf16.msra.mxu0 0
  %248 = vmatpush.bf16.msra.mxu0 0
  %249 = vmatpush.bf16.msra.mxu0 %v214
  %250 = vmatmul.bf16.gmra.mxu0 %v218
  %v251 = vpop.f32.mrf.mxu0
  %v252 = vadd.f32 0.0, %v251
  %v253 = vpop.f32.mrf.mxu0
  %v254 = vadd.f32 0.0, %v253
  %255 = vmatmul.bf16.gmra.mxu0 %v221
  %v256 = vpop.f32.mrf.mxu0
  %v257 = vadd.f32 0.0, %v256
  %v258 = vpop.f32.mrf.mxu0
  %v259 = vadd.f32 0.0, %v258
  %260 = vdwg.mxu0
  %v261 = vadd.f32 %v174, %v233
  %v262 = vadd.f32 %v193, %v252
  %v263 = vadd.f32 %v176, %v235
  %v264 = vadd.f32 %v195, %v254
  %v265 = vadd.f32 %v179, %v238
  %v266 = vadd.f32 %v198, %v257
  %v267 = vadd.f32 %v181, %v240
  %v268 = vadd.f32 %v200, %v259
  %v269 = vld [vmem:[%s2] sm:$0xff]
  %v270 = vld [vmem:[%s2 + $0x8] sm:$0xf]
  %v271 = vld [vmem:[%s2 + $0x10] sm:$0xff]
  %v272 = vld [vmem:[%s2 + $0x18] sm:$0xf]
  %273 = vrot.lane.b32.xlu0 %v60, 80
  %v274 = vpop.permute.xlu0 %273
  %275 = vrot.lane.b32.xlu0 %v61, 80
  %v276 = vpop.permute.xlu0 %275
  %v281 = vunpack.c.l.b16 %v269
  %v282 = vunpack.c.h.b16 %v269
  %v283 = vunpack.c.l.b16 %v270
  %v284 = vunpack.c.l.b16 %v271
  %v285 = vunpack.c.h.b16 %v271
  %v286 = vunpack.c.l.b16 %v272
  %v287 = vpack.c.b16 %v284, %v281
  %v288 = vpack.c.b16 %v285, %v282
  %v289 = vpack.c.b16 %v286, %v283
  %290 = vrot.lane.b32.xlu0 %v287, 11
  %v291 = vpop.permute.xlu0 %290
  %292 = vrot.lane.b32.xlu0 %v288, 11
  %v293 = vpop.permute.xlu0 %292
  %294 = vrot.lane.b32.xlu0 %v289, 11
  %v295 = vpop.permute.xlu0 %294
  %v296 = vsel %vm85, %v291, %v293
  %v297 = vsel %vm85, %v293, %v295
  %v301 = vsel %vm90, %v274, 0
  %v304 = vsel %vm90, %v276, 0
  %306 = vmatpush.bf16.msra.mxu0 0
  %307 = vmatpush.bf16.msra.mxu0 0
  %308 = vmatpush.bf16.msra.mxu0 0
  %309 = vmatpush.bf16.msra.mxu0 0
  %310 = vmatpush.bf16.msra.mxu0 0
  %311 = vmatpush.bf16.msra.mxu0 0
  %312 = vmatpush.bf16.msra.mxu0 0
  %313 = vmatpush.bf16.msra.mxu0 %v296
  %314 = vmatmul.bf16.gmra.mxu0 %v301
  %v315 = vpop.f32.mrf.mxu0
  %v316 = vadd.f32 0.0, %v315
  %v317 = vpop.f32.mrf.mxu0
  %v318 = vadd.f32 0.0, %v317
  %319 = vmatmul.bf16.gmra.mxu0 %v304
  %v320 = vpop.f32.mrf.mxu0
  %v321 = vadd.f32 0.0, %v320
  %v322 = vpop.f32.mrf.mxu0
  %v323 = vadd.f32 0.0, %v322
  %324 = vdwg.mxu0
  %325 = vmatpush.bf16.msra.mxu0 0
  %326 = vmatpush.bf16.msra.mxu0 0
  %327 = vmatpush.bf16.msra.mxu0 0
  %328 = vmatpush.bf16.msra.mxu0 0
  %329 = vmatpush.bf16.msra.mxu0 0
  %330 = vmatpush.bf16.msra.mxu0 0
  %331 = vmatpush.bf16.msra.mxu0 0
  %332 = vmatpush.bf16.msra.mxu0 %v297
  %333 = vmatmul.bf16.gmra.mxu0 %v301
  %v334 = vpop.f32.mrf.mxu0
  %v335 = vadd.f32 0.0, %v334
  %v336 = vpop.f32.mrf.mxu0
  %v337 = vadd.f32 0.0, %v336
  %338 = vmatmul.bf16.gmra.mxu0 %v304
  %v339 = vpop.f32.mrf.mxu0
  %v340 = vadd.f32 0.0, %v339
  %v341 = vpop.f32.mrf.mxu0
  %v342 = vadd.f32 0.0, %v341
  %343 = vdwg.mxu0
  %v344 = vadd.f32 %v261, %v316
  %v345 = vadd.f32 %v262, %v335
  %v346 = vadd.f32 %v263, %v318
  %v347 = vadd.f32 %v264, %v337
  %v348 = vadd.f32 %v265, %v321
  %v349 = vadd.f32 %v266, %v340
  %v350 = vadd.f32 %v267, %v323
  %v351 = vadd.f32 %v268, %v342
  %v352 = vld [vmem:[%s3] sm:$0xff]
  %v353 = vld [vmem:[%s3 + $0x8] sm:$0xf]
  %v354 = vld [vmem:[%s3 + $0x10] sm:$0xff]
  %v355 = vld [vmem:[%s3 + $0x18] sm:$0xf]
  %356 = vrot.lane.b32.xlu0 %v60, 64
  %v357 = vpop.permute.xlu0 %356
  %358 = vrot.lane.b32.xlu0 %v61, 64
  %v359 = vpop.permute.xlu0 %358
  %v364 = vunpack.c.l.b16 %v352
  %v365 = vunpack.c.h.b16 %v352
  %v366 = vunpack.c.l.b16 %v353
  %v367 = vunpack.c.l.b16 %v354
  %v368 = vunpack.c.h.b16 %v354
  %v369 = vunpack.c.l.b16 %v355
  %v370 = vpack.c.b16 %v367, %v364
  %v371 = vpack.c.b16 %v368, %v365
  %v372 = vpack.c.b16 %v369, %v366
  %373 = vrot.lane.b32.xlu0 %v370, 11
  %v374 = vpop.permute.xlu0 %373
  %375 = vrot.lane.b32.xlu0 %v371, 11
  %v376 = vpop.permute.xlu0 %375
  %377 = vrot.lane.b32.xlu0 %v372, 11
  %v378 = vpop.permute.xlu0 %377
  %v379 = vsel %vm85, %v374, %v376
  %v380 = vsel %vm85, %v376, %v378
  %v384 = vsel %vm90, %v357, 0
  %v387 = vsel %vm90, %v359, 0
  %389 = vmatpush.bf16.msra.mxu0 0
  %390 = vmatpush.bf16.msra.mxu0 0
  %391 = vmatpush.bf16.msra.mxu0 0
  %392 = vmatpush.bf16.msra.mxu0 0
  %393 = vmatpush.bf16.msra.mxu0 0
  %394 = vmatpush.bf16.msra.mxu0 0
  %395 = vmatpush.bf16.msra.mxu0 0
  %396 = vmatpush.bf16.msra.mxu0 %v379
  %397 = vmatmul.bf16.gmra.mxu0 %v384
  %v398 = vpop.f32.mrf.mxu0
  %v399 = vadd.f32 0.0, %v398
  %v400 = vpop.f32.mrf.mxu0
  %v401 = vadd.f32 0.0, %v400
  %402 = vmatmul.bf16.gmra.mxu0 %v387
  %v403 = vpop.f32.mrf.mxu0
  %v404 = vadd.f32 0.0, %v403
  %v405 = vpop.f32.mrf.mxu0
  %v406 = vadd.f32 0.0, %v405
  %407 = vdwg.mxu0
  %408 = vmatpush.bf16.msra.mxu0 0
  %409 = vmatpush.bf16.msra.mxu0 0
  %410 = vmatpush.bf16.msra.mxu0 0
  %411 = vmatpush.bf16.msra.mxu0 0
  %412 = vmatpush.bf16.msra.mxu0 0
  %413 = vmatpush.bf16.msra.mxu0 0
  %414 = vmatpush.bf16.msra.mxu0 0
  %415 = vmatpush.bf16.msra.mxu0 %v380
  %416 = vmatmul.bf16.gmra.mxu0 %v384
  %v417 = vpop.f32.mrf.mxu0
  %v418 = vadd.f32 0.0, %v417
  %v419 = vpop.f32.mrf.mxu0
  %v420 = vadd.f32 0.0, %v419
  %421 = vmatmul.bf16.gmra.mxu0 %v387
  %v422 = vpop.f32.mrf.mxu0
  %v423 = vadd.f32 0.0, %v422
  %v424 = vpop.f32.mrf.mxu0
  %v425 = vadd.f32 0.0, %v424
  %426 = vdwg.mxu0
  %v427 = vadd.f32 %v344, %v399
  %v428 = vadd.f32 %v345, %v418
  %v429 = vadd.f32 %v346, %v401
  %v430 = vadd.f32 %v347, %v420
  %v431 = vadd.f32 %v348, %v404
  %v432 = vadd.f32 %v349, %v423
  %v433 = vadd.f32 %v350, %v406
  %v434 = vadd.f32 %v351, %v425
  %435 = vrot.lane.b32.xlu0 %v60, 48
  %v436 = vpop.permute.xlu0 %435
  %437 = vrot.lane.b32.xlu0 %v61, 48
  %v438 = vpop.permute.xlu0 %437
  %439 = vrot.lane.b32.xlu0 %v287, 10
  %v440 = vpop.permute.xlu0 %439
  %441 = vrot.lane.b32.xlu0 %v288, 10
  %v442 = vpop.permute.xlu0 %441
  %443 = vrot.lane.b32.xlu0 %v289, 10
  %v444 = vpop.permute.xlu0 %443
  %v445 = vsel %vm212, %v440, %v442
  %v446 = vsel %vm212, %v442, %v444
  %v450 = vsel %vm90, %v436, 0
  %v453 = vsel %vm90, %v438, 0
  %455 = vmatpush.bf16.msra.mxu0 0
  %456 = vmatpush.bf16.msra.mxu0 0
  %457 = vmatpush.bf16.msra.mxu0 0
  %458 = vmatpush.bf16.msra.mxu0 0
  %459 = vmatpush.bf16.msra.mxu0 0
  %460 = vmatpush.bf16.msra.mxu0 0
  %461 = vmatpush.bf16.msra.mxu0 0
  %462 = vmatpush.bf16.msra.mxu0 %v445
  %463 = vmatmul.bf16.gmra.mxu0 %v450
  %v464 = vpop.f32.mrf.mxu0
  %v465 = vadd.f32 0.0, %v464
  %v466 = vpop.f32.mrf.mxu0
  %v467 = vadd.f32 0.0, %v466
  %468 = vmatmul.bf16.gmra.mxu0 %v453
  %v469 = vpop.f32.mrf.mxu0
  %v470 = vadd.f32 0.0, %v469
  %v471 = vpop.f32.mrf.mxu0
  %v472 = vadd.f32 0.0, %v471
  %473 = vdwg.mxu0
  %474 = vmatpush.bf16.msra.mxu0 0
  %475 = vmatpush.bf16.msra.mxu0 0
  %476 = vmatpush.bf16.msra.mxu0 0
  %477 = vmatpush.bf16.msra.mxu0 0
  %478 = vmatpush.bf16.msra.mxu0 0
  %479 = vmatpush.bf16.msra.mxu0 0
  %480 = vmatpush.bf16.msra.mxu0 0
  %481 = vmatpush.bf16.msra.mxu0 %v446
  %482 = vmatmul.bf16.gmra.mxu0 %v450
  %v483 = vpop.f32.mrf.mxu0
  %v484 = vadd.f32 0.0, %v483
  %v485 = vpop.f32.mrf.mxu0
  %v486 = vadd.f32 0.0, %v485
  %487 = vmatmul.bf16.gmra.mxu0 %v453
  %v488 = vpop.f32.mrf.mxu0
  %v489 = vadd.f32 0.0, %v488
  %v490 = vpop.f32.mrf.mxu0
  %v491 = vadd.f32 0.0, %v490
  %492 = vdwg.mxu0
  %v493 = vadd.f32 %v427, %v465
  %v494 = vadd.f32 %v428, %v484
  %v495 = vadd.f32 %v429, %v467
  %v496 = vadd.f32 %v430, %v486
  %v497 = vadd.f32 %v431, %v470
  %v498 = vadd.f32 %v432, %v489
  %v499 = vadd.f32 %v433, %v472
  %v500 = vadd.f32 %v434, %v491
  %501 = vrot.lane.b32.xlu0 %v60, 32
  %v502 = vpop.permute.xlu0 %501
  %503 = vrot.lane.b32.xlu0 %v61, 32
  %v504 = vpop.permute.xlu0 %503
  %505 = vrot.lane.b32.xlu0 %v145, 1
  %v506 = vpop.permute.xlu0 %505
  %507 = vrot.lane.b32.xlu0 %v146, 1
  %v508 = vpop.permute.xlu0 %507
  %509 = vrot.lane.b32.xlu0 %v147, 1
  %v510 = vpop.permute.xlu0 %509
  %vm511 = vcmask 7168
  %v512 = vsel %vm511, %v506, %v508
  %v513 = vsel %vm511, %v508, %v510
  %v517 = vsel %vm90, %v502, 0
  %v520 = vsel %vm90, %v504, 0
  %522 = vmatpush.bf16.msra.mxu0 0
  %523 = vmatpush.bf16.msra.mxu0 0
  %524 = vmatpush.bf16.msra.mxu0 0
  %525 = vmatpush.bf16.msra.mxu0 0
  %526 = vmatpush.bf16.msra.mxu0 0
  %527 = vmatpush.bf16.msra.mxu0 0
  %528 = vmatpush.bf16.msra.mxu0 0
  %529 = vmatpush.bf16.msra.mxu0 %v512
  %530 = vmatmul.bf16.gmra.mxu0 %v517
  %v531 = vpop.f32.mrf.mxu0
  %v532 = vadd.f32 0.0, %v531
  %v533 = vpop.f32.mrf.mxu0
  %v534 = vadd.f32 0.0, %v533
  %535 = vmatmul.bf16.gmra.mxu0 %v520
  %v536 = vpop.f32.mrf.mxu0
  %v537 = vadd.f32 0.0, %v536
  %v538 = vpop.f32.mrf.mxu0
  %v539 = vadd.f32 0.0, %v538
  %540 = vdwg.mxu0
  %541 = vmatpush.bf16.msra.mxu0 0
  %542 = vmatpush.bf16.msra.mxu0 0
  %543 = vmatpush.bf16.msra.mxu0 0
  %544 = vmatpush.bf16.msra.mxu0 0
  %545 = vmatpush.bf16.msra.mxu0 0
  %546 = vmatpush.bf16.msra.mxu0 0
  %547 = vmatpush.bf16.msra.mxu0 0
  %548 = vmatpush.bf16.msra.mxu0 %v513
  %549 = vmatmul.bf16.gmra.mxu0 %v517
  %v550 = vpop.f32.mrf.mxu0
  %v551 = vadd.f32 0.0, %v550
  %v552 = vpop.f32.mrf.mxu0
  %v553 = vadd.f32 0.0, %v552
  %554 = vmatmul.bf16.gmra.mxu0 %v520
  %v555 = vpop.f32.mrf.mxu0
  %v556 = vadd.f32 0.0, %v555
  %v557 = vpop.f32.mrf.mxu0
  %v558 = vadd.f32 0.0, %v557
  %559 = vdwg.mxu0
  %v560 = vadd.f32 %v493, %v532
  %v561 = vadd.f32 %v494, %v551
  %v562 = vadd.f32 %v495, %v534
  %v563 = vadd.f32 %v496, %v553
  %v564 = vadd.f32 %v497, %v537
  %v565 = vadd.f32 %v498, %v556
  %v566 = vadd.f32 %v499, %v539
  %v567 = vadd.f32 %v500, %v558
  %568 = vrot.lane.b32.xlu0 %v60, 16
  %v569 = vpop.permute.xlu0 %568
  %570 = vrot.lane.b32.xlu0 %v61, 16
  %v571 = vpop.permute.xlu0 %570
  %572 = vrot.lane.b32.xlu0 %v76, 1
  %v573 = vpop.permute.xlu0 %572
  %574 = vrot.lane.b32.xlu0 %v77, 1
  %v575 = vpop.permute.xlu0 %574
  %576 = vrot.lane.b32.xlu0 %v78, 1
  %v577 = vpop.permute.xlu0 %576
  %v578 = vsel %vm511, %v573, %v575
  %v579 = vsel %vm511, %v575, %v577
  %v583 = vsel %vm90, %v569, 0
  %v586 = vsel %vm90, %v571, 0
  %588 = vmatpush.bf16.msra.mxu0 0
  %589 = vmatpush.bf16.msra.mxu0 0
  %590 = vmatpush.bf16.msra.mxu0 0
  %591 = vmatpush.bf16.msra.mxu0 0
  %592 = vmatpush.bf16.msra.mxu0 0
  %593 = vmatpush.bf16.msra.mxu0 0
  %594 = vmatpush.bf16.msra.mxu0 0
  %595 = vmatpush.bf16.msra.mxu0 %v578
  %596 = vmatmul.bf16.gmra.mxu0 %v583
  %v597 = vpop.f32.mrf.mxu0
  %v598 = vadd.f32 0.0, %v597
  %v599 = vpop.f32.mrf.mxu0
  %v600 = vadd.f32 0.0, %v599
  %601 = vmatmul.bf16.gmra.mxu0 %v586
  %v602 = vpop.f32.mrf.mxu0
  %v603 = vadd.f32 0.0, %v602
  %v604 = vpop.f32.mrf.mxu0
  %v605 = vadd.f32 0.0, %v604
  %606 = vdwg.mxu0
  %607 = vmatpush.bf16.msra.mxu0 0
  %608 = vmatpush.bf16.msra.mxu0 0
  %609 = vmatpush.bf16.msra.mxu0 0
  %610 = vmatpush.bf16.msra.mxu0 0
  %611 = vmatpush.bf16.msra.mxu0 0
  %612 = vmatpush.bf16.msra.mxu0 0
  %613 = vmatpush.bf16.msra.mxu0 0
  %614 = vmatpush.bf16.msra.mxu0 %v579
  %615 = vmatmul.bf16.gmra.mxu0 %v583
  %v616 = vpop.f32.mrf.mxu0
  %v617 = vadd.f32 0.0, %v616
  %v618 = vpop.f32.mrf.mxu0
  %v619 = vadd.f32 0.0, %v618
  %620 = vmatmul.bf16.gmra.mxu0 %v586
  %v621 = vpop.f32.mrf.mxu0
  %v622 = vadd.f32 0.0, %v621
  %v623 = vpop.f32.mrf.mxu0
  %v624 = vadd.f32 0.0, %v623
  %625 = vdwg.mxu0
  %v626 = vadd.f32 %v560, %v598
  %v627 = vadd.f32 %v561, %v617
  %v628 = vadd.f32 %v562, %v600
  %v629 = vadd.f32 %v563, %v619
  %v630 = vadd.f32 %v564, %v603
  %v631 = vadd.f32 %v565, %v622
  %v632 = vadd.f32 %v566, %v605
  %v633 = vadd.f32 %v567, %v624
  %v634 = vld [vmem:[%s4 + $0x4] sm:$0xf]
  %v635 = vld [vmem:[%s4 + $0xc] sm:$0xf]
  %v636 = vld [vmem:[%s4 + $0x14] sm:$0xf]
  %v637 = vld [vmem:[%s4 + $0x1c] sm:$0xf]
  %v638 = vld [vmem:[%s0 + $0x4] sm:$0xff]
  %v639 = vld [vmem:[%s0 + $0x14] sm:$0xff]
  %v644 = vunpack.c.l.b16 %v634
  %v645 = vunpack.c.l.b16 %v635
  %v646 = vunpack.c.l.b16 %v636
  %v647 = vunpack.c.l.b16 %v637
  %v648 = vpack.c.b16 %v645, %v644
  %v649 = vpack.c.b16 %v647, %v646
  %v652 = vunpack.c.l.b16 %v638
  %v653 = vunpack.c.h.b16 %v638
  %v654 = vunpack.c.l.b16 %v639
  %v655 = vunpack.c.h.b16 %v639
  %v656 = vpack.c.b16 %v654, %v652
  %v657 = vpack.c.b16 %v655, %v653
  %v661 = vsel %vm90, %v648, 0
  %v664 = vsel %vm90, %v649, 0
  %666 = vmatpush.bf16.msra.mxu0 0
  %667 = vmatpush.bf16.msra.mxu0 0
  %668 = vmatpush.bf16.msra.mxu0 0
  %669 = vmatpush.bf16.msra.mxu0 0
  %670 = vmatpush.bf16.msra.mxu0 0
  %671 = vmatpush.bf16.msra.mxu0 0
  %672 = vmatpush.bf16.msra.mxu0 0
  %673 = vmatpush.bf16.msra.mxu0 %v656
  %674 = vmatmul.bf16.gmra.mxu0 %v661
  %v675 = vpop.f32.mrf.mxu0
  %v676 = vadd.f32 0.0, %v675
  %v677 = vpop.f32.mrf.mxu0
  %v678 = vadd.f32 0.0, %v677
  %679 = vmatmul.bf16.gmra.mxu0 %v664
  %v680 = vpop.f32.mrf.mxu0
  %v681 = vadd.f32 0.0, %v680
  %v682 = vpop.f32.mrf.mxu0
  %v683 = vadd.f32 0.0, %v682
  %684 = vdwg.mxu0
  %685 = vmatpush.bf16.msra.mxu0 0
  %686 = vmatpush.bf16.msra.mxu0 0
  %687 = vmatpush.bf16.msra.mxu0 0
  %688 = vmatpush.bf16.msra.mxu0 0
  %689 = vmatpush.bf16.msra.mxu0 0
  %690 = vmatpush.bf16.msra.mxu0 0
  %691 = vmatpush.bf16.msra.mxu0 0
  %692 = vmatpush.bf16.msra.mxu0 %v657
  %693 = vmatmul.bf16.gmra.mxu0 %v661
  %v694 = vpop.f32.mrf.mxu0
  %v695 = vadd.f32 0.0, %v694
  %v696 = vpop.f32.mrf.mxu0
  %v697 = vadd.f32 0.0, %v696
  %698 = vmatmul.bf16.gmra.mxu0 %v664
  %v699 = vpop.f32.mrf.mxu0
  %v700 = vadd.f32 0.0, %v699
  %v701 = vpop.f32.mrf.mxu0
  %v702 = vadd.f32 0.0, %v701
  %703 = vdwg.mxu0
  %v704 = vadd.f32 %v626, %v676
  %v705 = vadd.f32 %v627, %v695
  %v706 = vadd.f32 %v628, %v678
  %v707 = vadd.f32 %v629, %v697
  %v708 = vadd.f32 %v630, %v681
  %v709 = vadd.f32 %v631, %v700
  %v710 = vadd.f32 %v632, %v683
  %v711 = vadd.f32 %v633, %v702
  %v713 = vperm.slane %v39, 0
  %v714 = vperm.slane %v39, 1
  %v717 = vmul.f32 %v704, %v713
  %v718 = vmul.f32 %v705, %v714
  %v719 = vmul.f32 %v706, %v713
  %v720 = vmul.f32 %v707, %v714
  %v721 = vmul.f32 %v708, %v713
  %v722 = vmul.f32 %v709, %v714
  %v723 = vmul.f32 %v710, %v713
  %v724 = vmul.f32 %v711, %v714
  %v725 = vadd.f32 %v717, %v718
  %726 = vadd.xlane.f32.xlu0 %v725
  %v727 = vpop.xlane.xlu0 %726
  %v728 = vadd.f32 %v719, %v720
  %729 = vadd.xlane.f32.xlu0 %v728
  %v730 = vpop.xlane.xlu0 %729
  %v731 = vadd.f32 %v721, %v722
  %732 = vadd.xlane.f32.xlu0 %v731
  %v733 = vpop.xlane.xlu0 %732
  %v734 = vadd.f32 %v723, %v724
  %735 = vadd.xlane.f32.xlu0 %v734
  %v736 = vpop.xlane.xlu0 %735
  %v737 = vmul.f32 %v727, 0.0078125
  %v738 = vmul.f32 %v730, 0.0078125
  %v739 = vmul.f32 %v733, 0.0078125
  %v740 = vmul.f32 %v736, 0.0078125
  %v741 = vmul.f32 %v717, %v717
  %v742 = vmul.f32 %v718, %v718
  %v743 = vmul.f32 %v719, %v719
  %v744 = vmul.f32 %v720, %v720
  %v745 = vmul.f32 %v721, %v721
  %v746 = vmul.f32 %v722, %v722
  %v747 = vmul.f32 %v723, %v723
  %v748 = vmul.f32 %v724, %v724
  %v749 = vadd.f32 %v741, %v742
  %750 = vadd.xlane.f32.xlu0 %v749
  %v751 = vpop.xlane.xlu0 %750
  %v752 = vadd.f32 %v743, %v744
  %753 = vadd.xlane.f32.xlu0 %v752
  %v754 = vpop.xlane.xlu0 %753
  %v755 = vadd.f32 %v745, %v746
  %756 = vadd.xlane.f32.xlu0 %v755
  %v757 = vpop.xlane.xlu0 %756
  %v758 = vadd.f32 %v747, %v748
  %759 = vadd.xlane.f32.xlu0 %v758
  %v760 = vpop.xlane.xlu0 %759
  %v761 = vmul.f32 %v751, 0.0078125
  %v762 = vmul.f32 %v754, 0.0078125
  %v763 = vmul.f32 %v757, 0.0078125
  %v764 = vmul.f32 %v760, 0.0078125
  %v765 = vmul.f32 %v737, %v737
  %v766 = vmul.f32 %v738, %v738
  %v767 = vmul.f32 %v739, %v739
  %v768 = vmul.f32 %v740, %v740
  %v769 = vsub.f32 %v761, %v765
  %v770 = vsub.f32 %v762, %v766
  %v771 = vsub.f32 %v763, %v767
  %v772 = vsub.f32 %v764, %v768
  %v773 = vmax.f32 %v769, 0.0
  %v774 = vmax.f32 %v770, 0.0
  %v775 = vmax.f32 %v771, 0.0
  %v776 = vmax.f32 %v772, 0.0
  %v777 = vsub.f32 %v704, %v737
  %v778 = vsub.f32 %v705, %v737
  %v779 = vsub.f32 %v706, %v738
  %v780 = vsub.f32 %v707, %v738
  %v781 = vsub.f32 %v708, %v739
  %v782 = vsub.f32 %v709, %v739
  %v783 = vsub.f32 %v710, %v740
  %v784 = vsub.f32 %v711, %v740
  %v785 = vadd.f32 %v773, 1e-05
  %v786 = vadd.f32 %v774, 1e-05
  %v787 = vadd.f32 %v775, 1e-05
  %v788 = vadd.f32 %v776, 1e-05
  %v789 = vrsqrt.pop %v785
  %v790 = vmul.f32 %v789, %v785
  %v791 = vmul.f32 %v790, %v789
  %v792 = vmul.f32 0.5, %v791
  %v793 = vsub.f32 1.5, %v792
  %v794 = vmul.f32 %v789, %v793
  %vm795 = vweird.f32 %v785
  %vm796 = vweird.f32 %v789
  %vm797 = vmor %vm795, %vm796
  %v798 = vsel %vm797, %v789, %v794
  %v799 = vrsqrt.pop %v786
  %v800 = vmul.f32 %v799, %v786
  %v801 = vmul.f32 %v800, %v799
  %v802 = vmul.f32 0.5, %v801
  %v803 = vsub.f32 1.5, %v802
  %v804 = vmul.f32 %v799, %v803
  %vm805 = vweird.f32 %v786
  %vm806 = vweird.f32 %v799
  %vm807 = vmor %vm805, %vm806
  %v808 = vsel %vm807, %v799, %v804
  %v809 = vrsqrt.pop %v787
  %v810 = vmul.f32 %v809, %v787
  %v811 = vmul.f32 %v810, %v809
  %v812 = vmul.f32 0.5, %v811
  %v813 = vsub.f32 1.5, %v812
  %v814 = vmul.f32 %v809, %v813
  %vm815 = vweird.f32 %v787
  %vm816 = vweird.f32 %v809
  %vm817 = vmor %vm815, %vm816
  %v818 = vsel %vm817, %v809, %v814
  %v819 = vrsqrt.pop %v788
  %v820 = vmul.f32 %v819, %v788
  %v821 = vmul.f32 %v820, %v819
  %v822 = vmul.f32 0.5, %v821
  %v823 = vsub.f32 1.5, %v822
  %v824 = vmul.f32 %v819, %v823
  %vm825 = vweird.f32 %v788
  %vm826 = vweird.f32 %v819
  %vm827 = vmor %vm825, %vm826
  %v828 = vsel %vm827, %v819, %v824
  %v829 = vld [vmem:[%s5] sm:$0xff]
  %v830 = vld [vmem:[%s5 + $0x8] sm:$0xff]
  %v831 = vld [vmem:[%s5 + $0x10] sm:$0xff]
  %v832 = vld [vmem:[%s5 + $0x18] sm:$0xff]
  %v833 = vmul.f32 %v798, %v829
  %v834 = vmul.f32 %v808, %v830
  %v835 = vmul.f32 %v818, %v831
  %v836 = vmul.f32 %v828, %v832
  %838 = vset.pattern.permute.xlu0 0
  %839 = vperm.xlu0 %838, %v833
  %v840 = vpop.permute.xlu0 %839
  %843 = vset.pattern.permute.xlu0 0
  %844 = vperm.xlu0 %843, %v834
  %v845 = vpop.permute.xlu0 %844
  %848 = vset.pattern.permute.xlu0 0
  %849 = vperm.xlu0 %848, %v835
  %v850 = vpop.permute.xlu0 %849
  %853 = vset.pattern.permute.xlu0 0
  %854 = vperm.xlu0 %853, %v836
  %v855 = vpop.permute.xlu0 %854
  %v857 = vmul.f32 %v777, %v840
  %v858 = vmul.f32 %v778, %v840
  %v859 = vmul.f32 %v779, %v845
  %v860 = vmul.f32 %v780, %v845
  %v861 = vmul.f32 %v781, %v850
  %v862 = vmul.f32 %v782, %v850
  %v863 = vmul.f32 %v783, %v855
  %v864 = vmul.f32 %v784, %v855
  %v865 = vld [vmem:[%s6] sm:$0xff]
  %v866 = vld [vmem:[%s6 + $0x8] sm:$0xff]
  %v867 = vld [vmem:[%s6 + $0x10] sm:$0xff]
  %v868 = vld [vmem:[%s6 + $0x18] sm:$0xff]
  %870 = vset.pattern.permute.xlu0 0
  %871 = vperm.xlu0 %870, %v865
  %v872 = vpop.permute.xlu0 %871
  %875 = vset.pattern.permute.xlu0 0
  %876 = vperm.xlu0 %875, %v866
  %v877 = vpop.permute.xlu0 %876
  %880 = vset.pattern.permute.xlu0 0
  %881 = vperm.xlu0 %880, %v867
  %v882 = vpop.permute.xlu0 %881
  %885 = vset.pattern.permute.xlu0 0
  %886 = vperm.xlu0 %885, %v868
  %v887 = vpop.permute.xlu0 %886
  %v889 = vadd.f32 %v857, %v872
  %v890 = vadd.f32 %v858, %v872
  %v891 = vadd.f32 %v859, %v877
  %v892 = vadd.f32 %v860, %v877
  %v893 = vadd.f32 %v861, %v882
  %v894 = vadd.f32 %v862, %v882
  %v895 = vadd.f32 %v863, %v887
  %v896 = vadd.f32 %v864, %v887
  %v897 = vmax.f32 %v889, 0.0
  %v898 = vmax.f32 %v890, 0.0
  %v899 = vmax.f32 %v891, 0.0
  %v900 = vmax.f32 %v892, 0.0
  %v901 = vmax.f32 %v893, 0.0
  %v902 = vmax.f32 %v894, 0.0
  %v903 = vmax.f32 %v895, 0.0
  %v904 = vmax.f32 %v896, 0.0
  %v905 = vmul.f32 %v897, %v713
  %v906 = vmul.f32 %v898, %v714
  %v907 = vmul.f32 %v899, %v713
  %v908 = vmul.f32 %v900, %v714
  %v909 = vmul.f32 %v901, %v713
  %v910 = vmul.f32 %v902, %v714
  %v911 = vmul.f32 %v903, %v713
  %v912 = vmul.f32 %v904, %v714
  %913 = vst [vmem:[#allocation2] sm:$0xf] 0
  %914 = vst [vmem:[#allocation2 + $0x10] sm:$0xf] 0
  %915 = vst [vmem:[#allocation2 + $0x20] sm:$0xf] 0
  %916 = vst [vmem:[#allocation2 + $0x30] sm:$0xf] 0
  %917 = vst [vmem:[#allocation2 + $0xc] sm:$0xf] 0
  %918 = vst [vmem:[#allocation2 + $0x1c] sm:$0xf] 0
  %919 = vst [vmem:[#allocation2 + $0x2c] sm:$0xf] 0
  %920 = vst [vmem:[#allocation2 + $0x3c] sm:$0xf] 0
  %v921 = vpack.c.bf16 %v906, %v905
  %v922 = vpack.c.bf16 %v908, %v907
  %v923 = vpack.c.bf16 %v910, %v909
  %v924 = vpack.c.bf16 %v912, %v911
  %925 = vst [vmem:[#allocation2 + $0x4] sm:$0xff] %v921
  %926 = vst [vmem:[#allocation2 + $0x14] sm:$0xff] %v922
  %927 = vst [vmem:[#allocation2 + $0x24] sm:$0xff] %v923
  %928 = vst [vmem:[#allocation2 + $0x34] sm:$0xff] %v924
  %v929 = vld [vmem:[%s7] sm:$0xf]
  %v930 = vld [vmem:[%s7 + $0xc] sm:$0xf]
  %v931 = vld [vmem:[%s7 + $0x18] sm:$0xf]
  %v932 = vld [vmem:[%s7 + $0x24] sm:$0xf]
  %v933 = vld [vmem:[#allocation2] sm:$0xff]
  %v934 = vld [vmem:[#allocation2 + $0x8] sm:$0xf]
  %v935 = vld [vmem:[#allocation2 + $0x10] sm:$0xff]
  %v936 = vld [vmem:[#allocation2 + $0x18] sm:$0xf]
  %v937 = vld [vmem:[#allocation2 + $0x20] sm:$0xff]
  %v938 = vld [vmem:[#allocation2 + $0x28] sm:$0xf]
  %v939 = vld [vmem:[#allocation2 + $0x30] sm:$0xff]
  %v940 = vld [vmem:[#allocation2 + $0x38] sm:$0xf]
  %v945 = vunpack.c.l.b16 %v929
  %v946 = vunpack.c.l.b16 %v930
  %v947 = vunpack.c.l.b16 %v931
  %v948 = vunpack.c.l.b16 %v932
  %v949 = vpack.c.b16 %v946, %v945
  %v950 = vpack.c.b16 %v948, %v947
  %951 = vrot.lane.b32.xlu0 %v949, 96
  %v952 = vpop.permute.xlu0 %951
  %953 = vrot.lane.b32.xlu0 %v950, 96
  %v954 = vpop.permute.xlu0 %953
  %v963 = vunpack.c.l.b16 %v933
  %v964 = vunpack.c.h.b16 %v933
  %v965 = vunpack.c.l.b16 %v934
  %v966 = vunpack.c.l.b16 %v935
  %v967 = vunpack.c.h.b16 %v935
  %v968 = vunpack.c.l.b16 %v936
  %v969 = vunpack.c.l.b16 %v937
  %v970 = vunpack.c.h.b16 %v937
  %v971 = vunpack.c.l.b16 %v938
  %v972 = vunpack.c.l.b16 %v939
  %v973 = vunpack.c.h.b16 %v939
  %v974 = vunpack.c.l.b16 %v940
  %v975 = vpack.c.b16 %v966, %v963
  %v976 = vpack.c.b16 %v967, %v964
  %v977 = vpack.c.b16 %v968, %v965
  %v978 = vpack.c.b16 %v972, %v969
  %v979 = vpack.c.b16 %v973, %v970
  %v980 = vpack.c.b16 %v974, %v971
  %981 = vrot.lane.b32.xlu0 %v975, 10
  %v982 = vpop.permute.xlu0 %981
  %983 = vrot.lane.b32.xlu0 %v976, 10
  %v984 = vpop.permute.xlu0 %983
  %985 = vrot.lane.b32.xlu0 %v977, 10
  %v986 = vpop.permute.xlu0 %985
  %987 = vrot.lane.b32.xlu0 %v978, 10
  %v988 = vpop.permute.xlu0 %987
  %989 = vrot.lane.b32.xlu0 %v979, 10
  %v990 = vpop.permute.xlu0 %989
  %991 = vrot.lane.b32.xlu0 %v980, 10
  %v992 = vpop.permute.xlu0 %991
  %v993 = vsel %vm212, %v982, %v984
  %v994 = vsel %vm212, %v984, %v986
  %v995 = vsel %vm212, %v988, %v990
  %v996 = vsel %vm212, %v990, %v992
  %vm1001 = vcmask 261120
  %v1003 = vsel %vm1001, %v952, 0
  %v1006 = vsel %vm1001, %v954, 0
  %1008 = vmatpush.bf16.msra.mxu0 0
  %1009 = vmatpush.bf16.msra.mxu0 0
  %1010 = vmatpush.bf16.msra.mxu0 0
  %1011 = vmatpush.bf16.msra.mxu0 0
  %1012 = vmatpush.bf16.msra.mxu0 0
  %1013 = vmatpush.bf16.msra.mxu0 0
  %1014 = vmatpush.bf16.msra.mxu0 %v995
  %1015 = vmatpush.bf16.msra.mxu0 %v993
  %1016 = vmatmul.bf16.gmra.mxu0 %v1003
  %v1017 = vpop.f32.mrf.mxu0
  %v1018 = vadd.f32 0.0, %v1017
  %v1019 = vpop.f32.mrf.mxu0
  %v1020 = vadd.f32 0.0, %v1019
  %1021 = vmatmul.bf16.gmra.mxu0 %v1006
  %v1022 = vpop.f32.mrf.mxu0
  %v1023 = vadd.f32 0.0, %v1022
  %v1024 = vpop.f32.mrf.mxu0
  %v1025 = vadd.f32 0.0, %v1024
  %1026 = vdwg.mxu0
  %1027 = vmatpush.bf16.msra.mxu0 0
  %1028 = vmatpush.bf16.msra.mxu0 0
  %1029 = vmatpush.bf16.msra.mxu0 0
  %1030 = vmatpush.bf16.msra.mxu0 0
  %1031 = vmatpush.bf16.msra.mxu0 0
  %1032 = vmatpush.bf16.msra.mxu0 0
  %1033 = vmatpush.bf16.msra.mxu0 %v996
  %1034 = vmatpush.bf16.msra.mxu0 %v994
  %1035 = vmatmul.bf16.gmra.mxu0 %v1003
  %v1036 = vpop.f32.mrf.mxu0
  %v1037 = vadd.f32 0.0, %v1036
  %v1038 = vpop.f32.mrf.mxu0
  %v1039 = vadd.f32 0.0, %v1038
  %1040 = vmatmul.bf16.gmra.mxu0 %v1006
  %v1041 = vpop.f32.mrf.mxu0
  %v1042 = vadd.f32 0.0, %v1041
  %v1043 = vpop.f32.mrf.mxu0
  %v1044 = vadd.f32 0.0, %v1043
  %1045 = vdwg.mxu0
  %1046 = vrot.lane.b32.xlu0 %v975, 11
  %v1047 = vpop.permute.xlu0 %1046
  %1048 = vrot.lane.b32.xlu0 %v976, 11
  %v1049 = vpop.permute.xlu0 %1048
  %1050 = vrot.lane.b32.xlu0 %v977, 11
  %v1051 = vpop.permute.xlu0 %1050
  %1052 = vrot.lane.b32.xlu0 %v978, 11
  %v1053 = vpop.permute.xlu0 %1052
  %1054 = vrot.lane.b32.xlu0 %v979, 11
  %v1055 = vpop.permute.xlu0 %1054
  %1056 = vrot.lane.b32.xlu0 %v980, 11
  %v1057 = vpop.permute.xlu0 %1056
  %v1058 = vsel %vm85, %v1047, %v1049
  %v1059 = vsel %vm85, %v1049, %v1051
  %v1060 = vsel %vm85, %v1053, %v1055
  %v1061 = vsel %vm85, %v1055, %v1057
  %v1067 = vsel %vm1001, %v949, 0
  %v1070 = vsel %vm1001, %v950, 0
  %1072 = vmatpush.bf16.msra.mxu0 0
  %1073 = vmatpush.bf16.msra.mxu0 0
  %1074 = vmatpush.bf16.msra.mxu0 0
  %1075 = vmatpush.bf16.msra.mxu0 0
  %1076 = vmatpush.bf16.msra.mxu0 0
  %1077 = vmatpush.bf16.msra.mxu0 0
  %1078 = vmatpush.bf16.msra.mxu0 %v1060
  %1079 = vmatpush.bf16.msra.mxu0 %v1058
  %1080 = vmatmul.bf16.gmra.mxu0 %v1067
  %v1081 = vpop.f32.mrf.mxu0
  %v1082 = vadd.f32 %v1018, %v1081
  %v1083 = vpop.f32.mrf.mxu0
  %v1084 = vadd.f32 %v1020, %v1083
  %1085 = vmatmul.bf16.gmra.mxu0 %v1070
  %v1086 = vpop.f32.mrf.mxu0
  %v1087 = vadd.f32 %v1023, %v1086
  %v1088 = vpop.f32.mrf.mxu0
  %v1089 = vadd.f32 %v1025, %v1088
  %1090 = vdwg.mxu0
  %1091 = vmatpush.bf16.msra.mxu0 0
  %1092 = vmatpush.bf16.msra.mxu0 0
  %1093 = vmatpush.bf16.msra.mxu0 0
  %1094 = vmatpush.bf16.msra.mxu0 0
  %1095 = vmatpush.bf16.msra.mxu0 0
  %1096 = vmatpush.bf16.msra.mxu0 0
  %1097 = vmatpush.bf16.msra.mxu0 %v1061
  %1098 = vmatpush.bf16.msra.mxu0 %v1059
  %1099 = vmatmul.bf16.gmra.mxu0 %v1067
  %v1100 = vpop.f32.mrf.mxu0
  %v1101 = vadd.f32 %v1037, %v1100
  %v1102 = vpop.f32.mrf.mxu0
  %v1103 = vadd.f32 %v1039, %v1102
  %1104 = vmatmul.bf16.gmra.mxu0 %v1070
  %v1105 = vpop.f32.mrf.mxu0
  %v1106 = vadd.f32 %v1042, %v1105
  %v1107 = vpop.f32.mrf.mxu0
  %v1108 = vadd.f32 %v1044, %v1107
  %1109 = vdwg.mxu0
  %1110 = vrot.lane.b32.xlu0 %v949, 64
  %v1111 = vpop.permute.xlu0 %1110
  %1112 = vrot.lane.b32.xlu0 %v950, 64
  %v1113 = vpop.permute.xlu0 %1112
  %1114 = vrot.lane.b32.xlu0 %v975, 9
  %v1115 = vpop.permute.xlu0 %1114
  %1116 = vrot.lane.b32.xlu0 %v976, 9
  %v1117 = vpop.permute.xlu0 %1116
  %1118 = vrot.lane.b32.xlu0 %v977, 9
  %v1119 = vpop.permute.xlu0 %1118
  %1120 = vrot.lane.b32.xlu0 %v978, 9
  %v1121 = vpop.permute.xlu0 %1120
  %1122 = vrot.lane.b32.xlu0 %v979, 9
  %v1123 = vpop.permute.xlu0 %1122
  %1124 = vrot.lane.b32.xlu0 %v980, 9
  %v1125 = vpop.permute.xlu0 %1124
  %vm1126 = vcmask 72704
  %v1127 = vsel %vm1126, %v1115, %v1117
  %v1128 = vsel %vm1126, %v1117, %v1119
  %v1129 = vsel %vm1126, %v1121, %v1123
  %v1130 = vsel %vm1126, %v1123, %v1125
  %v1136 = vsel %vm1001, %v1111, 0
  %v1139 = vsel %vm1001, %v1113, 0
  %1141 = vmatpush.bf16.msra.mxu0 0
  %1142 = vmatpush.bf16.msra.mxu0 0
  %1143 = vmatpush.bf16.msra.mxu0 0
  %1144 = vmatpush.bf16.msra.mxu0 0
  %1145 = vmatpush.bf16.msra.mxu0 0
  %1146 = vmatpush.bf16.msra.mxu0 0
  %1147 = vmatpush.bf16.msra.mxu0 %v1129
  %1148 = vmatpush.bf16.msra.mxu0 %v1127
  %1149 = vmatmul.bf16.gmra.mxu0 %v1136
  %v1150 = vpop.f32.mrf.mxu0
  %v1151 = vadd.f32 0.0, %v1150
  %v1152 = vpop.f32.mrf.mxu0
  %v1153 = vadd.f32 0.0, %v1152
  %1154 = vmatmul.bf16.gmra.mxu0 %v1139
  %v1155 = vpop.f32.mrf.mxu0
  %v1156 = vadd.f32 0.0, %v1155
  %v1157 = vpop.f32.mrf.mxu0
  %v1158 = vadd.f32 0.0, %v1157
  %1159 = vdwg.mxu0
  %1160 = vmatpush.bf16.msra.mxu0 0
  %1161 = vmatpush.bf16.msra.mxu0 0
  %1162 = vmatpush.bf16.msra.mxu0 0
  %1163 = vmatpush.bf16.msra.mxu0 0
  %1164 = vmatpush.bf16.msra.mxu0 0
  %1165 = vmatpush.bf16.msra.mxu0 0
  %1166 = vmatpush.bf16.msra.mxu0 %v1130
  %1167 = vmatpush.bf16.msra.mxu0 %v1128
  %1168 = vmatmul.bf16.gmra.mxu0 %v1136
  %v1169 = vpop.f32.mrf.mxu0
  %v1170 = vadd.f32 0.0, %v1169
  %v1171 = vpop.f32.mrf.mxu0
  %v1172 = vadd.f32 0.0, %v1171
  %1173 = vmatmul.bf16.gmra.mxu0 %v1139
  %v1174 = vpop.f32.mrf.mxu0
  %v1175 = vadd.f32 0.0, %v1174
  %v1176 = vpop.f32.mrf.mxu0
  %v1177 = vadd.f32 0.0, %v1176
  %1178 = vdwg.mxu0
  %v1179 = vadd.f32 %v1082, %v1151
  %v1180 = vadd.f32 %v1101, %v1170
  %v1181 = vadd.f32 %v1084, %v1153
  %v1182 = vadd.f32 %v1103, %v1172
  %v1183 = vadd.f32 %v1087, %v1156
  %v1184 = vadd.f32 %v1106, %v1175
  %v1185 = vadd.f32 %v1089, %v1158
  %v1186 = vadd.f32 %v1108, %v1177
  %1187 = vrot.lane.b32.xlu0 %v949, 32
  %v1188 = vpop.permute.xlu0 %1187
  %1189 = vrot.lane.b32.xlu0 %v950, 32
  %v1190 = vpop.permute.xlu0 %1189
  %1191 = vrot.lane.b32.xlu0 %v975, 1
  %v1192 = vpop.permute.xlu0 %1191
  %1193 = vrot.lane.b32.xlu0 %v976, 1
  %v1194 = vpop.permute.xlu0 %1193
  %1195 = vrot.lane.b32.xlu0 %v977, 1
  %v1196 = vpop.permute.xlu0 %1195
  %1197 = vrot.lane.b32.xlu0 %v978, 1
  %v1198 = vpop.permute.xlu0 %1197
  %1199 = vrot.lane.b32.xlu0 %v979, 1
  %v1200 = vpop.permute.xlu0 %1199
  %1201 = vrot.lane.b32.xlu0 %v980, 1
  %v1202 = vpop.permute.xlu0 %1201
  %v1203 = vsel %vm511, %v1192, %v1194
  %v1204 = vsel %vm511, %v1194, %v1196
  %v1205 = vsel %vm511, %v1198, %v1200
  %v1206 = vsel %vm511, %v1200, %v1202
  %v1212 = vsel %vm1001, %v1188, 0
  %v1215 = vsel %vm1001, %v1190, 0
  %1217 = vmatpush.bf16.msra.mxu0 0
  %1218 = vmatpush.bf16.msra.mxu0 0
  %1219 = vmatpush.bf16.msra.mxu0 0
  %1220 = vmatpush.bf16.msra.mxu0 0
  %1221 = vmatpush.bf16.msra.mxu0 0
  %1222 = vmatpush.bf16.msra.mxu0 0
  %1223 = vmatpush.bf16.msra.mxu0 %v1205
  %1224 = vmatpush.bf16.msra.mxu0 %v1203
  %1225 = vmatmul.bf16.gmra.mxu0 %v1212
  %v1226 = vpop.f32.mrf.mxu0
  %v1227 = vadd.f32 0.0, %v1226
  %v1228 = vpop.f32.mrf.mxu0
  %v1229 = vadd.f32 0.0, %v1228
  %1230 = vmatmul.bf16.gmra.mxu0 %v1215
  %v1231 = vpop.f32.mrf.mxu0
  %v1232 = vadd.f32 0.0, %v1231
  %v1233 = vpop.f32.mrf.mxu0
  %v1234 = vadd.f32 0.0, %v1233
  %1235 = vdwg.mxu0
  %1236 = vmatpush.bf16.msra.mxu0 0
  %1237 = vmatpush.bf16.msra.mxu0 0
  %1238 = vmatpush.bf16.msra.mxu0 0
  %1239 = vmatpush.bf16.msra.mxu0 0
  %1240 = vmatpush.bf16.msra.mxu0 0
  %1241 = vmatpush.bf16.msra.mxu0 0
  %1242 = vmatpush.bf16.msra.mxu0 %v1206
  %1243 = vmatpush.bf16.msra.mxu0 %v1204
  %1244 = vmatmul.bf16.gmra.mxu0 %v1212
  %v1245 = vpop.f32.mrf.mxu0
  %v1246 = vadd.f32 0.0, %v1245
  %v1247 = vpop.f32.mrf.mxu0
  %v1248 = vadd.f32 0.0, %v1247
  %1249 = vmatmul.bf16.gmra.mxu0 %v1215
  %v1250 = vpop.f32.mrf.mxu0
  %v1251 = vadd.f32 0.0, %v1250
  %v1252 = vpop.f32.mrf.mxu0
  %v1253 = vadd.f32 0.0, %v1252
  %1254 = vdwg.mxu0
  %v1255 = vadd.f32 %v1179, %v1227
  %v1256 = vadd.f32 %v1180, %v1246
  %v1257 = vadd.f32 %v1181, %v1229
  %v1258 = vadd.f32 %v1182, %v1248
  %v1259 = vadd.f32 %v1183, %v1232
  %v1260 = vadd.f32 %v1184, %v1251
  %v1261 = vadd.f32 %v1185, %v1234
  %v1262 = vadd.f32 %v1186, %v1253
  %v1263 = vld [vmem:[%s7 + $0x4] sm:$0xf]
  %v1264 = vld [vmem:[%s7 + $0x10] sm:$0xf]
  %v1265 = vld [vmem:[%s7 + $0x1c] sm:$0xf]
  %v1266 = vld [vmem:[%s7 + $0x28] sm:$0xf]
  %v1267 = vld [vmem:[#allocation2 + $0x4] sm:$0xff]
  %v1268 = vld [vmem:[#allocation2 + $0x14] sm:$0xff]
  %v1269 = vld [vmem:[#allocation2 + $0x24] sm:$0xff]
  %v1270 = vld [vmem:[#allocation2 + $0x34] sm:$0xff]
  %v1275 = vunpack.c.l.b16 %v1263
  %v1276 = vunpack.c.l.b16 %v1264
  %v1277 = vunpack.c.l.b16 %v1265
  %v1278 = vunpack.c.l.b16 %v1266
  %v1279 = vpack.c.b16 %v1276, %v1275
  %v1280 = vpack.c.b16 %v1278, %v1277
  %v1285 = vunpack.c.l.b16 %v1267
  %v1286 = vunpack.c.h.b16 %v1267
  %v1287 = vunpack.c.l.b16 %v1268
  %v1288 = vunpack.c.h.b16 %v1268
  %v1289 = vunpack.c.l.b16 %v1269
  %v1290 = vunpack.c.h.b16 %v1269
  %v1291 = vunpack.c.l.b16 %v1270
  %v1292 = vunpack.c.h.b16 %v1270
  %v1293 = vpack.c.b16 %v1287, %v1285
  %v1294 = vpack.c.b16 %v1288, %v1286
  %v1295 = vpack.c.b16 %v1291, %v1289
  %v1296 = vpack.c.b16 %v1292, %v1290
  %v1302 = vsel %vm1001, %v1279, 0
  %v1305 = vsel %vm1001, %v1280, 0
  %1307 = vmatpush.bf16.msra.mxu0 0
  %1308 = vmatpush.bf16.msra.mxu0 0
  %1309 = vmatpush.bf16.msra.mxu0 0
  %1310 = vmatpush.bf16.msra.mxu0 0
  %1311 = vmatpush.bf16.msra.mxu0 0
  %1312 = vmatpush.bf16.msra.mxu0 0
  %1313 = vmatpush.bf16.msra.mxu0 %v1295
  %1314 = vmatpush.bf16.msra.mxu0 %v1293
  %1315 = vmatmul.bf16.gmra.mxu0 %v1302
  %v1316 = vpop.f32.mrf.mxu0
  %v1317 = vadd.f32 0.0, %v1316
  %v1318 = vpop.f32.mrf.mxu0
  %v1319 = vadd.f32 0.0, %v1318
  %1320 = vmatmul.bf16.gmra.mxu0 %v1305
  %v1321 = vpop.f32.mrf.mxu0
  %v1322 = vadd.f32 0.0, %v1321
  %v1323 = vpop.f32.mrf.mxu0
  %v1324 = vadd.f32 0.0, %v1323
  %1325 = vdwg.mxu0
  %1326 = vmatpush.bf16.msra.mxu0 0
  %1327 = vmatpush.bf16.msra.mxu0 0
  %1328 = vmatpush.bf16.msra.mxu0 0
  %1329 = vmatpush.bf16.msra.mxu0 0
  %1330 = vmatpush.bf16.msra.mxu0 0
  %1331 = vmatpush.bf16.msra.mxu0 0
  %1332 = vmatpush.bf16.msra.mxu0 %v1296
  %1333 = vmatpush.bf16.msra.mxu0 %v1294
  %1334 = vmatmul.bf16.gmra.mxu0 %v1302
  %v1335 = vpop.f32.mrf.mxu0
  %v1336 = vadd.f32 0.0, %v1335
  %v1337 = vpop.f32.mrf.mxu0
  %v1338 = vadd.f32 0.0, %v1337
  %1339 = vmatmul.bf16.gmra.mxu0 %v1305
  %v1340 = vpop.f32.mrf.mxu0
  %v1341 = vadd.f32 0.0, %v1340
  %v1342 = vpop.f32.mrf.mxu0
  %v1343 = vadd.f32 0.0, %v1342
  %1344 = vdwg.mxu0
  %v1345 = vadd.f32 %v1255, %v1317
  %v1346 = vadd.f32 %v1256, %v1336
  %v1347 = vadd.f32 %v1257, %v1319
  %v1348 = vadd.f32 %v1258, %v1338
  %v1349 = vadd.f32 %v1259, %v1322
  %v1350 = vadd.f32 %v1260, %v1341
  %v1351 = vadd.f32 %v1261, %v1324
  %v1352 = vadd.f32 %v1262, %v1343
  %v1353 = vld [vmem:[#allocation2 + $0x4] sm:$0xff]
  %v1354 = vld [vmem:[#allocation2 + $0xc] sm:$0xf]
  %v1355 = vld [vmem:[#allocation2 + $0x14] sm:$0xff]
  %v1356 = vld [vmem:[#allocation2 + $0x1c] sm:$0xf]
  %v1357 = vld [vmem:[#allocation2 + $0x24] sm:$0xff]
  %v1358 = vld [vmem:[#allocation2 + $0x2c] sm:$0xf]
  %v1359 = vld [vmem:[#allocation2 + $0x34] sm:$0xff]
  %v1360 = vld [vmem:[#allocation2 + $0x3c] sm:$0xf]
  %1361 = vrot.lane.b32.xlu0 %v1279, 96
  %v1362 = vpop.permute.xlu0 %1361
  %1363 = vrot.lane.b32.xlu0 %v1280, 96
  %v1364 = vpop.permute.xlu0 %1363
  %v1373 = vunpack.c.l.b16 %v1353
  %v1374 = vunpack.c.h.b16 %v1353
  %v1375 = vunpack.c.l.b16 %v1354
  %v1376 = vunpack.c.l.b16 %v1355
  %v1377 = vunpack.c.h.b16 %v1355
  %v1378 = vunpack.c.l.b16 %v1356
  %v1379 = vunpack.c.l.b16 %v1357
  %v1380 = vunpack.c.h.b16 %v1357
  %v1381 = vunpack.c.l.b16 %v1358
  %v1382 = vunpack.c.l.b16 %v1359
  %v1383 = vunpack.c.h.b16 %v1359
  %v1384 = vunpack.c.l.b16 %v1360
  %v1385 = vpack.c.b16 %v1376, %v1373
  %v1386 = vpack.c.b16 %v1377, %v1374
  %v1387 = vpack.c.b16 %v1378, %v1375
  %v1388 = vpack.c.b16 %v1382, %v1379
  %v1389 = vpack.c.b16 %v1383, %v1380
  %v1390 = vpack.c.b16 %v1384, %v1381
  %1391 = vrot.lane.b32.xlu0 %v1385, 127
  %v1392 = vpop.permute.xlu0 %1391
  %1393 = vrot.lane.b32.xlu0 %v1386, 127
  %v1394 = vpop.permute.xlu0 %1393
  %1395 = vrot.lane.b32.xlu0 %v1387, 127
  %v1396 = vpop.permute.xlu0 %1395
  %1397 = vrot.lane.b32.xlu0 %v1388, 127
  %v1398 = vpop.permute.xlu0 %1397
  %1399 = vrot.lane.b32.xlu0 %v1389, 127
  %v1400 = vpop.permute.xlu0 %1399
  %1401 = vrot.lane.b32.xlu0 %v1390, 127
  %v1402 = vpop.permute.xlu0 %1401
  %vm1403 = vcmask 1039360
  %v1404 = vsel %vm1403, %v1392, %v1394
  %v1405 = vsel %vm1403, %v1394, %v1396
  %v1406 = vsel %vm1403, %v1398, %v1400
  %v1407 = vsel %vm1403, %v1400, %v1402
  %v1413 = vsel %vm1001, %v1362, 0
  %v1416 = vsel %vm1001, %v1364, 0
  %1418 = vmatpush.bf16.msra.mxu0 0
  %1419 = vmatpush.bf16.msra.mxu0 0
  %1420 = vmatpush.bf16.msra.mxu0 0
  %1421 = vmatpush.bf16.msra.mxu0 0
  %1422 = vmatpush.bf16.msra.mxu0 0
  %1423 = vmatpush.bf16.msra.mxu0 0
  %1424 = vmatpush.bf16.msra.mxu0 %v1406
  %1425 = vmatpush.bf16.msra.mxu0 %v1404
  %1426 = vmatmul.bf16.gmra.mxu0 %v1413
  %v1427 = vpop.f32.mrf.mxu0
  %v1428 = vadd.f32 0.0, %v1427
  %v1429 = vpop.f32.mrf.mxu0
  %v1430 = vadd.f32 0.0, %v1429
  %1431 = vmatmul.bf16.gmra.mxu0 %v1416
  %v1432 = vpop.f32.mrf.mxu0
  %v1433 = vadd.f32 0.0, %v1432
  %v1434 = vpop.f32.mrf.mxu0
  %v1435 = vadd.f32 0.0, %v1434
  %1436 = vdwg.mxu0
  %1437 = vmatpush.bf16.msra.mxu0 0
  %1438 = vmatpush.bf16.msra.mxu0 0
  %1439 = vmatpush.bf16.msra.mxu0 0
  %1440 = vmatpush.bf16.msra.mxu0 0
  %1441 = vmatpush.bf16.msra.mxu0 0
  %1442 = vmatpush.bf16.msra.mxu0 0
  %1443 = vmatpush.bf16.msra.mxu0 %v1407
  %1444 = vmatpush.bf16.msra.mxu0 %v1405
  %1445 = vmatmul.bf16.gmra.mxu0 %v1413
  %v1446 = vpop.f32.mrf.mxu0
  %v1447 = vadd.f32 0.0, %v1446
  %v1448 = vpop.f32.mrf.mxu0
  %v1449 = vadd.f32 0.0, %v1448
  %1450 = vmatmul.bf16.gmra.mxu0 %v1416
  %v1451 = vpop.f32.mrf.mxu0
  %v1452 = vadd.f32 0.0, %v1451
  %v1453 = vpop.f32.mrf.mxu0
  %v1454 = vadd.f32 0.0, %v1453
  %1455 = vdwg.mxu0
  %v1456 = vadd.f32 %v1345, %v1428
  %v1457 = vadd.f32 %v1346, %v1447
  %v1458 = vadd.f32 %v1347, %v1430
  %v1459 = vadd.f32 %v1348, %v1449
  %v1460 = vadd.f32 %v1349, %v1433
  %v1461 = vadd.f32 %v1350, %v1452
  %v1462 = vadd.f32 %v1351, %v1435
  %v1463 = vadd.f32 %v1352, %v1454
  %1464 = vrot.lane.b32.xlu0 %v1279, 64
  %v1465 = vpop.permute.xlu0 %1464
  %1466 = vrot.lane.b32.xlu0 %v1280, 64
  %v1467 = vpop.permute.xlu0 %1466
  %1468 = vrot.lane.b32.xlu0 %v1385, 119
  %v1469 = vpop.permute.xlu0 %1468
  %1470 = vrot.lane.b32.xlu0 %v1386, 119
  %v1471 = vpop.permute.xlu0 %1470
  %1472 = vrot.lane.b32.xlu0 %v1387, 119
  %v1473 = vpop.permute.xlu0 %1472
  %1474 = vrot.lane.b32.xlu0 %v1388, 119
  %v1475 = vpop.permute.xlu0 %1474
  %1476 = vrot.lane.b32.xlu0 %v1389, 119
  %v1477 = vpop.permute.xlu0 %1476
  %1478 = vrot.lane.b32.xlu0 %v1390, 119
  %v1479 = vpop.permute.xlu0 %1478
  %vm1480 = vcmask 973824
  %v1481 = vsel %vm1480, %v1469, %v1471
  %v1482 = vsel %vm1480, %v1471, %v1473
  %v1483 = vsel %vm1480, %v1475, %v1477
  %v1484 = vsel %vm1480, %v1477, %v1479
  %v1490 = vsel %vm1001, %v1465, 0
  %v1493 = vsel %vm1001, %v1467, 0
  %1495 = vmatpush.bf16.msra.mxu0 0
  %1496 = vmatpush.bf16.msra.mxu0 0
  %1497 = vmatpush.bf16.msra.mxu0 0
  %1498 = vmatpush.bf16.msra.mxu0 0
  %1499 = vmatpush.bf16.msra.mxu0 0
  %1500 = vmatpush.bf16.msra.mxu0 0
  %1501 = vmatpush.bf16.msra.mxu0 %v1483
  %1502 = vmatpush.bf16.msra.mxu0 %v1481
  %1503 = vmatmul.bf16.gmra.mxu0 %v1490
  %v1504 = vpop.f32.mrf.mxu0
  %v1505 = vadd.f32 0.0, %v1504
  %v1506 = vpop.f32.mrf.mxu0
  %v1507 = vadd.f32 0.0, %v1506
  %1508 = vmatmul.bf16.gmra.mxu0 %v1493
  %v1509 = vpop.f32.mrf.mxu0
  %v1510 = vadd.f32 0.0, %v1509
  %v1511 = vpop.f32.mrf.mxu0
  %v1512 = vadd.f32 0.0, %v1511
  %1513 = vdwg.mxu0
  %1514 = vmatpush.bf16.msra.mxu0 0
  %1515 = vmatpush.bf16.msra.mxu0 0
  %1516 = vmatpush.bf16.msra.mxu0 0
  %1517 = vmatpush.bf16.msra.mxu0 0
  %1518 = vmatpush.bf16.msra.mxu0 0
  %1519 = vmatpush.bf16.msra.mxu0 0
  %1520 = vmatpush.bf16.msra.mxu0 %v1484
  %1521 = vmatpush.bf16.msra.mxu0 %v1482
  %1522 = vmatmul.bf16.gmra.mxu0 %v1490
  %v1523 = vpop.f32.mrf.mxu0
  %v1524 = vadd.f32 0.0, %v1523
  %v1525 = vpop.f32.mrf.mxu0
  %v1526 = vadd.f32 0.0, %v1525
  %1527 = vmatmul.bf16.gmra.mxu0 %v1493
  %v1528 = vpop.f32.mrf.mxu0
  %v1529 = vadd.f32 0.0, %v1528
  %v1530 = vpop.f32.mrf.mxu0
  %v1531 = vadd.f32 0.0, %v1530
  %1532 = vdwg.mxu0
  %v1533 = vadd.f32 %v1456, %v1505
  %v1534 = vadd.f32 %v1457, %v1524
  %v1535 = vadd.f32 %v1458, %v1507
  %v1536 = vadd.f32 %v1459, %v1526
  %v1537 = vadd.f32 %v1460, %v1510
  %v1538 = vadd.f32 %v1461, %v1529
  %v1539 = vadd.f32 %v1462, %v1512
  %v1540 = vadd.f32 %v1463, %v1531
  %1541 = vrot.lane.b32.xlu0 %v1279, 32
  %v1542 = vpop.permute.xlu0 %1541
  %1543 = vrot.lane.b32.xlu0 %v1280, 32
  %v1544 = vpop.permute.xlu0 %1543
  %1545 = vrot.lane.b32.xlu0 %v1385, 118
  %v1546 = vpop.permute.xlu0 %1545
  %1547 = vrot.lane.b32.xlu0 %v1386, 118
  %v1548 = vpop.permute.xlu0 %1547
  %1549 = vrot.lane.b32.xlu0 %v1387, 118
  %v1550 = vpop.permute.xlu0 %1549
  %1551 = vrot.lane.b32.xlu0 %v1388, 118
  %v1552 = vpop.permute.xlu0 %1551
  %1553 = vrot.lane.b32.xlu0 %v1389, 118
  %v1554 = vpop.permute.xlu0 %1553
  %1555 = vrot.lane.b32.xlu0 %v1390, 118
  %v1556 = vpop.permute.xlu0 %1555
  %vm1557 = vcmask 965632
  %v1558 = vsel %vm1557, %v1546, %v1548
  %v1559 = vsel %vm1557, %v1548, %v1550
  %v1560 = vsel %vm1557, %v1552, %v1554
  %v1561 = vsel %vm1557, %v1554, %v1556
  %v1567 = vsel %vm1001, %v1542, 0
  %v1570 = vsel %vm1001, %v1544, 0
  %1572 = vmatpush.bf16.msra.mxu0 0
  %1573 = vmatpush.bf16.msra.mxu0 0
  %1574 = vmatpush.bf16.msra.mxu0 0
  %1575 = vmatpush.bf16.msra.mxu0 0
  %1576 = vmatpush.bf16.msra.mxu0 0
  %1577 = vmatpush.bf16.msra.mxu0 0
  %1578 = vmatpush.bf16.msra.mxu0 %v1560
  %1579 = vmatpush.bf16.msra.mxu0 %v1558
  %1580 = vmatmul.bf16.gmra.mxu0 %v1567
  %v1581 = vpop.f32.mrf.mxu0
  %v1582 = vadd.f32 0.0, %v1581
  %v1583 = vpop.f32.mrf.mxu0
  %v1584 = vadd.f32 0.0, %v1583
  %1585 = vmatmul.bf16.gmra.mxu0 %v1570
  %v1586 = vpop.f32.mrf.mxu0
  %v1587 = vadd.f32 0.0, %v1586
  %v1588 = vpop.f32.mrf.mxu0
  %v1589 = vadd.f32 0.0, %v1588
  %1590 = vdwg.mxu0
  %1591 = vmatpush.bf16.msra.mxu0 0
  %1592 = vmatpush.bf16.msra.mxu0 0
  %1593 = vmatpush.bf16.msra.mxu0 0
  %1594 = vmatpush.bf16.msra.mxu0 0
  %1595 = vmatpush.bf16.msra.mxu0 0
  %1596 = vmatpush.bf16.msra.mxu0 0
  %1597 = vmatpush.bf16.msra.mxu0 %v1561
  %1598 = vmatpush.bf16.msra.mxu0 %v1559
  %1599 = vmatmul.bf16.gmra.mxu0 %v1567
  %v1600 = vpop.f32.mrf.mxu0
  %v1601 = vadd.f32 0.0, %v1600
  %v1602 = vpop.f32.mrf.mxu0
  %v1603 = vadd.f32 0.0, %v1602
  %1604 = vmatmul.bf16.gmra.mxu0 %v1570
  %v1605 = vpop.f32.mrf.mxu0
  %v1606 = vadd.f32 0.0, %v1605
  %v1607 = vpop.f32.mrf.mxu0
  %v1608 = vadd.f32 0.0, %v1607
  %1609 = vdwg.mxu0
  %v1610 = vadd.f32 %v1533, %v1582
  %v1611 = vadd.f32 %v1534, %v1601
  %v1612 = vadd.f32 %v1535, %v1584
  %v1613 = vadd.f32 %v1536, %v1603
  %v1614 = vadd.f32 %v1537, %v1587
  %v1615 = vadd.f32 %v1538, %v1606
  %v1616 = vadd.f32 %v1539, %v1589
  %v1617 = vadd.f32 %v1540, %v1608
  %v1618 = vld [vmem:[%s7 + $0x8] sm:$0xf]
  %v1619 = vld [vmem:[%s7 + $0x14] sm:$0xf]
  %v1620 = vld [vmem:[%s7 + $0x20] sm:$0xf]
  %v1621 = vld [vmem:[%s7 + $0x2c] sm:$0xf]
  %v1626 = vunpack.c.l.b16 %v1618
  %v1627 = vunpack.c.l.b16 %v1619
  %v1628 = vunpack.c.l.b16 %v1620
  %v1629 = vunpack.c.l.b16 %v1621
  %v1630 = vpack.c.b16 %v1627, %v1626
  %v1631 = vpack.c.b16 %v1629, %v1628
  %1632 = vrot.lane.b32.xlu0 %v1385, 117
  %v1633 = vpop.permute.xlu0 %1632
  %1634 = vrot.lane.b32.xlu0 %v1386, 117
  %v1635 = vpop.permute.xlu0 %1634
  %1636 = vrot.lane.b32.xlu0 %v1387, 117
  %v1637 = vpop.permute.xlu0 %1636
  %1638 = vrot.lane.b32.xlu0 %v1388, 117
  %v1639 = vpop.permute.xlu0 %1638
  %1640 = vrot.lane.b32.xlu0 %v1389, 117
  %v1641 = vpop.permute.xlu0 %1640
  %1642 = vrot.lane.b32.xlu0 %v1390, 117
  %v1643 = vpop.permute.xlu0 %1642
  %vm1644 = vcmask 957440
  %v1645 = vsel %vm1644, %v1633, %v1635
  %v1646 = vsel %vm1644, %v1635, %v1637
  %v1647 = vsel %vm1644, %v1639, %v1641
  %v1648 = vsel %vm1644, %v1641, %v1643
  %v1654 = vsel %vm1001, %v1630, 0
  %v1657 = vsel %vm1001, %v1631, 0
  %1659 = vmatpush.bf16.msra.mxu0 0
  %1660 = vmatpush.bf16.msra.mxu0 0
  %1661 = vmatpush.bf16.msra.mxu0 0
  %1662 = vmatpush.bf16.msra.mxu0 0
  %1663 = vmatpush.bf16.msra.mxu0 0
  %1664 = vmatpush.bf16.msra.mxu0 0
  %1665 = vmatpush.bf16.msra.mxu0 %v1647
  %1666 = vmatpush.bf16.msra.mxu0 %v1645
  %1667 = vmatmul.bf16.gmra.mxu0 %v1654
  %v1668 = vpop.f32.mrf.mxu0
  %v1669 = vadd.f32 0.0, %v1668
  %v1670 = vpop.f32.mrf.mxu0
  %v1671 = vadd.f32 0.0, %v1670
  %1672 = vmatmul.bf16.gmra.mxu0 %v1657
  %v1673 = vpop.f32.mrf.mxu0
  %v1674 = vadd.f32 0.0, %v1673
  %v1675 = vpop.f32.mrf.mxu0
  %v1676 = vadd.f32 0.0, %v1675
  %1677 = vdwg.mxu0
  %1678 = vmatpush.bf16.msra.mxu0 0
  %1679 = vmatpush.bf16.msra.mxu0 0
  %1680 = vmatpush.bf16.msra.mxu0 0
  %1681 = vmatpush.bf16.msra.mxu0 0
  %1682 = vmatpush.bf16.msra.mxu0 0
  %1683 = vmatpush.bf16.msra.mxu0 0
  %1684 = vmatpush.bf16.msra.mxu0 %v1648
  %1685 = vmatpush.bf16.msra.mxu0 %v1646
  %1686 = vmatmul.bf16.gmra.mxu0 %v1654
  %v1687 = vpop.f32.mrf.mxu0
  %v1688 = vadd.f32 0.0, %v1687
  %v1689 = vpop.f32.mrf.mxu0
  %v1690 = vadd.f32 0.0, %v1689
  %1691 = vmatmul.bf16.gmra.mxu0 %v1657
  %v1692 = vpop.f32.mrf.mxu0
  %v1693 = vadd.f32 0.0, %v1692
  %v1694 = vpop.f32.mrf.mxu0
  %v1695 = vadd.f32 0.0, %v1694
  %1696 = vdwg.mxu0
  %v1697 = vadd.f32 %v1610, %v1669
  %v1698 = vadd.f32 %v1611, %v1688
  %v1699 = vadd.f32 %v1612, %v1671
  %v1700 = vadd.f32 %v1613, %v1690
  %v1701 = vadd.f32 %v1614, %v1674
  %v1702 = vadd.f32 %v1615, %v1693
  %v1703 = vadd.f32 %v1616, %v1676
  %v1704 = vadd.f32 %v1617, %v1695
  %v1705 = vmul.f32 %v1697, %v713
  %v1706 = vmul.f32 %v1698, %v714
  %v1707 = vmul.f32 %v1699, %v713
  %v1708 = vmul.f32 %v1700, %v714
  %v1709 = vmul.f32 %v1701, %v713
  %v1710 = vmul.f32 %v1702, %v714
  %v1711 = vmul.f32 %v1703, %v713
  %v1712 = vmul.f32 %v1704, %v714
  %v1713 = vadd.f32 %v1705, %v1706
  %1714 = vadd.xlane.f32.xlu0 %v1713
  %v1715 = vpop.xlane.xlu0 %1714
  %v1716 = vadd.f32 %v1707, %v1708
  %1717 = vadd.xlane.f32.xlu0 %v1716
  %v1718 = vpop.xlane.xlu0 %1717
  %v1719 = vadd.f32 %v1709, %v1710
  %1720 = vadd.xlane.f32.xlu0 %v1719
  %v1721 = vpop.xlane.xlu0 %1720
  %v1722 = vadd.f32 %v1711, %v1712
  %1723 = vadd.xlane.f32.xlu0 %v1722
  %v1724 = vpop.xlane.xlu0 %1723
  %v1725 = vmul.f32 %v1715, 0.0078125
  %v1726 = vmul.f32 %v1718, 0.0078125
  %v1727 = vmul.f32 %v1721, 0.0078125
  %v1728 = vmul.f32 %v1724, 0.0078125
  %v1729 = vmul.f32 %v1705, %v1705
  %v1730 = vmul.f32 %v1706, %v1706
  %v1731 = vmul.f32 %v1707, %v1707
  %v1732 = vmul.f32 %v1708, %v1708
  %v1733 = vmul.f32 %v1709, %v1709
  %v1734 = vmul.f32 %v1710, %v1710
  %v1735 = vmul.f32 %v1711, %v1711
  %v1736 = vmul.f32 %v1712, %v1712
  %v1737 = vadd.f32 %v1729, %v1730
  %1738 = vadd.xlane.f32.xlu0 %v1737
  %v1739 = vpop.xlane.xlu0 %1738
  %v1740 = vadd.f32 %v1731, %v1732
  %1741 = vadd.xlane.f32.xlu0 %v1740
  %v1742 = vpop.xlane.xlu0 %1741
  %v1743 = vadd.f32 %v1733, %v1734
  %1744 = vadd.xlane.f32.xlu0 %v1743
  %v1745 = vpop.xlane.xlu0 %1744
  %v1746 = vadd.f32 %v1735, %v1736
  %1747 = vadd.xlane.f32.xlu0 %v1746
  %v1748 = vpop.xlane.xlu0 %1747
  %v1749 = vmul.f32 %v1739, 0.0078125
  %v1750 = vmul.f32 %v1742, 0.0078125
  %v1751 = vmul.f32 %v1745, 0.0078125
  %v1752 = vmul.f32 %v1748, 0.0078125
  %v1753 = vmul.f32 %v1725, %v1725
  %v1754 = vmul.f32 %v1726, %v1726
  %v1755 = vmul.f32 %v1727, %v1727
  %v1756 = vmul.f32 %v1728, %v1728
  %v1757 = vsub.f32 %v1749, %v1753
  %v1758 = vsub.f32 %v1750, %v1754
  %v1759 = vsub.f32 %v1751, %v1755
  %v1760 = vsub.f32 %v1752, %v1756
  %v1761 = vmax.f32 %v1757, 0.0
  %v1762 = vmax.f32 %v1758, 0.0
  %v1763 = vmax.f32 %v1759, 0.0
  %v1764 = vmax.f32 %v1760, 0.0
  %v1765 = vsub.f32 %v1697, %v1725
  %v1766 = vsub.f32 %v1698, %v1725
  %v1767 = vsub.f32 %v1699, %v1726
  %v1768 = vsub.f32 %v1700, %v1726
  %v1769 = vsub.f32 %v1701, %v1727
  %v1770 = vsub.f32 %v1702, %v1727
  %v1771 = vsub.f32 %v1703, %v1728
  %v1772 = vsub.f32 %v1704, %v1728
  %v1773 = vadd.f32 %v1761, 1e-05
  %v1774 = vadd.f32 %v1762, 1e-05
  %v1775 = vadd.f32 %v1763, 1e-05
  %v1776 = vadd.f32 %v1764, 1e-05
  %v1777 = vrsqrt.pop %v1773
  %v1778 = vmul.f32 %v1777, %v1773
  %v1779 = vmul.f32 %v1778, %v1777
  %v1780 = vmul.f32 0.5, %v1779
  %v1781 = vsub.f32 1.5, %v1780
  %v1782 = vmul.f32 %v1777, %v1781
  %vm1783 = vweird.f32 %v1773
  %vm1784 = vweird.f32 %v1777
  %vm1785 = vmor %vm1783, %vm1784
  %v1786 = vsel %vm1785, %v1777, %v1782
  %v1787 = vrsqrt.pop %v1774
  %v1788 = vmul.f32 %v1787, %v1774
  %v1789 = vmul.f32 %v1788, %v1787
  %v1790 = vmul.f32 0.5, %v1789
  %v1791 = vsub.f32 1.5, %v1790
  %v1792 = vmul.f32 %v1787, %v1791
  %vm1793 = vweird.f32 %v1774
  %vm1794 = vweird.f32 %v1787
  %vm1795 = vmor %vm1793, %vm1794
  %v1796 = vsel %vm1795, %v1787, %v1792
  %v1797 = vrsqrt.pop %v1775
  %v1798 = vmul.f32 %v1797, %v1775
  %v1799 = vmul.f32 %v1798, %v1797
  %v1800 = vmul.f32 0.5, %v1799
  %v1801 = vsub.f32 1.5, %v1800
  %v1802 = vmul.f32 %v1797, %v1801
  %vm1803 = vweird.f32 %v1775
  %vm1804 = vweird.f32 %v1797
  %vm1805 = vmor %vm1803, %vm1804
  %v1806 = vsel %vm1805, %v1797, %v1802
  %v1807 = vrsqrt.pop %v1776
  %v1808 = vmul.f32 %v1807, %v1776
  %v1809 = vmul.f32 %v1808, %v1807
  %v1810 = vmul.f32 0.5, %v1809
  %v1811 = vsub.f32 1.5, %v1810
  %v1812 = vmul.f32 %v1807, %v1811
  %vm1813 = vweird.f32 %v1776
  %vm1814 = vweird.f32 %v1807
  %vm1815 = vmor %vm1813, %vm1814
  %v1816 = vsel %vm1815, %v1807, %v1812
  %v1817 = vld [vmem:[%s8] sm:$0xff]
  %v1818 = vld [vmem:[%s8 + $0x8] sm:$0xff]
  %v1819 = vld [vmem:[%s8 + $0x10] sm:$0xff]
  %v1820 = vld [vmem:[%s8 + $0x18] sm:$0xff]
  %v1821 = vmul.f32 %v1786, %v1817
  %v1822 = vmul.f32 %v1796, %v1818
  %v1823 = vmul.f32 %v1806, %v1819
  %v1824 = vmul.f32 %v1816, %v1820
  %1826 = vset.pattern.permute.xlu0 0
  %1827 = vperm.xlu0 %1826, %v1821
  %v1828 = vpop.permute.xlu0 %1827
  %1831 = vset.pattern.permute.xlu0 0
  %1832 = vperm.xlu0 %1831, %v1822
  %v1833 = vpop.permute.xlu0 %1832
  %1836 = vset.pattern.permute.xlu0 0
  %1837 = vperm.xlu0 %1836, %v1823
  %v1838 = vpop.permute.xlu0 %1837
  %1841 = vset.pattern.permute.xlu0 0
  %1842 = vperm.xlu0 %1841, %v1824
  %v1843 = vpop.permute.xlu0 %1842
  %v1845 = vmul.f32 %v1765, %v1828
  %v1846 = vmul.f32 %v1766, %v1828
  %v1847 = vmul.f32 %v1767, %v1833
  %v1848 = vmul.f32 %v1768, %v1833
  %v1849 = vmul.f32 %v1769, %v1838
  %v1850 = vmul.f32 %v1770, %v1838
  %v1851 = vmul.f32 %v1771, %v1843
  %v1852 = vmul.f32 %v1772, %v1843
  %v1853 = vld [vmem:[%s9] sm:$0xff]
  %v1854 = vld [vmem:[%s9 + $0x8] sm:$0xff]
  %v1855 = vld [vmem:[%s9 + $0x10] sm:$0xff]
  %v1856 = vld [vmem:[%s9 + $0x18] sm:$0xff]
  %1858 = vset.pattern.permute.xlu0 0
  %1859 = vperm.xlu0 %1858, %v1853
  %v1860 = vpop.permute.xlu0 %1859
  %1863 = vset.pattern.permute.xlu0 0
  %1864 = vperm.xlu0 %1863, %v1854
  %v1865 = vpop.permute.xlu0 %1864
  %1868 = vset.pattern.permute.xlu0 0
  %1869 = vperm.xlu0 %1868, %v1855
  %v1870 = vpop.permute.xlu0 %1869
  %1873 = vset.pattern.permute.xlu0 0
  %1874 = vperm.xlu0 %1873, %v1856
  %v1875 = vpop.permute.xlu0 %1874
  %v1877 = vadd.f32 %v1845, %v1860
  %v1878 = vadd.f32 %v1846, %v1860
  %v1879 = vadd.f32 %v1847, %v1865
  %v1880 = vadd.f32 %v1848, %v1865
  %v1881 = vadd.f32 %v1849, %v1870
  %v1882 = vadd.f32 %v1850, %v1870
  %v1883 = vadd.f32 %v1851, %v1875
  %v1884 = vadd.f32 %v1852, %v1875
  %v1885 = vld [vmem:[%s3] sm:$0xff]
  %v1886 = vld [vmem:[%s3 + $0x8] sm:$0xf]
  %v1887 = vld [vmem:[%s3 + $0x10] sm:$0xff]
  %v1888 = vld [vmem:[%s3 + $0x18] sm:$0xf]
  %v1889 = vunpack.c.l.bf16 %v1885
  %v1890 = vunpack.c.h.bf16 %v1885
  %v1891 = vunpack.c.l.bf16 %v1886
  %v1892 = vunpack.c.l.bf16 %v1887
  %v1893 = vunpack.c.h.bf16 %v1887
  %v1894 = vunpack.c.l.bf16 %v1888
  %v1895 = vmax.f32 %v1877, 0.0
  %v1896 = vmax.f32 %v1878, 0.0
  %1897 = vst [vmem:[%s11] sm:$0xff] %v1895
  %1898 = vst [vmem:[%s11 + $0x8] sm:$0xff] %v1896
  %v1899 = vmax.f32 %v1883, 0.0
  %v1900 = vmax.f32 %v1884, 0.0
  %1901 = vst [vmem:[%s11 + $0x30] sm:$0xff] %v1899
  %1902 = vst [vmem:[%s11 + $0x38] sm:$0xff] %v1900
  %1909 = vrot.lane.b32.xlu0 %v1889, 11
  %v1910 = vpop.permute.xlu0 %1909
  %1911 = vrot.lane.b32.xlu0 %v1890, 11
  %v1912 = vpop.permute.xlu0 %1911
  %1913 = vrot.lane.b32.xlu0 %v1891, 11
  %v1914 = vpop.permute.xlu0 %1913
  %1915 = vrot.lane.b32.xlu0 %v1892, 11
  %v1916 = vpop.permute.xlu0 %1915
  %1917 = vrot.lane.b32.xlu0 %v1893, 11
  %v1918 = vpop.permute.xlu0 %1917
  %1919 = vrot.lane.b32.xlu0 %v1894, 11
  %v1920 = vpop.permute.xlu0 %1919
  %vm1921 = vcmask 89088
  %v1922 = vsel %vm1921, %v1910, %v1912
  %v1923 = vsel %vm1921, %v1912, %v1914
  %v1924 = vsel %vm1921, %v1916, %v1918
  %v1925 = vsel %vm1921, %v1918, %v1920
  %v1930 = vadd.f32 %v1879, %v1922
  %v1931 = vadd.f32 %v1880, %v1923
  %v1932 = vadd.f32 %v1881, %v1924
  %v1933 = vadd.f32 %v1882, %v1925
  %v1934 = vmax.f32 %v1930, 0.0
  %v1935 = vmax.f32 %v1931, 0.0
  %v1936 = vmax.f32 %v1932, 0.0
  %v1937 = vmax.f32 %v1933, 0.0
  %1938 = vst [vmem:[%s11 + $0x10] sm:$0xff] %v1934
  %1939 = vst [vmem:[%s11 + $0x18] sm:$0xff] %v1935
  %1940 = vst [vmem:[%s11 + $0x20] sm:$0xff] %v1936
  %1941 = vst [vmem:[%s11 + $0x28] sm:$0xff] %v1937
  // Predicated region
  $region46: #{fwd.3} parent=0 // pred_check
    _
  $region47: #{fwd.3} parent=0 // pred_check_branch
    %1943 = sbr.rel (0) target = $region49
  $region48: #{fwd.3} parent=0 // pred_region
    _
  $region49: #{fwd.3} parent=0 // pred_fallthru
    _
  // Predicated region
  $region50: #{fwd.3} parent=0 // pred_check
    _
  $region51: #{fwd.3} parent=0 // pred_check_branch
    %1945 = sbr.rel (0) target = $region53
  $region52: #{fwd.3} parent=0 // pred_region
    _
  $region53: #{fwd.3} parent=0 // pred_fallthru
    _

</llo_original>
